<compile_context>
chip_gen: v5e
topology: v5e:2x2
jax: 0.10.0
libtpu: 0.0.40
codegen_flags: <defaults>
</compile_context>

<pallas_src>
import math
import functools

import jax
import jax.numpy as jnp
from jax import lax
from jax.experimental import pallas as pl
from jax.experimental.pallas import tpu as pltpu


def cross_attention_kernel(q_ref, k_ref, v_ref,
                           wq_ref, bq_ref,
                           wk_ref, bk_ref,
                           wv_ref, bv_ref,
                           wo_ref, bo_ref,
                           gamma_ref, beta_ref,
                           o_ref,
                           qp_ref, kp_ref, vp_ref, attn_ref,
                           *, num_heads, head_dim, eps):
    mxu_dtype = wq_ref.dtype            # bf16 MXU operands, f32 accumulation
    tq = qp_ref.shape[0]

    # ---- K/V projections: hoisted, computed once per batch element (q tile 0) ----
    @pl.when(pl.program_id(1) == 0)
    def _():
        k_in = k_ref[0].astype(mxu_dtype)          # (Lk, D)
        v_in = v_ref[0].astype(mxu_dtype)          # (Lk, D)
        kp_ref[...] = (jnp.dot(k_in, wk_ref[...],
                               preferred_element_type=jnp.float32)
                       + bk_ref[...]).astype(mxu_dtype)
        vp_ref[...] = (jnp.dot(v_in, wv_ref[...],
                               preferred_element_type=jnp.float32)
                       + bv_ref[...]).astype(mxu_dtype)

    # ---- Q projection (softmax scale already folded into Wq / bq on the host) ----
    q_bf = q_ref[0].astype(mxu_dtype)               # (TQ, D)
    qp_ref[...] = (jnp.dot(q_bf, wq_ref[...],
                           preferred_element_type=jnp.float32)
                   + bq_ref[...]).astype(mxu_dtype)

    # ---- Per-head attention; head outputs land in column slices of attn_ref ----
    for h in range(num_heads):
        lo = h * head_dim
        hi = lo + head_dim
        q_h = qp_ref[:, lo:hi]                      # (TQ, Dh) bf16
        k_h = kp_ref[:, lo:hi]                      # (Lk, Dh) bf16
        v_h = vp_ref[:, lo:hi]                      # (Lk, Dh) bf16

        # q_h @ k_h^T without an explicit transpose: contract last dim of both.
        scores = lax.dot_general(
            q_h, k_h,
            dimension_numbers=(((1,), (1,)), ((), ())),
            preferred_element_type=jnp.float32)     # (TQ, Lk) f32

        m = jnp.max(scores, axis=-1, keepdims=True)
        p = jnp.exp(scores - m)                     # f32 on the EUP
        l = jnp.sum(p, axis=-1, keepdims=True)      # (TQ, 1)

        head_out = jnp.dot(p.astype(mxu_dtype), v_h,
                           preferred_element_type=jnp.float32)   # (TQ, Dh)
        # Normalize the (TQ, Dh) result, not the (TQ, Lk) probabilities:
        # per-row scalar, exact reciprocal is essentially free here.
        head_out = head_out * pl.reciprocal(l, approx=False)
        attn_ref[:, lo:hi] = head_out.astype(mxu_dtype)

    # ---- Single full-depth output projection: (TQ, D) @ (D, D) on the MXU ----
    attn_out = (jnp.dot(attn_ref[...], wo_ref[...],
                        preferred_element_type=jnp.float32) + bo_ref[...])

    # ---- Residual (dropout == identity in eval) + LayerNorm, all in f32 ----
    res = q_ref[0].astype(jnp.float32) + attn_out
    mu = jnp.mean(res, axis=-1, keepdims=True)
    ctr = res - mu
    var = jnp.mean(ctr * ctr, axis=-1, keepdims=True)
    out = ctr * lax.rsqrt(var + eps) * gamma_ref[...] + beta_ref[...]

    # Single lane-dense (TQ, D) store.
    o_ref[0] = out.astype(o_ref.dtype)


def _vmem_limit_bytes():
    """Scoped-VMEM budget derived from the actual chip (v7x: 64 MiB/TC,
    v5e/v6e: 128 MiB) instead of a hardcoded constant."""
    try:
        cap = pltpu.get_tpu_info().vmem_capacity_bytes
    except Exception:           # hardware query only; fall back to the tightest chip
        cap = None
    if not cap:
        cap = 64 * 1024 * 1024  # v7x per-TensorCore capacity (most restrictive)
    # ~60% of physical capacity: headroom for Mosaic internal scratch + pipelining.
    return max(32 * 1024 * 1024, int(cap * 0.6))


def cross_attention(query, key, value, params, *, num_heads, eps=1e-5, tq=256,
                    mxu_dtype=jnp.bfloat16):
    B, Lq, D = query.shape
    _, Lk, _ = key.shape
    assert D % num_heads == 0, "d_model must be divisible by num_heads"
    head_dim = D // num_heads

    tq = min(tq, Lq)
    n_q = pl.cdiv(Lq, tq)

    # Host-side, one-time parameter prep:
    #   * fold 1/sqrt(head_dim) into Wq / bq,
    #   * cast MXU weight operands to bf16 (halves weight DMA + VMEM footprint),
    #   * keep biases / LayerNorm params in f32 (added to f32 accumulators).
    scale = 1.0 / math.sqrt(head_dim)
    wq = (params["wq"] * scale).astype(mxu_dtype)
    bq = (params["bq"] * scale).astype(jnp.float32)
    wk = params["wk"].astype(mxu_dtype)
    bk = params["bk"].astype(jnp.float32)
    wv = params["wv"].astype(mxu_dtype)
    bv = params["bv"].astype(jnp.float32)
    wo = params["wo"].astype(mxu_dtype)
    bo = params["bo"].astype(jnp.float32)
    gamma = params["gamma"].astype(jnp.float32)
    beta = params["beta"].astype(jnp.float32)

    kernel = functools.partial(cross_attention_kernel,
                               num_heads=num_heads, head_dim=head_dim, eps=eps)

    q_spec = pl.BlockSpec((1, tq, D), lambda b, q: (b, q, 0))
    kv_spec = pl.BlockSpec((1, Lk, D), lambda b, q: (b, 0, 0))
    w_spec = pl.BlockSpec((D, D), lambda b, q: (0, 0))
    vec_spec = pl.BlockSpec((1, D), lambda b, q: (0, 0))

    return pl.pallas_call(
        kernel,
        out_shape=jax.ShapeDtypeStruct((B, Lq, D), query.dtype),
        grid_spec=pltpu.PrefetchScalarGridSpec(
            num_scalar_prefetch=0,
            grid=(B, n_q),
            in_specs=[
                q_spec, kv_spec, kv_spec,
                w_spec, vec_spec,    # Wq (scaled), bq (scaled)
                w_spec, vec_spec,    # Wk, bk
                w_spec, vec_spec,    # Wv, bv
                w_spec, vec_spec,    # Wo, bo
                vec_spec, vec_spec,  # gamma, beta
            ],
            out_specs=q_spec,
            scratch_shapes=[
                pltpu.VMEM((tq, D), mxu_dtype),   # q_proj
                pltpu.VMEM((Lk, D), mxu_dtype),   # k_proj (persists across q tiles)
                pltpu.VMEM((Lk, D), mxu_dtype),   # v_proj (persists across q tiles)
                pltpu.VMEM((tq, D), mxu_dtype),   # concatenated head outputs
            ]),
        compiler_params=pltpu.CompilerParams(
            # B parallel (keeps v7x megacore sharding); q arbitrary because the
            # hoisted K/V projection scratch carries state across query tiles.
            dimension_semantics=("parallel", "arbitrary"),
            vmem_limit_bytes=_vmem_limit_bytes()),
    )(query, key, value, wq, bq, wk, bk, wv, bv, wo, bo, gamma, beta)


def reference_cross_attention(query, key, value, params, *, num_heads, eps=1e-5):
    """Pure-JAX f32 reference mirroring the PyTorch forward (eval mode)."""
    B, Lq, D = query.shape
    Lk = key.shape[1]
    Dh = D // num_heads

    def proj(x, w, b):
        return jnp.einsum('bld,de->ble', x, w) + b[0]

    q = proj(query, params["wq"], params["bq"]).reshape(B, Lq, num_heads, Dh).transpose(0, 2, 1, 3)
    k = proj(key, params["wk"], params["bk"]).reshape(B, Lk, num_heads, Dh).transpose(0, 2, 1, 3)
    v = proj(value, params["wv"], params["bv"]).reshape(B, Lk, num_heads, Dh).transpose(0, 2, 1, 3)

    scores = jnp.einsum('bhqd,bhkd->bhqk', q, k) / math.sqrt(Dh)
    probs = jax.nn.softmax(scores, axis=-1)
    attn = jnp.einsum('bhqk,bhkd->bhqd', probs, v).transpose(0, 2, 1, 3).reshape(B, Lq, D)
    out = jnp.einsum('bld,de->ble', attn, params["wo"]) + params["bo"][0]

    res = query + out
    mu = jnp.mean(res, axis=-1, keepdims=True)
    var = jnp.mean((res - mu) ** 2, axis=-1, keepdims=True)
    return (res - mu) * lax.rsqrt(var + eps) * params["gamma"][0] + params["beta"][0]


if __name__ == "__main__":
    # Small lane-dense shapes: D multiple of 128; Lq tiled over 2 grid steps so
    # the hoisted (once-per-batch) K/V projection path is actually exercised.
    B, Lq, Lk, D, H = 2, 256, 128, 128, 4

    key0 = jax.random.PRNGKey(0)
    keys = jax.random.split(key0, 12)

    def init_w(k):
        return jax.random.normal(k, (D, D), jnp.float32) * 0.05

    params = {
        "wq": init_w(keys[0]), "bq": jax.random.normal(keys[1], (1, D), jnp.float32) * 0.01,
        "wk": init_w(keys[2]), "bk": jax.random.normal(keys[3], (1, D), jnp.float32) * 0.01,
        "wv": init_w(keys[4]), "bv": jax.random.normal(keys[5], (1, D), jnp.float32) * 0.01,
        "wo": init_w(keys[6]), "bo": jax.random.normal(keys[7], (1, D), jnp.float32) * 0.01,
        "gamma": jnp.ones((1, D), jnp.float32),   # LayerNorm weight (PyTorch init)
        "beta": jnp.zeros((1, D), jnp.float32),   # LayerNorm bias  (PyTorch init)
    }

    query = jax.random.normal(keys[8], (B, Lq, D), jnp.float32)
    key_t = jax.random.normal(keys[9], (B, Lk, D), jnp.float32)
    value = jax.random.normal(keys[10], (B, Lk, D), jnp.float32)

    out = cross_attention(query, key_t, value, params, num_heads=H, tq=128)
    out = jax.block_until_ready(out)

    ref = reference_cross_attention(query, key_t, value, params, num_heads=H)
    assert out.shape == (B, Lq, D)
    # Tolerance accounts for bf16 MXU operands (f32 accumulation) vs. f32 reference.
    assert jnp.allclose(out, ref, atol=2e-2, rtol=2e-2), "mismatch vs JAX reference"

    print("KERNEL_OK")
</pallas_src>

<mosaic_0001>
module attributes {stable_mosaic.version = 11 : i64} {
  func.func @cross_attention_kernel(%arg0: i32, %arg1: i32, %arg2: memref<1x128x128xf32, #tpu.memory_space<vmem>>, %arg3: memref<1x128x128xf32, #tpu.memory_space<vmem>>, %arg4: memref<1x128x128xf32, #tpu.memory_space<vmem>>, %arg5: memref<128x128xbf16, #tpu.memory_space<vmem>>, %arg6: memref<1x128xf32, #tpu.memory_space<vmem>>, %arg7: memref<128x128xbf16, #tpu.memory_space<vmem>>, %arg8: memref<1x128xf32, #tpu.memory_space<vmem>>, %arg9: memref<128x128xbf16, #tpu.memory_space<vmem>>, %arg10: memref<1x128xf32, #tpu.memory_space<vmem>>, %arg11: memref<128x128xbf16, #tpu.memory_space<vmem>>, %arg12: memref<1x128xf32, #tpu.memory_space<vmem>>, %arg13: memref<1x128xf32, #tpu.memory_space<vmem>>, %arg14: memref<1x128xf32, #tpu.memory_space<vmem>>, %arg15: memref<1x128x128xf32, #tpu.memory_space<vmem>>, %arg16: memref<128x128xbf16, #tpu.memory_space<vmem>>, %arg17: memref<128x128xbf16, #tpu.memory_space<vmem>>, %arg18: memref<128x128xbf16, #tpu.memory_space<vmem>>, %arg19: memref<128x128xbf16, #tpu.memory_space<vmem>>) attributes {dimension_semantics = [#tpu.dimension_semantics<parallel>, #tpu.dimension_semantics<arbitrary>], iteration_bounds = array<i64: 2, 2>, scalar_prefetch = 0 : i64, scratch_operands = 4 : i64, tpu.core_type = #tpu.core_type<tc>, window_params = [{transform_indices = @transform_0, window_bounds = array<i64: 1, 128, 128>}, {transform_indices = @transform_1, window_bounds = array<i64: 1, 128, 128>}, {transform_indices = @transform_2, window_bounds = array<i64: 1, 128, 128>}, {pipeline_mode = #tpu.pipeline_mode<synchronous>, transform_indices = @transform_3, window_bounds = array<i64: 128, 128>}, {pipeline_mode = #tpu.pipeline_mode<synchronous>, transform_indices = @transform_4, window_bounds = array<i64: 1, 128>}, {pipeline_mode = #tpu.pipeline_mode<synchronous>, transform_indices = @transform_5, window_bounds = array<i64: 128, 128>}, {pipeline_mode = #tpu.pipeline_mode<synchronous>, transform_indices = @transform_6, window_bounds = array<i64: 1, 128>}, {pipeline_mode = #tpu.pipeline_mode<synchronous>, transform_indices = @transform_7, window_bounds = array<i64: 128, 128>}, {pipeline_mode = #tpu.pipeline_mode<synchronous>, transform_indices = @transform_8, window_bounds = array<i64: 1, 128>}, {pipeline_mode = #tpu.pipeline_mode<synchronous>, transform_indices = @transform_9, window_bounds = array<i64: 128, 128>}, {pipeline_mode = #tpu.pipeline_mode<synchronous>, transform_indices = @transform_10, window_bounds = array<i64: 1, 128>}, {pipeline_mode = #tpu.pipeline_mode<synchronous>, transform_indices = @transform_11, window_bounds = array<i64: 1, 128>}, {pipeline_mode = #tpu.pipeline_mode<synchronous>, transform_indices = @transform_12, window_bounds = array<i64: 1, 128>}, {transform_indices = @transform_13, window_bounds = array<i64: 1, 128, 128>}]} {
    %c0_i32 = arith.constant 0 : i32
    %0 = arith.cmpi eq, %arg1, %c0_i32 : i32
    %1 = arith.extui %0 : i1 to i32
    %c0_i32_0 = arith.constant 0 : i32
    %2 = arith.cmpi ne, %1, %c0_i32_0 : i32
    scf.if %2 {
      %c0_76 = arith.constant 0 : index
      %c0_77 = arith.constant 0 : index
      %c0_78 = arith.constant 0 : index
      %119 = vector.load %arg3[%c0_76, %c0_77, %c0_78] : memref<1x128x128xf32, #tpu.memory_space<vmem>>, vector<1x128x128xf32>
      %120 = vector.shape_cast %119 : vector<1x128x128xf32> to vector<128x128xf32>
      %121 = arith.truncf %120 : vector<128x128xf32> to vector<128x128xbf16>
      %c0_79 = arith.constant 0 : index
      %c0_80 = arith.constant 0 : index
      %c0_81 = arith.constant 0 : index
      %122 = vector.load %arg4[%c0_79, %c0_80, %c0_81] : memref<1x128x128xf32, #tpu.memory_space<vmem>>, vector<1x128x128xf32>
      %123 = vector.shape_cast %122 : vector<1x128x128xf32> to vector<128x128xf32>
      %124 = arith.truncf %123 : vector<128x128xf32> to vector<128x128xbf16>
      %c0_82 = arith.constant 0 : index
      %c0_83 = arith.constant 0 : index
      %125 = vector.load %arg7[%c0_82, %c0_83] : memref<128x128xbf16, #tpu.memory_space<vmem>>, vector<128x128xbf16>
      %cst_84 = arith.constant dense<0.000000e+00> : vector<128x128xf32>
      %126 = tpu.matmul %121, %125, %cst_84 {dimension_numbers = #tpu.dot_dimension_numbers<[1], [0], [0], [1], [0, 0, 1, 1], [], []>} : vector<128x128xbf16>, vector<128x128xbf16>, vector<128x128xf32> -> vector<128x128xf32>
      %c0_85 = arith.constant 0 : index
      %c0_86 = arith.constant 0 : index
      %127 = vector.load %arg8[%c0_85, %c0_86] : memref<1x128xf32, #tpu.memory_space<vmem>>, vector<1x128xf32>
      %128 = vector.broadcast %127 : vector<1x128xf32> to vector<128x128xf32>
      %129 = arith.addf %126, %128 : vector<128x128xf32>
      %130 = arith.truncf %129 : vector<128x128xf32> to vector<128x128xbf16>
      %c0_87 = arith.constant 0 : index
      %c0_88 = arith.constant 0 : index
      %131 = vector.load %arg17[%c0_87, %c0_88] : memref<128x128xbf16, #tpu.memory_space<vmem>>, vector<128x128xbf16>
      tpu.vector_store %arg17[%c0_87, %c0_88], %130 {strides = array<i32>} : memref<128x128xbf16, #tpu.memory_space<vmem>>, vector<128x128xbf16>,
      %c0_89 = arith.constant 0 : index
      %c0_90 = arith.constant 0 : index
      %132 = vector.load %arg9[%c0_89, %c0_90] : memref<128x128xbf16, #tpu.memory_space<vmem>>, vector<128x128xbf16>
      %cst_91 = arith.constant dense<0.000000e+00> : vector<128x128xf32>
      %133 = tpu.matmul %124, %132, %cst_91 {dimension_numbers = #tpu.dot_dimension_numbers<[1], [0], [0], [1], [0, 0, 1, 1], [], []>} : vector<128x128xbf16>, vector<128x128xbf16>, vector<128x128xf32> -> vector<128x128xf32>
      %c0_92 = arith.constant 0 : index
      %c0_93 = arith.constant 0 : index
      %134 = vector.load %arg10[%c0_92, %c0_93] : memref<1x128xf32, #tpu.memory_space<vmem>>, vector<1x128xf32>
      %135 = vector.broadcast %134 : vector<1x128xf32> to vector<128x128xf32>
      %136 = arith.addf %133, %135 : vector<128x128xf32>
      %137 = arith.truncf %136 : vector<128x128xf32> to vector<128x128xbf16>
      %c0_94 = arith.constant 0 : index
      %c0_95 = arith.constant 0 : index
      %138 = vector.load %arg18[%c0_94, %c0_95] : memref<128x128xbf16, #tpu.memory_space<vmem>>, vector<128x128xbf16>
      tpu.vector_store %arg18[%c0_94, %c0_95], %137 {strides = array<i32>} : memref<128x128xbf16, #tpu.memory_space<vmem>>, vector<128x128xbf16>,
    } else {
    }
    %c0 = arith.constant 0 : index
    %c0_1 = arith.constant 0 : index
    %c0_2 = arith.constant 0 : index
    %3 = vector.load %arg2[%c0, %c0_1, %c0_2] : memref<1x128x128xf32, #tpu.memory_space<vmem>>, vector<1x128x128xf32>
    %4 = vector.shape_cast %3 : vector<1x128x128xf32> to vector<128x128xf32>
    %5 = arith.truncf %4 : vector<128x128xf32> to vector<128x128xbf16>
    %c0_3 = arith.constant 0 : index
    %c0_4 = arith.constant 0 : index
    %6 = vector.load %arg5[%c0_3, %c0_4] : memref<128x128xbf16, #tpu.memory_space<vmem>>, vector<128x128xbf16>
    %cst = arith.constant dense<0.000000e+00> : vector<128x128xf32>
    %7 = tpu.matmul %5, %6, %cst {dimension_numbers = #tpu.dot_dimension_numbers<[1], [0], [0], [1], [0, 0, 1, 1], [], []>} : vector<128x128xbf16>, vector<128x128xbf16>, vector<128x128xf32> -> vector<128x128xf32>
    %c0_5 = arith.constant 0 : index
    %c0_6 = arith.constant 0 : index
    %8 = vector.load %arg6[%c0_5, %c0_6] : memref<1x128xf32, #tpu.memory_space<vmem>>, vector<1x128xf32>
    %9 = vector.broadcast %8 : vector<1x128xf32> to vector<128x128xf32>
    %10 = arith.addf %7, %9 : vector<128x128xf32>
    %11 = arith.truncf %10 : vector<128x128xf32> to vector<128x128xbf16>
    %c0_7 = arith.constant 0 : index
    %c0_8 = arith.constant 0 : index
    %12 = vector.load %arg16[%c0_7, %c0_8] : memref<128x128xbf16, #tpu.memory_space<vmem>>, vector<128x128xbf16>
    tpu.vector_store %arg16[%c0_7, %c0_8], %11 {strides = array<i32>} : memref<128x128xbf16, #tpu.memory_space<vmem>>, vector<128x128xbf16>,
    %c0_9 = arith.constant 0 : index
    %c0_10 = arith.constant 0 : index
    %13 = vector.load %arg16[%c0_9, %c0_10] : memref<128x128xbf16, #tpu.memory_space<vmem>>, vector<128x32xbf16>
    %c0_11 = arith.constant 0 : index
    %c0_12 = arith.constant 0 : index
    %14 = vector.load %arg17[%c0_11, %c0_12] : memref<128x128xbf16, #tpu.memory_space<vmem>>, vector<128x32xbf16>
    %c0_13 = arith.constant 0 : index
    %c0_14 = arith.constant 0 : index
    %15 = vector.load %arg18[%c0_13, %c0_14] : memref<128x128xbf16, #tpu.memory_space<vmem>>, vector<128x32xbf16>
    %cst_15 = arith.constant dense<0.000000e+00> : vector<128x128xf32>
    %16 = tpu.matmul %13, %14, %cst_15 {dimension_numbers = #tpu.dot_dimension_numbers<[1], [1], [0], [0], [0, 0, 1, 0], [], []>} : vector<128x32xbf16>, vector<128x32xbf16>, vector<128x128xf32> -> vector<128x128xf32>
    %cst_16 = arith.constant dense<0xFF800000> : vector<128xf32>
    %17 = vector.multi_reduction <maximumf>, %16, %cst_16 [1] : vector<128x128xf32> to vector<128xf32>
    %18 = vector.shape_cast %17 : vector<128xf32> to vector<128x1xf32>
    %19 = vector.broadcast %18 : vector<128x1xf32> to vector<128x128xf32>
    %20 = arith.subf %16, %19 : vector<128x128xf32>
    %21 = math.exp %20 : vector<128x128xf32>
    %cst_17 = arith.constant dense<0.000000e+00> : vector<128xf32>
    %22 = vector.multi_reduction <add>, %21, %cst_17 [1] : vector<128x128xf32> to vector<128xf32>
    %23 = vector.shape_cast %22 : vector<128xf32> to vector<128x1xf32>
    %24 = arith.truncf %21 : vector<128x128xf32> to vector<128x128xbf16>
    %cst_18 = arith.constant dense<0.000000e+00> : vector<128x32xf32>
    %25 = tpu.matmul %24, %15, %cst_18 {dimension_numbers = #tpu.dot_dimension_numbers<[1], [0], [0], [1], [0, 0, 1, 1], [], []>} : vector<128x128xbf16>, vector<128x32xbf16>, vector<128x32xf32> -> vector<128x32xf32>
    %26 = tpu.reciprocal %23 : vector<128x1xf32> -> vector<128x1xf32>
    %27 = vector.broadcast %26 : vector<128x1xf32> to vector<128x32xf32>
    %28 = arith.mulf %25, %27 : vector<128x32xf32>
    %29 = arith.truncf %28 : vector<128x32xf32> to vector<128x32xbf16>
    %c0_19 = arith.constant 0 : index
    %c0_20 = arith.constant 0 : index
    %30 = vector.load %arg19[%c0_19, %c0_20] : memref<128x128xbf16, #tpu.memory_space<vmem>>, vector<128x32xbf16>
    tpu.vector_store %arg19[%c0_19, %c0_20], %29 {strides = array<i32>} : memref<128x128xbf16, #tpu.memory_space<vmem>>, vector<128x32xbf16>,
    %c0_21 = arith.constant 0 : index
    %c32 = arith.constant 32 : index
    %31 = vector.load %arg16[%c0_21, %c32] : memref<128x128xbf16, #tpu.memory_space<vmem>>, vector<128x32xbf16>
    %c0_22 = arith.constant 0 : index
    %c32_23 = arith.constant 32 : index
    %32 = vector.load %arg17[%c0_22, %c32_23] : memref<128x128xbf16, #tpu.memory_space<vmem>>, vector<128x32xbf16>
    %c0_24 = arith.constant 0 : index
    %c32_25 = arith.constant 32 : index
    %33 = vector.load %arg18[%c0_24, %c32_25] : memref<128x128xbf16, #tpu.memory_space<vmem>>, vector<128x32xbf16>
    %cst_26 = arith.constant dense<0.000000e+00> : vector<128x128xf32>
    %34 = tpu.matmul %31, %32, %cst_26 {dimension_numbers = #tpu.dot_dimension_numbers<[1], [1], [0], [0], [0, 0, 1, 0], [], []>} : vector<128x32xbf16>, vector<128x32xbf16>, vector<128x128xf32> -> vector<128x128xf32>
    %cst_27 = arith.constant dense<0xFF800000> : vector<128xf32>
    %35 = vector.multi_reduction <maximumf>, %34, %cst_27 [1] : vector<128x128xf32> to vector<128xf32>
    %36 = vector.shape_cast %35 : vector<128xf32> to vector<128x1xf32>
    %37 = vector.broadcast %36 : vector<128x1xf32> to vector<128x128xf32>
    %38 = arith.subf %34, %37 : vector<128x128xf32>
    %39 = math.exp %38 : vector<128x128xf32>
    %cst_28 = arith.constant dense<0.000000e+00> : vector<128xf32>
    %40 = vector.multi_reduction <add>, %39, %cst_28 [1] : vector<128x128xf32> to vector<128xf32>
    %41 = vector.shape_cast %40 : vector<128xf32> to vector<128x1xf32>
    %42 = arith.truncf %39 : vector<128x128xf32> to vector<128x128xbf16>
    %cst_29 = arith.constant dense<0.000000e+00> : vector<128x32xf32>
    %43 = tpu.matmul %42, %33, %cst_29 {dimension_numbers = #tpu.dot_dimension_numbers<[1], [0], [0], [1], [0, 0, 1, 1], [], []>} : vector<128x128xbf16>, vector<128x32xbf16>, vector<128x32xf32> -> vector<128x32xf32>
    %44 = tpu.reciprocal %41 : vector<128x1xf32> -> vector<128x1xf32>
    %45 = vector.broadcast %44 : vector<128x1xf32> to vector<128x32xf32>
    %46 = arith.mulf %43, %45 : vector<128x32xf32>
    %47 = arith.truncf %46 : vector<128x32xf32> to vector<128x32xbf16>
    %c0_30 = arith.constant 0 : index
    %c32_31 = arith.constant 32 : index
    %48 = vector.load %arg19[%c0_30, %c32_31] : memref<128x128xbf16, #tpu.memory_space<vmem>>, vector<128x32xbf16>
    tpu.vector_store %arg19[%c0_30, %c32_31], %47 {strides = array<i32>} : memref<128x128xbf16, #tpu.memory_space<vmem>>, vector<128x32xbf16>,
    %c0_32 = arith.constant 0 : index
    %c64 = arith.constant 64 : index
    %49 = vector.load %arg16[%c0_32, %c64] : memref<128x128xbf16, #tpu.memory_space<vmem>>, vector<128x32xbf16>
    %c0_33 = arith.constant 0 : index
    %c64_34 = arith.constant 64 : index
    %50 = vector.load %arg17[%c0_33, %c64_34] : memref<128x128xbf16, #tpu.memory_space<vmem>>, vector<128x32xbf16>
    %c0_35 = arith.constant 0 : index
    %c64_36 = arith.constant 64 : index
    %51 = vector.load %arg18[%c0_35, %c64_36] : memref<128x128xbf16, #tpu.memory_space<vmem>>, vector<128x32xbf16>
    %cst_37 = arith.constant dense<0.000000e+00> : vector<128x128xf32>
    %52 = tpu.matmul %49, %50, %cst_37 {dimension_numbers = #tpu.dot_dimension_numbers<[1], [1], [0], [0], [0, 0, 1, 0], [], []>} : vector<128x32xbf16>, vector<128x32xbf16>, vector<128x128xf32> -> vector<128x128xf32>
    %cst_38 = arith.constant dense<0xFF800000> : vector<128xf32>
    %53 = vector.multi_reduction <maximumf>, %52, %cst_38 [1] : vector<128x128xf32> to vector<128xf32>
    %54 = vector.shape_cast %53 : vector<128xf32> to vector<128x1xf32>
    %55 = vector.broadcast %54 : vector<128x1xf32> to vector<128x128xf32>
    %56 = arith.subf %52, %55 : vector<128x128xf32>
    %57 = math.exp %56 : vector<128x128xf32>
    %cst_39 = arith.constant dense<0.000000e+00> : vector<128xf32>
    %58 = vector.multi_reduction <add>, %57, %cst_39 [1] : vector<128x128xf32> to vector<128xf32>
    %59 = vector.shape_cast %58 : vector<128xf32> to vector<128x1xf32>
    %60 = arith.truncf %57 : vector<128x128xf32> to vector<128x128xbf16>
    %cst_40 = arith.constant dense<0.000000e+00> : vector<128x32xf32>
    %61 = tpu.matmul %60, %51, %cst_40 {dimension_numbers = #tpu.dot_dimension_numbers<[1], [0], [0], [1], [0, 0, 1, 1], [], []>} : vector<128x128xbf16>, vector<128x32xbf16>, vector<128x32xf32> -> vector<128x32xf32>
    %62 = tpu.reciprocal %59 : vector<128x1xf32> -> vector<128x1xf32>
    %63 = vector.broadcast %62 : vector<128x1xf32> to vector<128x32xf32>
    %64 = arith.mulf %61, %63 : vector<128x32xf32>
    %65 = arith.truncf %64 : vector<128x32xf32> to vector<128x32xbf16>
    %c0_41 = arith.constant 0 : index
    %c64_42 = arith.constant 64 : index
    %66 = vector.load %arg19[%c0_41, %c64_42] : memref<128x128xbf16, #tpu.memory_space<vmem>>, vector<128x32xbf16>
    tpu.vector_store %arg19[%c0_41, %c64_42], %65 {strides = array<i32>} : memref<128x128xbf16, #tpu.memory_space<vmem>>, vector<128x32xbf16>,
    %c0_43 = arith.constant 0 : index
    %c96 = arith.constant 96 : index
    %67 = vector.load %arg16[%c0_43, %c96] : memref<128x128xbf16, #tpu.memory_space<vmem>>, vector<128x32xbf16>
    %c0_44 = arith.constant 0 : index
    %c96_45 = arith.constant 96 : index
    %68 = vector.load %arg17[%c0_44, %c96_45] : memref<128x128xbf16, #tpu.memory_space<vmem>>, vector<128x32xbf16>
    %c0_46 = arith.constant 0 : index
    %c96_47 = arith.constant 96 : index
    %69 = vector.load %arg18[%c0_46, %c96_47] : memref<128x128xbf16, #tpu.memory_space<vmem>>, vector<128x32xbf16>
    %cst_48 = arith.constant dense<0.000000e+00> : vector<128x128xf32>
    %70 = tpu.matmul %67, %68, %cst_48 {dimension_numbers = #tpu.dot_dimension_numbers<[1], [1], [0], [0], [0, 0, 1, 0], [], []>} : vector<128x32xbf16>, vector<128x32xbf16>, vector<128x128xf32> -> vector<128x128xf32>
    %cst_49 = arith.constant dense<0xFF800000> : vector<128xf32>
    %71 = vector.multi_reduction <maximumf>, %70, %cst_49 [1] : vector<128x128xf32> to vector<128xf32>
    %72 = vector.shape_cast %71 : vector<128xf32> to vector<128x1xf32>
    %73 = vector.broadcast %72 : vector<128x1xf32> to vector<128x128xf32>
    %74 = arith.subf %70, %73 : vector<128x128xf32>
    %75 = math.exp %74 : vector<128x128xf32>
    %cst_50 = arith.constant dense<0.000000e+00> : vector<128xf32>
    %76 = vector.multi_reduction <add>, %75, %cst_50 [1] : vector<128x128xf32> to vector<128xf32>
    %77 = vector.shape_cast %76 : vector<128xf32> to vector<128x1xf32>
    %78 = arith.truncf %75 : vector<128x128xf32> to vector<128x128xbf16>
    %cst_51 = arith.constant dense<0.000000e+00> : vector<128x32xf32>
    %79 = tpu.matmul %78, %69, %cst_51 {dimension_numbers = #tpu.dot_dimension_numbers<[1], [0], [0], [1], [0, 0, 1, 1], [], []>} : vector<128x128xbf16>, vector<128x32xbf16>, vector<128x32xf32> -> vector<128x32xf32>
    %80 = tpu.reciprocal %77 : vector<128x1xf32> -> vector<128x1xf32>
    %81 = vector.broadcast %80 : vector<128x1xf32> to vector<128x32xf32>
    %82 = arith.mulf %79, %81 : vector<128x32xf32>
    %83 = arith.truncf %82 : vector<128x32xf32> to vector<128x32xbf16>
    %c0_52 = arith.constant 0 : index
    %c96_53 = arith.constant 96 : index
    %84 = vector.load %arg19[%c0_52, %c96_53] : memref<128x128xbf16, #tpu.memory_space<vmem>>, vector<128x32xbf16>
    tpu.vector_store %arg19[%c0_52, %c96_53], %83 {strides = array<i32>} : memref<128x128xbf16, #tpu.memory_space<vmem>>, vector<128x32xbf16>,
    %c0_54 = arith.constant 0 : index
    %c0_55 = arith.constant 0 : index
    %85 = vector.load %arg19[%c0_54, %c0_55] : memref<128x128xbf16, #tpu.memory_space<vmem>>, vector<128x128xbf16>
    %c0_56 = arith.constant 0 : index
    %c0_57 = arith.constant 0 : index
    %86 = vector.load %arg11[%c0_56, %c0_57] : memref<128x128xbf16, #tpu.memory_space<vmem>>, vector<128x128xbf16>
    %cst_58 = arith.constant dense<0.000000e+00> : vector<128x128xf32>
    %87 = tpu.matmul %85, %86, %cst_58 {dimension_numbers = #tpu.dot_dimension_numbers<[1], [0], [0], [1], [0, 0, 1, 1], [], []>} : vector<128x128xbf16>, vector<128x128xbf16>, vector<128x128xf32> -> vector<128x128xf32>
    %c0_59 = arith.constant 0 : index
    %c0_60 = arith.constant 0 : index
    %88 = vector.load %arg12[%c0_59, %c0_60] : memref<1x128xf32, #tpu.memory_space<vmem>>, vector<1x128xf32>
    %89 = vector.broadcast %88 : vector<1x128xf32> to vector<128x128xf32>
    %90 = arith.addf %87, %89 : vector<128x128xf32>
    %c0_61 = arith.constant 0 : index
    %c0_62 = arith.constant 0 : index
    %c0_63 = arith.constant 0 : index
    %91 = vector.load %arg2[%c0_61, %c0_62, %c0_63] : memref<1x128x128xf32, #tpu.memory_space<vmem>>, vector<1x128x128xf32>
    %92 = vector.shape_cast %91 : vector<1x128x128xf32> to vector<128x128xf32>
    %93 = arith.addf %92, %90 : vector<128x128xf32>
    %cst_64 = arith.constant dense<0.000000e+00> : vector<128xf32>
    %94 = vector.multi_reduction <add>, %93, %cst_64 [1] : vector<128x128xf32> to vector<128xf32>
    %95 = vector.shape_cast %94 : vector<128xf32> to vector<128x1xf32>
    %cst_65 = arith.constant 1.280000e+02 : f32
    %96 = vector.broadcast %cst_65 : f32 to vector<128x1xf32>
    %97 = arith.divf %95, %96 : vector<128x1xf32>
    %98 = vector.broadcast %97 : vector<128x1xf32> to vector<128x128xf32>
    %99 = arith.subf %93, %98 : vector<128x128xf32>
    %100 = arith.mulf %99, %99 : vector<128x128xf32>
    %cst_66 = arith.constant dense<0.000000e+00> : vector<128xf32>
    %101 = vector.multi_reduction <add>, %100, %cst_66 [1] : vector<128x128xf32> to vector<128xf32>
    %102 = vector.shape_cast %101 : vector<128xf32> to vector<128x1xf32>
    %cst_67 = arith.constant 1.280000e+02 : f32
    %103 = vector.broadcast %cst_67 : f32 to vector<128x1xf32>
    %104 = arith.divf %102, %103 : vector<128x1xf32>
    %cst_68 = arith.constant 9.99999974E-6 : f32
    %105 = vector.broadcast %cst_68 : f32 to vector<128x1xf32>
    %106 = arith.addf %104, %105 : vector<128x1xf32>
    %107 = math.rsqrt %106 : vector<128x1xf32>
    %108 = vector.broadcast %107 : vector<128x1xf32> to vector<128x128xf32>
    %109 = arith.mulf %99, %108 : vector<128x128xf32>
    %c0_69 = arith.constant 0 : index
    %c0_70 = arith.constant 0 : index
    %110 = vector.load %arg13[%c0_69, %c0_70] : memref<1x128xf32, #tpu.memory_space<vmem>>, vector<1x128xf32>
    %111 = vector.broadcast %110 : vector<1x128xf32> to vector<128x128xf32>
    %112 = arith.mulf %109, %111 : vector<128x128xf32>
    %c0_71 = arith.constant 0 : index
    %c0_72 = arith.constant 0 : index
    %113 = vector.load %arg14[%c0_71, %c0_72] : memref<1x128xf32, #tpu.memory_space<vmem>>, vector<1x128xf32>
    %114 = vector.broadcast %113 : vector<1x128xf32> to vector<128x128xf32>
    %115 = arith.addf %112, %114 : vector<128x128xf32>
    %c0_73 = arith.constant 0 : index
    %c0_74 = arith.constant 0 : index
    %c0_75 = arith.constant 0 : index
    %116 = vector.load %arg15[%c0_73, %c0_74, %c0_75] : memref<1x128x128xf32, #tpu.memory_space<vmem>>, vector<1x128x128xf32>
    %117 = vector.shape_cast %116 : vector<1x128x128xf32> to vector<128x128xf32>
    %118 = vector.shape_cast %115 : vector<128x128xf32> to vector<1x128x128xf32>
    tpu.vector_store %arg15[%c0_73, %c0_74, %c0_75], %118 {strides = array<i32>} : memref<1x128x128xf32, #tpu.memory_space<vmem>>, vector<1x128x128xf32>,
    return
  }
  func.func @transform_0(%arg0: i32, %arg1: i32) -> (i32, i32, i32) {
    %c0_i32 = arith.constant 0 : i32
    %c0_i32_0 = arith.constant 0 : i32
    return %arg0, %arg1, %c0_i32 : i32, i32, i32
  }
  func.func @transform_1(%arg0: i32, %arg1: i32) -> (i32, i32, i32) {
    %c0_i32 = arith.constant 0 : i32
    %c0_i32_0 = arith.constant 0 : i32
    %c0_i32_1 = arith.constant 0 : i32
    return %arg0, %c0_i32, %c0_i32_0 : i32, i32, i32
  }
  func.func @transform_2(%arg0: i32, %arg1: i32) -> (i32, i32, i32) {
    %c0_i32 = arith.constant 0 : i32
    %c0_i32_0 = arith.constant 0 : i32
    %c0_i32_1 = arith.constant 0 : i32
    return %arg0, %c0_i32, %c0_i32_0 : i32, i32, i32
  }
  func.func @transform_3(%arg0: i32, %arg1: i32) -> (i32, i32) {
    %c0_i32 = arith.constant 0 : i32
    %c0_i32_0 = arith.constant 0 : i32
    %c0_i32_1 = arith.constant 0 : i32
    return %c0_i32, %c0_i32_0 : i32, i32
  }
  func.func @transform_4(%arg0: i32, %arg1: i32) -> (i32, i32) {
    %c0_i32 = arith.constant 0 : i32
    %c0_i32_0 = arith.constant 0 : i32
    %c0_i32_1 = arith.constant 0 : i32
    return %c0_i32, %c0_i32_0 : i32, i32
  }
  func.func @transform_5(%arg0: i32, %arg1: i32) -> (i32, i32) {
    %c0_i32 = arith.constant 0 : i32
    %c0_i32_0 = arith.constant 0 : i32
    %c0_i32_1 = arith.constant 0 : i32
    return %c0_i32, %c0_i32_0 : i32, i32
  }
  func.func @transform_6(%arg0: i32, %arg1: i32) -> (i32, i32) {
    %c0_i32 = arith.constant 0 : i32
    %c0_i32_0 = arith.constant 0 : i32
    %c0_i32_1 = arith.constant 0 : i32
    return %c0_i32, %c0_i32_0 : i32, i32
  }
  func.func @transform_7(%arg0: i32, %arg1: i32) -> (i32, i32) {
    %c0_i32 = arith.constant 0 : i32
    %c0_i32_0 = arith.constant 0 : i32
    %c0_i32_1 = arith.constant 0 : i32
    return %c0_i32, %c0_i32_0 : i32, i32
  }
  func.func @transform_8(%arg0: i32, %arg1: i32) -> (i32, i32) {
    %c0_i32 = arith.constant 0 : i32
    %c0_i32_0 = arith.constant 0 : i32
    %c0_i32_1 = arith.constant 0 : i32
    return %c0_i32, %c0_i32_0 : i32, i32
  }
  func.func @transform_9(%arg0: i32, %arg1: i32) -> (i32, i32) {
    %c0_i32 = arith.constant 0 : i32
    %c0_i32_0 = arith.constant 0 : i32
    %c0_i32_1 = arith.constant 0 : i32
    return %c0_i32, %c0_i32_0 : i32, i32
  }
  func.func @transform_10(%arg0: i32, %arg1: i32) -> (i32, i32) {
    %c0_i32 = arith.constant 0 : i32
    %c0_i32_0 = arith.constant 0 : i32
    %c0_i32_1 = arith.constant 0 : i32
    return %c0_i32, %c0_i32_0 : i32, i32
  }
  func.func @transform_11(%arg0: i32, %arg1: i32) -> (i32, i32) {
    %c0_i32 = arith.constant 0 : i32
    %c0_i32_0 = arith.constant 0 : i32
    %c0_i32_1 = arith.constant 0 : i32
    return %c0_i32, %c0_i32_0 : i32, i32
  }
  func.func @transform_12(%arg0: i32, %arg1: i32) -> (i32, i32) {
    %c0_i32 = arith.constant 0 : i32
    %c0_i32_0 = arith.constant 0 : i32
    %c0_i32_1 = arith.constant 0 : i32
    return %c0_i32, %c0_i32_0 : i32, i32
  }
  func.func @transform_13(%arg0: i32, %arg1: i32) -> (i32, i32, i32) {
    %c0_i32 = arith.constant 0 : i32
    %c0_i32_0 = arith.constant 0 : i32
    return %arg0, %arg1, %c0_i32 : i32, i32, i32
  }
}

</mosaic_0001>

<llo_original>
// kernel: tpu_custom_call.1
$region0: #{tpu_custom_call.1}
  #allocation0 [shape = 'u32[]', space=smem, size = 0x4, offset = 0x4, fixed_abs, tag = 'smem constant byte address 0x4 - core index']
  #allocation1 [shape = 'u32[72,128]{1,0:T(1,128)}', space=vmem, size = 0x9000, scoped, tag = 'internal scratch']
  #allocation2 [shape = 'bf16[128,128]{1,0:T(8,128)(2,1)}', space=vmem, size = 0x8000, scoped, tag = 'scratch operand']
  #allocation3 [shape = 'bf16[128,128]{1,0:T(8,128)(2,1)}', space=vmem, size = 0x8000, scoped, tag = 'scratch operand']
  #allocation4 [shape = 'bf16[128,128]{1,0:T(8,128)(2,1)}', space=vmem, size = 0x8000, scoped, tag = 'scratch operand']
  #allocation5 [shape = 'bf16[128,128]{1,0:T(8,128)(2,1)}', space=vmem, size = 0x8000, scoped, tag = 'scratch operand']
  %s0 = inlined_call_operand.hbm [shape: f32[2,256,128], index: 0, kind: input, shape index: {}]
  %s1 = inlined_call_operand.hbm [shape: f32[2,128,128], index: 1, kind: input, shape index: {}]
  %s2 = inlined_call_operand.hbm [shape: f32[2,128,128], index: 2, kind: input, shape index: {}]
  %s3 = inlined_call_operand.hbm [shape: bf16[128,128], index: 3, kind: input, shape index: {}]
  %s4 = inlined_call_operand.vmem [shape: f32[1,128], index: 4, kind: input, shape index: {}]
  %s5 = inlined_call_operand.hbm [shape: bf16[128,128], index: 5, kind: input, shape index: {}]
  %s6 = inlined_call_operand.vmem [shape: f32[1,128], index: 6, kind: input, shape index: {}]
  %s7 = inlined_call_operand.hbm [shape: bf16[128,128], index: 7, kind: input, shape index: {}]
  %s8 = inlined_call_operand.vmem [shape: f32[1,128], index: 8, kind: input, shape index: {}]
  %s9 = inlined_call_operand.hbm [shape: bf16[128,128], index: 9, kind: input, shape index: {}]
  %s10 = inlined_call_operand.vmem [shape: f32[1,128], index: 10, kind: input, shape index: {}]
  %s11 = inlined_call_operand.vmem [shape: f32[1,128], index: 11, kind: input, shape index: {}]
  %s12 = inlined_call_operand.vmem [shape: f32[1,128], index: 12, kind: input, shape index: {}]
  %s13 = inlined_call_operand.hbm [shape: f32[2,256,128], index: 13, kind: output, shape index: {}]
  %s14 = sld [smem:[#allocation0]]
  $region117: #{tpu_custom_call.1} parent=0
    _
  %s16 = ssub.s32 1, %s14
  %s17 = scalar_select 0, %s16, %s14
  $region1: #{tpu_custom_call.1} parent=0
    #allocation6 [shape = 'u8[131072]{0}', space=vmem, size = 0x20000, scoped, tag = 'input window, operand 0']
    #allocation7 [shape = 's32[2]{0}', space=sflag, size = 0x8, scoped, tag = 'scoped memory for tpu_custom_call.1']
    #allocation8 [shape = 's32[2]{0}', space=sflag, size = 0x8, scoped, tag = 'scoped memory for tpu_custom_call.1']
    #allocation9 [shape = 'u8[131072]{0}', space=vmem, size = 0x20000, scoped, tag = 'input window, operand 1']
    #allocation10 [shape = 's32[2]{0}', space=sflag, size = 0x8, scoped, tag = 'scoped memory for tpu_custom_call.1']
    #allocation11 [shape = 'u8[131072]{0}', space=vmem, size = 0x20000, scoped, tag = 'input window, operand 2']
    #allocation12 [shape = 'u8[32768]{0}', space=vmem, size = 0x8000, scoped, tag = 'input window, operand 3, single buffered']
    #allocation13 [shape = 's32[1]{0}', space=sflag, size = 0x4, scoped, tag = 'scoped memory for tpu_custom_call.1']
    #allocation14 [shape = 'u8[32768]{0}', space=vmem, size = 0x8000, scoped, tag = 'input window, operand 5, single buffered']
    #allocation15 [shape = 'u8[32768]{0}', space=vmem, size = 0x8000, scoped, tag = 'input window, operand 7, single buffered']
    #allocation16 [shape = 's32[1]{0}', space=sflag, size = 0x4, scoped, tag = 'scoped memory for tpu_custom_call.1']
    #allocation17 [shape = 'u8[32768]{0}', space=vmem, size = 0x8000, scoped, tag = 'input window, operand 9, single buffered']
    #allocation18 [shape = 'u8[131072]{0}', space=vmem, size = 0x20000, scoped, tag = 'output window, operand 0']
    %18 = vsyncpa [#allocation7], 0
    %s19 = scalar_lea.sflag [#allocation7], 1
    %20 = vsyncpa %s19, 0
    %21 = vsyncpa [#allocation10], 0
    %s22 = scalar_lea.sflag [#allocation10], 1
    %23 = vsyncpa %s22, 0
    %24 = vsyncpa [#allocation13], 0
    %25 = vsyncpa [#allocation16], 0
    %26 = vsyncpa [#allocation8], 0
    %s27 = scalar_lea.sflag [#allocation8], 1
    %28 = vsyncpa %s27, 0
    loop: start=0, step=1, limit=6
    $region2: #{tpu_custom_call.1} parent=1 // loop_pre_header
      _
    $region3: #{tpu_custom_call.1} parent=1 // loop_header
      %s30 = sphi 0, %s34
      %p31 = scmp.ge.s32.totalorder %s30, 6
      %s37 = sphi 0, %s49
      %s38 = sphi 0, %s45
      %s39 = sphi 0, %s37
      %s40 = sphi 0, %s38
      %s41 = sphi 0, %s39
      %s42 = sphi 0, %s40
      %s54 = sphi 0, %s56
      %s57 = sphi 0, %s54
      %s58 = sphi 0, %s57
      %s74 = sphi 0, %s58
      %s80 = sphi 0, %s82
      %s83 = sphi 0, %s80
      %s84 = sphi 0, %s83
      %s100 = sphi 0, %s84
      %s106 = sphi 0, %s108
      %s109 = sphi 0, %s106
      %s110 = sphi 0, %s109
      %s126 = sphi 0, %s110
      %s130 = sphi 0, %s130
      %s132 = sphi 0, %s130
      %s133 = sphi 0, %s132
      %s147 = sphi 0, %s133
      %s151 = sphi 0, %s151
      %s153 = sphi 0, %s151
      %s154 = sphi 0, %s153
      %s168 = sphi 0, %s154
      %s172 = sphi 0, %s172
      %s174 = sphi 0, %s172
      %s175 = sphi 0, %s174
      %s189 = sphi 0, %s175
      %s193 = sphi 0, %s193
      %s195 = sphi 0, %s193
      %s196 = sphi 0, %s195
      %s210 = sphi 0, %s196
      %s214 = sphi 0, %s214
      %s216 = sphi 0, %s214
      %s217 = sphi 0, %s216
      %s231 = sphi 0, %s217
      %s235 = sphi 0, %s235
      %s237 = sphi 0, %s235
      %s238 = sphi 0, %s237
      %s252 = sphi 0, %s238
      %s256 = sphi 0, %s256
      %s258 = sphi 0, %s256
      %s259 = sphi 0, %s258
      %s273 = sphi 0, %s259
      %s277 = sphi 0, %s277
      %s279 = sphi 0, %s277
      %s280 = sphi 0, %s279
      %s294 = sphi 0, %s280
      %s298 = sphi 0, %s298
      %s300 = sphi 0, %s298
      %s301 = sphi 0, %s300
      %s315 = sphi 0, %s301
      %s319 = sphi 0, %s319
      %s321 = sphi 0, %s319
      %s322 = sphi 0, %s321
      %s336 = sphi 0, %s322
      %s344 = sphi 0, %s346
      %s347 = sphi 0, %s344
      %s348 = sphi 0, %s347
      %s364 = sphi 0, %s348
    $region4: #{tpu_custom_call.1} parent=1 // loop_header_branch
      %33 = sbr.rel (%p31) target = $region8
    $region5: #{tpu_custom_call.1} parent=1 // loop_body
      %s35 = ssub.s32 %s30, 1
      %s36 = ssub.s32 %s30, 2
      %s43 = sadd.s32 1, %s38
      %p44 = scmp.ge.s32.totalorder %s43, 2
      %s45 = scalar_select %p44, 0, %s43
      %s46 = sadd.s32 1, %s37
      %s47 = scalar_select %p44, %s46, %s37
      %p48 = scmp.ge.s32.totalorder %s47, 2
      %s49 = scalar_select %p48, 0, %s47
      %s50 = ssub.s32 %s37, %s49
      %s51 = ssub.s32 %s38, %s45
      %s52 = sor.u32 %s50, %s51
      %p53 = scmp.eq.s32.totalorder %s52, 0
      %s55 = sadd.s32 %s54, 1
      %s56 = scalar_select %p53, %s54, %s55
      %p59 = pneg %p53
      %p60 = scmp.eq.s32.totalorder %s30, 3
      %p61 = por %p59, %p60
      %p62 = scmp.ne.s32.totalorder %s54, %s57
      %p63 = scmp.eq.s32.totalorder %s30, 0
      %p64 = por %p62, %p63
      %p65 = scmp.ne.s32.totalorder %s54, %s57
      %p66 = scmp.eq.s32.totalorder %s35, 3
      %p67 = por %p65, %p66
      %p68 = scmp.ne.s32.totalorder %s57, %s58
      %p69 = scmp.eq.s32.totalorder %s35, 0
      %p70 = por %p68, %p69
      %p71 = scmp.ne.s32.totalorder %s57, %s58
      %p72 = scmp.eq.s32.totalorder %s36, 3
      %p73 = por %p71, %p72
      %p75 = scmp.ne.s32.totalorder %s58, %s74
      %p76 = scmp.eq.s32.totalorder %s36, 0
      %p77 = por %p75, %p76
      %s78 = ssub.s32 %s37, %s49
      %p79 = scmp.eq.s32.totalorder %s78, 0
      %s81 = sadd.s32 %s80, 1
      %s82 = scalar_select %p79, %s80, %s81
      %p85 = pneg %p79
      %p86 = scmp.eq.s32.totalorder %s30, 3
      %p87 = por %p85, %p86
      %p88 = scmp.ne.s32.totalorder %s80, %s83
      %p89 = scmp.eq.s32.totalorder %s30, 0
      %p90 = por %p88, %p89
      %p91 = scmp.ne.s32.totalorder %s80, %s83
      %p92 = scmp.eq.s32.totalorder %s35, 3
      %p93 = por %p91, %p92
      %p94 = scmp.ne.s32.totalorder %s83, %s84
      %p95 = scmp.eq.s32.totalorder %s35, 0
      %p96 = por %p94, %p95
      %p97 = scmp.ne.s32.totalorder %s83, %s84
      %p98 = scmp.eq.s32.totalorder %s36, 3
      %p99 = por %p97, %p98
      %p101 = scmp.ne.s32.totalorder %s84, %s100
      %p102 = scmp.eq.s32.totalorder %s36, 0
      %p103 = por %p101, %p102
      %s104 = ssub.s32 %s37, %s49
      %p105 = scmp.eq.s32.totalorder %s104, 0
      %s107 = sadd.s32 %s106, 1
      %s108 = scalar_select %p105, %s106, %s107
      %p111 = pneg %p105
      %p112 = scmp.eq.s32.totalorder %s30, 3
      %p113 = por %p111, %p112
      %p114 = scmp.ne.s32.totalorder %s106, %s109
      %p115 = scmp.eq.s32.totalorder %s30, 0
      %p116 = por %p114, %p115
      %p117 = scmp.ne.s32.totalorder %s106, %s109
      %p118 = scmp.eq.s32.totalorder %s35, 3
      %p119 = por %p117, %p118
      %p120 = scmp.ne.s32.totalorder %s109, %s110
      %p121 = scmp.eq.s32.totalorder %s35, 0
      %p122 = por %p120, %p121
      %p123 = scmp.ne.s32.totalorder %s109, %s110
      %p124 = scmp.eq.s32.totalorder %s36, 3
      %p125 = por %p123, %p124
      %p127 = scmp.ne.s32.totalorder %s110, %s126
      %p128 = scmp.eq.s32.totalorder %s36, 0
      %p129 = por %p127, %p128
      %s131 = sadd.s32 %s130, 1
      %p134 = scmp.eq.s32.totalorder %s30, 3
      %p135 = scmp.ne.s32.totalorder %s130, %s132
      %p136 = scmp.eq.s32.totalorder %s30, 0
      %p137 = por %p135, %p136
      %p138 = scmp.ne.s32.totalorder %s130, %s132
      %p139 = scmp.eq.s32.totalorder %s35, 3
      %p140 = por %p138, %p139
      %p141 = scmp.ne.s32.totalorder %s132, %s133
      %p142 = scmp.eq.s32.totalorder %s35, 0
      %p143 = por %p141, %p142
      %p144 = scmp.ne.s32.totalorder %s132, %s133
      %p145 = scmp.eq.s32.totalorder %s36, 3
      %p146 = por %p144, %p145
      %p148 = scmp.ne.s32.totalorder %s133, %s147
      %p149 = scmp.eq.s32.totalorder %s36, 0
      %p150 = por %p148, %p149
      %s152 = sadd.s32 %s151, 1
      %p155 = scmp.eq.s32.totalorder %s30, 3
      %p156 = scmp.ne.s32.totalorder %s151, %s153
      %p157 = scmp.eq.s32.totalorder %s30, 0
      %p158 = por %p156, %p157
      %p159 = scmp.ne.s32.totalorder %s151, %s153
      %p160 = scmp.eq.s32.totalorder %s35, 3
      %p161 = por %p159, %p160
      %p162 = scmp.ne.s32.totalorder %s153, %s154
      %p163 = scmp.eq.s32.totalorder %s35, 0
      %p164 = por %p162, %p163
      %p165 = scmp.ne.s32.totalorder %s153, %s154
      %p166 = scmp.eq.s32.totalorder %s36, 3
      %p167 = por %p165, %p166
      %p169 = scmp.ne.s32.totalorder %s154, %s168
      %p170 = scmp.eq.s32.totalorder %s36, 0
      %p171 = por %p169, %p170
      %s173 = sadd.s32 %s172, 1
      %p176 = scmp.eq.s32.totalorder %s30, 3
      %p177 = scmp.ne.s32.totalorder %s172, %s174
      %p178 = scmp.eq.s32.totalorder %s30, 0
      %p179 = por %p177, %p178
      %p180 = scmp.ne.s32.totalorder %s172, %s174
      %p181 = scmp.eq.s32.totalorder %s35, 3
      %p182 = por %p180, %p181
      %p183 = scmp.ne.s32.totalorder %s174, %s175
      %p184 = scmp.eq.s32.totalorder %s35, 0
      %p185 = por %p183, %p184
      %p186 = scmp.ne.s32.totalorder %s174, %s175
      %p187 = scmp.eq.s32.totalorder %s36, 3
      %p188 = por %p186, %p187
      %p190 = scmp.ne.s32.totalorder %s175, %s189
      %p191 = scmp.eq.s32.totalorder %s36, 0
      %p192 = por %p190, %p191
      %s194 = sadd.s32 %s193, 1
      %p197 = scmp.eq.s32.totalorder %s30, 3
      %p198 = scmp.ne.s32.totalorder %s193, %s195
      %p199 = scmp.eq.s32.totalorder %s30, 0
      %p200 = por %p198, %p199
      %p201 = scmp.ne.s32.totalorder %s193, %s195
      %p202 = scmp.eq.s32.totalorder %s35, 3
      %p203 = por %p201, %p202
      %p204 = scmp.ne.s32.totalorder %s195, %s196
      %p205 = scmp.eq.s32.totalorder %s35, 0
      %p206 = por %p204, %p205
      %p207 = scmp.ne.s32.totalorder %s195, %s196
      %p208 = scmp.eq.s32.totalorder %s36, 3
      %p209 = por %p207, %p208
      %p211 = scmp.ne.s32.totalorder %s196, %s210
      %p212 = scmp.eq.s32.totalorder %s36, 0
      %p213 = por %p211, %p212
      %s215 = sadd.s32 %s214, 1
      %p218 = scmp.eq.s32.totalorder %s30, 3
      %p219 = scmp.ne.s32.totalorder %s214, %s216
      %p220 = scmp.eq.s32.totalorder %s30, 0
      %p221 = por %p219, %p220
      %p222 = scmp.ne.s32.totalorder %s214, %s216
      %p223 = scmp.eq.s32.totalorder %s35, 3
      %p224 = por %p222, %p223
      %p225 = scmp.ne.s32.totalorder %s216, %s217
      %p226 = scmp.eq.s32.totalorder %s35, 0
      %p227 = por %p225, %p226
      %p228 = scmp.ne.s32.totalorder %s216, %s217
      %p229 = scmp.eq.s32.totalorder %s36, 3
      %p230 = por %p228, %p229
      %p232 = scmp.ne.s32.totalorder %s217, %s231
      %p233 = scmp.eq.s32.totalorder %s36, 0
      %p234 = por %p232, %p233
      %s236 = sadd.s32 %s235, 1
      %p239 = scmp.eq.s32.totalorder %s30, 3
      %p240 = scmp.ne.s32.totalorder %s235, %s237
      %p241 = scmp.eq.s32.totalorder %s30, 0
      %p242 = por %p240, %p241
      %p243 = scmp.ne.s32.totalorder %s235, %s237
      %p244 = scmp.eq.s32.totalorder %s35, 3
      %p245 = por %p243, %p244
      %p246 = scmp.ne.s32.totalorder %s237, %s238
      %p247 = scmp.eq.s32.totalorder %s35, 0
      %p248 = por %p246, %p247
      %p249 = scmp.ne.s32.totalorder %s237, %s238
      %p250 = scmp.eq.s32.totalorder %s36, 3
      %p251 = por %p249, %p250
      %p253 = scmp.ne.s32.totalorder %s238, %s252
      %p254 = scmp.eq.s32.totalorder %s36, 0
      %p255 = por %p253, %p254
      %s257 = sadd.s32 %s256, 1
      %p260 = scmp.eq.s32.totalorder %s30, 3
      %p261 = scmp.ne.s32.totalorder %s256, %s258
      %p262 = scmp.eq.s32.totalorder %s30, 0
      %p263 = por %p261, %p262
      %p264 = scmp.ne.s32.totalorder %s256, %s258
      %p265 = scmp.eq.s32.totalorder %s35, 3
      %p266 = por %p264, %p265
      %p267 = scmp.ne.s32.totalorder %s258, %s259
      %p268 = scmp.eq.s32.totalorder %s35, 0
      %p269 = por %p267, %p268
      %p270 = scmp.ne.s32.totalorder %s258, %s259
      %p271 = scmp.eq.s32.totalorder %s36, 3
      %p272 = por %p270, %p271
      %p274 = scmp.ne.s32.totalorder %s259, %s273
      %p275 = scmp.eq.s32.totalorder %s36, 0
      %p276 = por %p274, %p275
      %s278 = sadd.s32 %s277, 1
      %p281 = scmp.eq.s32.totalorder %s30, 3
      %p282 = scmp.ne.s32.totalorder %s277, %s279
      %p283 = scmp.eq.s32.totalorder %s30, 0
      %p284 = por %p282, %p283
      %p285 = scmp.ne.s32.totalorder %s277, %s279
      %p286 = scmp.eq.s32.totalorder %s35, 3
      %p287 = por %p285, %p286
      %p288 = scmp.ne.s32.totalorder %s279, %s280
      %p289 = scmp.eq.s32.totalorder %s35, 0
      %p290 = por %p288, %p289
      %p291 = scmp.ne.s32.totalorder %s279, %s280
      %p292 = scmp.eq.s32.totalorder %s36, 3
      %p293 = por %p291, %p292
      %p295 = scmp.ne.s32.totalorder %s280, %s294
      %p296 = scmp.eq.s32.totalorder %s36, 0
      %p297 = por %p295, %p296
      %s299 = sadd.s32 %s298, 1
      %p302 = scmp.eq.s32.totalorder %s30, 3
      %p303 = scmp.ne.s32.totalorder %s298, %s300
      %p304 = scmp.eq.s32.totalorder %s30, 0
      %p305 = por %p303, %p304
      %p306 = scmp.ne.s32.totalorder %s298, %s300
      %p307 = scmp.eq.s32.totalorder %s35, 3
      %p308 = por %p306, %p307
      %p309 = scmp.ne.s32.totalorder %s300, %s301
      %p310 = scmp.eq.s32.totalorder %s35, 0
      %p311 = por %p309, %p310
      %p312 = scmp.ne.s32.totalorder %s300, %s301
      %p313 = scmp.eq.s32.totalorder %s36, 3
      %p314 = por %p312, %p313
      %p316 = scmp.ne.s32.totalorder %s301, %s315
      %p317 = scmp.eq.s32.totalorder %s36, 0
      %p318 = por %p316, %p317
      %s320 = sadd.s32 %s319, 1
      %p323 = scmp.eq.s32.totalorder %s30, 3
      %p324 = scmp.ne.s32.totalorder %s319, %s321
      %p325 = scmp.eq.s32.totalorder %s30, 0
      %p326 = por %p324, %p325
      %p327 = scmp.ne.s32.totalorder %s319, %s321
      %p328 = scmp.eq.s32.totalorder %s35, 3
      %p329 = por %p327, %p328
      %p330 = scmp.ne.s32.totalorder %s321, %s322
      %p331 = scmp.eq.s32.totalorder %s35, 0
      %p332 = por %p330, %p331
      %p333 = scmp.ne.s32.totalorder %s321, %s322
      %p334 = scmp.eq.s32.totalorder %s36, 3
      %p335 = por %p333, %p334
      %p337 = scmp.ne.s32.totalorder %s322, %s336
      %p338 = scmp.eq.s32.totalorder %s36, 0
      %p339 = por %p337, %p338
      %s340 = ssub.s32 %s37, %s49
      %s341 = ssub.s32 %s38, %s45
      %s342 = sor.u32 %s340, %s341
      %p343 = scmp.eq.s32.totalorder %s342, 0
      %s345 = sadd.s32 %s344, 1
      %s346 = scalar_select %p343, %s344, %s345
      %p349 = pneg %p343
      %p350 = scmp.eq.s32.totalorder %s30, 3
      %p351 = por %p349, %p350
      %p352 = scmp.ne.s32.totalorder %s344, %s347
      %p353 = scmp.eq.s32.totalorder %s30, 0
      %p354 = por %p352, %p353
      %p355 = scmp.ne.s32.totalorder %s344, %s347
      %p356 = scmp.eq.s32.totalorder %s35, 3
      %p357 = por %p355, %p356
      %p358 = scmp.ne.s32.totalorder %s347, %s348
      %p359 = scmp.eq.s32.totalorder %s35, 0
      %p360 = por %p358, %p359
      %p361 = scmp.ne.s32.totalorder %s347, %s348
      %p362 = scmp.eq.s32.totalorder %s36, 3
      %p363 = por %p361, %p362
      %p365 = scmp.ne.s32.totalorder %s348, %s364
      %p366 = scmp.eq.s32.totalorder %s36, 0
      %p367 = por %p365, %p366
      %p368 = scmp.le.s32.totalorder 1, %s30
      %p369 = scmp.lt.s32.totalorder %s30, 5
      %p370 = pnand %p368, %p369
      %p371 = pneg %p370
      // Predicated region
      $region9: #{tpu_custom_call.1} parent=5 // pred_check
        _
      $region10: #{tpu_custom_call.1} parent=5 // pred_check_branch
        %373 = sbr.rel (%p370) target = $region12
      $region11: #{tpu_custom_call.1} parent=5 // pred_region
        %s374 = ssub.s32 %s30, 1
        // Predicated region
        $region13: #{tpu_custom_call.1} parent=11 // pred_check
          %p375 = pneg %p143
        $region14: #{tpu_custom_call.1} parent=11 // pred_check_branch
          %377 = sbr.rel (%p375) target = $region16
        $region15: #{tpu_custom_call.1} parent=11 // pred_region
          %379 = vsyncadd [#allocation13], 0
          %s380 = sshll.u32 %s3, 4
          %s381 = int_to_ptr.hbm [resolvable:$true] %s380
          %s382 = sshll.u32 [#allocation12], 4
          %s383 = int_to_ptr.vmem [resolvable:$true] %s382
          %388 = dma.hbm_to_vmem [thread:$0]  %s381, 1024, %s383, [#allocation13], 64, 64, 4
        $region16: #{tpu_custom_call.1} parent=11 // pred_fallthru
          _
        // Predicated region
        $region17: #{tpu_custom_call.1} parent=11 // pred_check
          %p389 = pneg %p164
        $region18: #{tpu_custom_call.1} parent=11 // pred_check_branch
          %391 = sbr.rel (%p389) target = $region20
        $region19: #{tpu_custom_call.1} parent=11 // pred_region
          _
        $region20: #{tpu_custom_call.1} parent=11 // pred_fallthru
          _
        // Predicated region
        $region21: #{tpu_custom_call.1} parent=11 // pred_check
          %p392 = pneg %p185
        $region22: #{tpu_custom_call.1} parent=11 // pred_check_branch
          %394 = sbr.rel (%p392) target = $region24
        $region23: #{tpu_custom_call.1} parent=11 // pred_region
          %396 = vsyncadd [#allocation13], 0
          %s397 = sshll.u32 %s5, 4
          %s398 = int_to_ptr.hbm [resolvable:$true] %s397
          %s399 = sshll.u32 [#allocation14], 4
          %s400 = int_to_ptr.vmem [resolvable:$true] %s399
          %405 = dma.hbm_to_vmem [thread:$0]  %s398, 1024, %s400, [#allocation13], 64, 64, 4
        $region24: #{tpu_custom_call.1} parent=11 // pred_fallthru
          _
        // Predicated region
        $region25: #{tpu_custom_call.1} parent=11 // pred_check
          %p406 = pneg %p206
        $region26: #{tpu_custom_call.1} parent=11 // pred_check_branch
          %408 = sbr.rel (%p406) target = $region28
        $region27: #{tpu_custom_call.1} parent=11 // pred_region
          _
        $region28: #{tpu_custom_call.1} parent=11 // pred_fallthru
          _
        // Predicated region
        $region29: #{tpu_custom_call.1} parent=11 // pred_check
          %p409 = pneg %p227
        $region30: #{tpu_custom_call.1} parent=11 // pred_check_branch
          %411 = sbr.rel (%p409) target = $region32
        $region31: #{tpu_custom_call.1} parent=11 // pred_region
          %413 = vsyncadd [#allocation16], 0
          %s414 = sshll.u32 %s7, 4
          %s415 = int_to_ptr.hbm [resolvable:$true] %s414
          %s416 = sshll.u32 [#allocation15], 4
          %s417 = int_to_ptr.vmem [resolvable:$true] %s416
          %422 = dma.hbm_to_vmem [thread:$0]  %s415, 1024, %s417, [#allocation16], 64, 64, 4
        $region32: #{tpu_custom_call.1} parent=11 // pred_fallthru
          _
        // Predicated region
        $region33: #{tpu_custom_call.1} parent=11 // pred_check
          %p423 = pneg %p248
        $region34: #{tpu_custom_call.1} parent=11 // pred_check_branch
          %425 = sbr.rel (%p423) target = $region36
        $region35: #{tpu_custom_call.1} parent=11 // pred_region
          _
        $region36: #{tpu_custom_call.1} parent=11 // pred_fallthru
          _
        // Predicated region
        $region37: #{tpu_custom_call.1} parent=11 // pred_check
          %p426 = pneg %p269
        $region38: #{tpu_custom_call.1} parent=11 // pred_check_branch
          %428 = sbr.rel (%p426) target = $region40
        $region39: #{tpu_custom_call.1} parent=11 // pred_region
          %430 = vsyncadd [#allocation16], 0
          %s431 = sshll.u32 %s9, 4
          %s432 = int_to_ptr.hbm [resolvable:$true] %s431
          %s433 = sshll.u32 [#allocation17], 4
          %s434 = int_to_ptr.vmem [resolvable:$true] %s433
          %439 = dma.hbm_to_vmem [thread:$0]  %s432, 1024, %s434, [#allocation16], 64, 64, 4
        $region40: #{tpu_custom_call.1} parent=11 // pred_fallthru
          _
        // Predicated region
        $region41: #{tpu_custom_call.1} parent=11 // pred_check
          %p440 = pneg %p290
        $region42: #{tpu_custom_call.1} parent=11 // pred_check_branch
          %442 = sbr.rel (%p440) target = $region44
        $region43: #{tpu_custom_call.1} parent=11 // pred_region
          _
        $region44: #{tpu_custom_call.1} parent=11 // pred_fallthru
          _
        // Predicated region
        $region45: #{tpu_custom_call.1} parent=11 // pred_check
          %p443 = pneg %p311
        $region46: #{tpu_custom_call.1} parent=11 // pred_check_branch
          %445 = sbr.rel (%p443) target = $region48
        $region47: #{tpu_custom_call.1} parent=11 // pred_region
          _
        $region48: #{tpu_custom_call.1} parent=11 // pred_fallthru
          _
        // Predicated region
        $region49: #{tpu_custom_call.1} parent=11 // pred_check
          %p446 = pneg %p332
        $region50: #{tpu_custom_call.1} parent=11 // pred_check_branch
          %448 = sbr.rel (%p446) target = $region52
        $region51: #{tpu_custom_call.1} parent=11 // pred_region
          _
        $region52: #{tpu_custom_call.1} parent=11 // pred_fallthru
          _
      $region12: #{tpu_custom_call.1} parent=5 // pred_fallthru
        _
      %p449 = scmp.lt.s32.totalorder %s30, 4
      // Predicated region
      $region53: #{tpu_custom_call.1} parent=5 // pred_check
        %p450 = pneg %p449
      $region54: #{tpu_custom_call.1} parent=5 // pred_check_branch
        %452 = sbr.rel (%p450) target = $region56
      $region55: #{tpu_custom_call.1} parent=5 // pred_region
        // Predicated region
        $region57: #{tpu_custom_call.1} parent=55 // pred_check
          %p453 = pneg %p64
        $region58: #{tpu_custom_call.1} parent=55 // pred_check_branch
          %455 = sbr.rel (%p453) target = $region60
        $region59: #{tpu_custom_call.1} parent=55 // pred_region
          %s456 = sand.u32 %s54, 1
          %s457 = scalar_lea.sflag [#allocation7], %s456
          %s458 = sand.u32 %s54, 1
          %s459 = smul.addr %s458, 128
          %s460 = scalar_lea.vmem [#allocation6], %s459
          %s461 = smul.u32 16, %s38
          %463 = vsyncadd %s457, 0
          %s464 = smul.addr %s37, 32
          %s465 = sadd.s32 %s461, %s464
          %s466 = smul.addr %s465, 8
          %s467 = scalar_lea.hbm %s0, %s466
          %s468 = sshll.u32 %s467, 4
          %s469 = int_to_ptr.hbm [resolvable:$true] %s468
          %s470 = sshll.u32 %s460, 4
          %s471 = int_to_ptr.vmem [resolvable:$true] %s470
          %476 = dma.hbm_to_vmem [thread:$0]  %s469, 2048, %s471, %s457, 128, 128, 8
        $region60: #{tpu_custom_call.1} parent=55 // pred_fallthru
          _
        // Predicated region
        $region61: #{tpu_custom_call.1} parent=55 // pred_check
          %p477 = pneg %p90
        $region62: #{tpu_custom_call.1} parent=55 // pred_check_branch
          %479 = sbr.rel (%p477) target = $region64
        $region63: #{tpu_custom_call.1} parent=55 // pred_region
          %s480 = sand.u32 %s30, 1
          %s481 = scalar_lea.sflag [#allocation10], %s480
          %s482 = sand.u32 %s80, 1
          %s483 = smul.addr %s482, 128
          %s484 = scalar_lea.vmem [#allocation9], %s483
          %486 = vsyncadd %s481, 0
          %s487 = smul.addr %s37, 16
          %s488 = smul.addr %s487, 8
          %s489 = scalar_lea.hbm %s1, %s488
          %s490 = sshll.u32 %s489, 4
          %s491 = int_to_ptr.hbm [resolvable:$true] %s490
          %s492 = sshll.u32 %s484, 4
          %s493 = int_to_ptr.vmem [resolvable:$true] %s492
          %498 = dma.hbm_to_vmem [thread:$0]  %s491, 2048, %s493, %s481, 128, 128, 8
        $region64: #{tpu_custom_call.1} parent=55 // pred_fallthru
          _
        // Predicated region
        $region65: #{tpu_custom_call.1} parent=55 // pred_check
          %p499 = pneg %p116
        $region66: #{tpu_custom_call.1} parent=55 // pred_check_branch
          %501 = sbr.rel (%p499) target = $region68
        $region67: #{tpu_custom_call.1} parent=55 // pred_region
          %s502 = sand.u32 %s30, 1
          %s503 = scalar_lea.sflag [#allocation10], %s502
          %s504 = sand.u32 %s106, 1
          %s505 = smul.addr %s504, 128
          %s506 = scalar_lea.vmem [#allocation11], %s505
          %508 = vsyncadd %s503, 0
          %s509 = smul.addr %s37, 16
          %s510 = smul.addr %s509, 8
          %s511 = scalar_lea.hbm %s2, %s510
          %s512 = sshll.u32 %s511, 4
          %s513 = int_to_ptr.hbm [resolvable:$true] %s512
          %s514 = sshll.u32 %s506, 4
          %s515 = int_to_ptr.vmem [resolvable:$true] %s514
          %520 = dma.hbm_to_vmem [thread:$0]  %s513, 2048, %s515, %s503, 128, 128, 8
        $region68: #{tpu_custom_call.1} parent=55 // pred_fallthru
          _
      $region56: #{tpu_custom_call.1} parent=5 // pred_fallthru
        _
      %p521 = scmp.le.s32.totalorder 1, %s30
      %p522 = scmp.lt.s32.totalorder %s30, 5
      %p523 = pnand %p521, %p522
      %p524 = pneg %p523
      // Predicated region
      $region69: #{tpu_custom_call.1} parent=5 // pred_check
        _
      $region70: #{tpu_custom_call.1} parent=5 // pred_check_branch
        %526 = sbr.rel (%p523) target = $region72
      $region71: #{tpu_custom_call.1} parent=5 // pred_region
        %s527 = ssub.s32 %s30, 1
        %s528 = sand.u32 %s57, 1
        %s529 = scalar_lea.sflag [#allocation7], %s528
        %s530 = sand.u32 %s57, 1
        %s531 = smul.addr %s530, 128
        %s532 = scalar_lea.vmem [#allocation6], %s531
        // Predicated region
        $region73: #{tpu_custom_call.1} parent=71 // pred_check
          %p533 = pneg %p70
        $region74: #{tpu_custom_call.1} parent=71 // pred_check_branch
          %535 = sbr.rel (%p533) target = $region76
        $region75: #{tpu_custom_call.1} parent=71 // pred_region
          %537 = dma.done %s529, 2048
        $region76: #{tpu_custom_call.1} parent=71 // pred_fallthru
          _
        %s538 = sand.u32 %s35, 1
        %s539 = scalar_lea.sflag [#allocation10], %s538
        %s540 = sand.u32 %s83, 1
        %s541 = smul.addr %s540, 128
        %s542 = scalar_lea.vmem [#allocation9], %s541
        // Predicated region
        $region77: #{tpu_custom_call.1} parent=71 // pred_check
          %p543 = pneg %p96
        $region78: #{tpu_custom_call.1} parent=71 // pred_check_branch
          %545 = sbr.rel (%p543) target = $region80
        $region79: #{tpu_custom_call.1} parent=71 // pred_region
          %547 = dma.done %s539, 2048
        $region80: #{tpu_custom_call.1} parent=71 // pred_fallthru
          _
        %s548 = sand.u32 %s35, 1
        %s549 = scalar_lea.sflag [#allocation10], %s548
        %s550 = sand.u32 %s109, 1
        %s551 = smul.addr %s550, 128
        %s552 = scalar_lea.vmem [#allocation11], %s551
        // Predicated region
        $region81: #{tpu_custom_call.1} parent=71 // pred_check
          %p553 = pneg %p122
        $region82: #{tpu_custom_call.1} parent=71 // pred_check_branch
          %555 = sbr.rel (%p553) target = $region84
        $region83: #{tpu_custom_call.1} parent=71 // pred_region
          %557 = dma.done %s549, 2048
        $region84: #{tpu_custom_call.1} parent=71 // pred_fallthru
          _
        // Predicated region
        $region85: #{tpu_custom_call.1} parent=71 // pred_check
          %p558 = pneg %p143
        $region86: #{tpu_custom_call.1} parent=71 // pred_check_branch
          %560 = sbr.rel (%p558) target = $region88
        $region87: #{tpu_custom_call.1} parent=71 // pred_region
          %562 = dma.done [#allocation13], 1024
        $region88: #{tpu_custom_call.1} parent=71 // pred_fallthru
          _
        // Predicated region
        $region89: #{tpu_custom_call.1} parent=71 // pred_check
          %p563 = pneg %p185
        $region90: #{tpu_custom_call.1} parent=71 // pred_check_branch
          %565 = sbr.rel (%p563) target = $region92
        $region91: #{tpu_custom_call.1} parent=71 // pred_region
          %567 = dma.done [#allocation13], 1024
        $region92: #{tpu_custom_call.1} parent=71 // pred_fallthru
          _
        // Predicated region
        $region93: #{tpu_custom_call.1} parent=71 // pred_check
          %p568 = pneg %p227
        $region94: #{tpu_custom_call.1} parent=71 // pred_check_branch
          %570 = sbr.rel (%p568) target = $region96
        $region95: #{tpu_custom_call.1} parent=71 // pred_region
          %572 = dma.done [#allocation16], 1024
        $region96: #{tpu_custom_call.1} parent=71 // pred_fallthru
          _
        // Predicated region
        $region97: #{tpu_custom_call.1} parent=71 // pred_check
          %p573 = pneg %p269
        $region98: #{tpu_custom_call.1} parent=71 // pred_check_branch
          %575 = sbr.rel (%p573) target = $region100
        $region99: #{tpu_custom_call.1} parent=71 // pred_region
          %577 = dma.done [#allocation16], 1024
        $region100: #{tpu_custom_call.1} parent=71 // pred_fallthru
          _
        %s578 = sand.u32 %s57, 1
        %s579 = scalar_lea.sflag [#allocation7], %s578
        %s580 = sand.u32 %s57, 1
        %s581 = smul.addr %s580, 128
        %s582 = scalar_lea.vmem [#allocation6], %s581
        %p583 = pneg %p70
        %p584 = pneg %p67
        %s585 = sand.u32 %s35, 1
        %s586 = scalar_lea.sflag [#allocation10], %s585
        %s587 = sand.u32 %s83, 1
        %s588 = smul.addr %s587, 128
        %s589 = scalar_lea.vmem [#allocation9], %s588
        %p590 = pneg %p96
        %p591 = pneg %p93
        %s592 = sand.u32 %s35, 1
        %s593 = scalar_lea.sflag [#allocation10], %s592
        %s594 = sand.u32 %s109, 1
        %s595 = smul.addr %s594, 128
        %s596 = scalar_lea.vmem [#allocation11], %s595
        %p597 = pneg %p122
        %p598 = pneg %p119
        %p599 = pneg %p143
        %p600 = pneg %p140
        %p601 = pneg %p164
        %p602 = pneg %p161
        %p603 = pneg %p185
        %p604 = pneg %p182
        %p605 = pneg %p206
        %p606 = pneg %p203
        %p607 = pneg %p227
        %p608 = pneg %p224
        %p609 = pneg %p248
        %p610 = pneg %p245
        %p611 = pneg %p269
        %p612 = pneg %p266
        %p613 = pneg %p290
        %p614 = pneg %p287
        %p615 = pneg %p311
        %p616 = pneg %p308
        %p617 = pneg %p332
        %p618 = pneg %p329
        %p619 = pneg %p360
        %p620 = pneg %p357
        %s621 = sand.u32 %s347, 1
        %s622 = scalar_lea.sflag [#allocation8], %s621
        %s623 = sand.u32 %s347, 1
        %s624 = smul.addr %s623, 128
        %s625 = scalar_lea.vmem [#allocation18], %s624
        %s626 = smul.u32 16, %s40
        %s627 = smul.u32 16, %s40
        %p628 = scmp.eq.s32.totalorder %s40, 0
        // Predicated region
        $region101: #{tpu_custom_call.1} parent=71 // pred_check
          %p629 = pneg %p628
        $region102: #{tpu_custom_call.1} parent=71 // pred_check_branch
          %631 = sbr.rel (%p629) target = $region104
        $region103: #{tpu_custom_call.1} parent=71 // pred_region
          %v632 = vld [vmem:[%s542] sm:$0xff]
          %v633 = vld [vmem:[%s542 + $0x8] sm:$0xff]
          %v634 = vld [vmem:[%s542 + $0x10] sm:$0xff]
          %v635 = vld [vmem:[%s542 + $0x18] sm:$0xff]
          %v636 = vld [vmem:[%s542 + $0x20] sm:$0xff]
          %v637 = vld [vmem:[%s542 + $0x28] sm:$0xff]
          %v638 = vld [vmem:[%s542 + $0x30] sm:$0xff]
          %v639 = vld [vmem:[%s542 + $0x38] sm:$0xff]
          %v640 = vld [vmem:[%s542 + $0x40] sm:$0xff]
          %v641 = vld [vmem:[%s542 + $0x48] sm:$0xff]
          %v642 = vld [vmem:[%s542 + $0x50] sm:$0xff]
          %v643 = vld [vmem:[%s542 + $0x58] sm:$0xff]
          %v644 = vld [vmem:[%s542 + $0x60] sm:$0xff]
          %v645 = vld [vmem:[%s542 + $0x68] sm:$0xff]
          %v646 = vld [vmem:[%s542 + $0x70] sm:$0xff]
          %v647 = vld [vmem:[%s542 + $0x78] sm:$0xff]
          %v648 = vpack.c.bf16 %v633, %v632
          %v649 = vpack.c.bf16 %v635, %v634
          %v650 = vpack.c.bf16 %v637, %v636
          %v651 = vpack.c.bf16 %v639, %v638
          %v652 = vpack.c.bf16 %v641, %v640
          %v653 = vpack.c.bf16 %v643, %v642
          %v654 = vpack.c.bf16 %v645, %v644
          %v655 = vpack.c.bf16 %v647, %v646
          %v656 = vld [vmem:[%s552] sm:$0xff]
          %v657 = vld [vmem:[%s552 + $0x8] sm:$0xff]
          %v658 = vld [vmem:[%s552 + $0x10] sm:$0xff]
          %v659 = vld [vmem:[%s552 + $0x18] sm:$0xff]
          %v660 = vld [vmem:[%s552 + $0x20] sm:$0xff]
          %v661 = vld [vmem:[%s552 + $0x28] sm:$0xff]
          %v662 = vld [vmem:[%s552 + $0x30] sm:$0xff]
          %v663 = vld [vmem:[%s552 + $0x38] sm:$0xff]
          %v664 = vld [vmem:[%s552 + $0x40] sm:$0xff]
          %v665 = vld [vmem:[%s552 + $0x48] sm:$0xff]
          %v666 = vld [vmem:[%s552 + $0x50] sm:$0xff]
          %v667 = vld [vmem:[%s552 + $0x58] sm:$0xff]
          %v668 = vld [vmem:[%s552 + $0x60] sm:$0xff]
          %v669 = vld [vmem:[%s552 + $0x68] sm:$0xff]
          %v670 = vld [vmem:[%s552 + $0x70] sm:$0xff]
          %v671 = vld [vmem:[%s552 + $0x78] sm:$0xff]
          %v672 = vpack.c.bf16 %v657, %v656
          %v673 = vpack.c.bf16 %v659, %v658
          %v674 = vpack.c.bf16 %v661, %v660
          %v675 = vpack.c.bf16 %v663, %v662
          %v676 = vpack.c.bf16 %v665, %v664
          %v677 = vpack.c.bf16 %v667, %v666
          %v678 = vpack.c.bf16 %v669, %v668
          %v679 = vpack.c.bf16 %v671, %v670
          %v680 = vld [vmem:[#allocation14] sm:$0xf]
          %v681 = vld [vmem:[#allocation14 + $0x4] sm:$0xf]
          %v682 = vld [vmem:[#allocation14 + $0x8] sm:$0xf]
          %v683 = vld [vmem:[#allocation14 + $0xc] sm:$0xf]
          %v684 = vld [vmem:[#allocation14 + $0x10] sm:$0xf]
          %v685 = vld [vmem:[#allocation14 + $0x14] sm:$0xf]
          %v686 = vld [vmem:[#allocation14 + $0x18] sm:$0xf]
          %v687 = vld [vmem:[#allocation14 + $0x1c] sm:$0xf]
          %v688 = vld [vmem:[#allocation14 + $0x20] sm:$0xf]
          %v689 = vld [vmem:[#allocation14 + $0x24] sm:$0xf]
          %v690 = vld [vmem:[#allocation14 + $0x28] sm:$0xf]
          %v691 = vld [vmem:[#allocation14 + $0x2c] sm:$0xf]
          %v692 = vld [vmem:[#allocation14 + $0x30] sm:$0xf]
          %v693 = vld [vmem:[#allocation14 + $0x34] sm:$0xf]
          %v694 = vld [vmem:[#allocation14 + $0x38] sm:$0xf]
          %v695 = vld [vmem:[#allocation14 + $0x3c] sm:$0xf]
          %v696 = vld [vmem:[%s6] sm:$0x1]
          %v698 = vperm.slane %v696, 0
          %v716 = vunpack.c.l.b16 %v680
          %v717 = vunpack.c.l.b16 %v681
          %v718 = vunpack.c.l.b16 %v682
          %v719 = vunpack.c.l.b16 %v683
          %v720 = vunpack.c.l.b16 %v684
          %v721 = vunpack.c.l.b16 %v685
          %v722 = vunpack.c.l.b16 %v686
          %v723 = vunpack.c.l.b16 %v687
          %v724 = vunpack.c.l.b16 %v688
          %v725 = vunpack.c.l.b16 %v689
          %v726 = vunpack.c.l.b16 %v690
          %v727 = vunpack.c.l.b16 %v691
          %v728 = vunpack.c.l.b16 %v692
          %v729 = vunpack.c.l.b16 %v693
          %v730 = vunpack.c.l.b16 %v694
          %v731 = vunpack.c.l.b16 %v695
          %v732 = vpack.c.b16 %v717, %v716
          %v733 = vpack.c.b16 %v719, %v718
          %v734 = vpack.c.b16 %v721, %v720
          %v735 = vpack.c.b16 %v723, %v722
          %v736 = vpack.c.b16 %v725, %v724
          %v737 = vpack.c.b16 %v727, %v726
          %v738 = vpack.c.b16 %v729, %v728
          %v739 = vpack.c.b16 %v731, %v730
          %748 = vmatpush.bf16.msra.mxu0 %v739
          %749 = vmatpush.bf16.msra.mxu0 %v738
          %750 = vmatpush.bf16.msra.mxu0 %v737
          %751 = vmatpush.bf16.msra.mxu0 %v736
          %752 = vmatpush.bf16.msra.mxu0 %v735
          %753 = vmatpush.bf16.msra.mxu0 %v734
          %754 = vmatpush.bf16.msra.mxu0 %v733
          %755 = vmatpush.bf16.msra.mxu0 %v732
          %756 = vmatmul.bf16.gmra.mxu0 %v648
          %v757 = vpop.f32.mrf.mxu0
          %v758 = vadd.f32 %v698, %v757
          %v759 = vpop.f32.mrf.mxu0
          %v760 = vadd.f32 %v698, %v759
          %761 = vmatmul.bf16.gmra.mxu0 %v649
          %v762 = vpop.f32.mrf.mxu0
          %v763 = vadd.f32 %v698, %v762
          %v764 = vpop.f32.mrf.mxu0
          %v765 = vadd.f32 %v698, %v764
          %766 = vmatmul.bf16.gmra.mxu0 %v650
          %v767 = vpop.f32.mrf.mxu0
          %v768 = vadd.f32 %v698, %v767
          %v769 = vpop.f32.mrf.mxu0
          %v770 = vadd.f32 %v698, %v769
          %771 = vmatmul.bf16.gmra.mxu0 %v651
          %v772 = vpop.f32.mrf.mxu0
          %v773 = vadd.f32 %v698, %v772
          %v774 = vpop.f32.mrf.mxu0
          %v775 = vadd.f32 %v698, %v774
          %776 = vmatmul.bf16.gmra.mxu0 %v652
          %v777 = vpop.f32.mrf.mxu0
          %v778 = vadd.f32 %v698, %v777
          %v779 = vpop.f32.mrf.mxu0
          %v780 = vadd.f32 %v698, %v779
          %781 = vmatmul.bf16.gmra.mxu0 %v653
          %v782 = vpop.f32.mrf.mxu0
          %v783 = vadd.f32 %v698, %v782
          %v784 = vpop.f32.mrf.mxu0
          %v785 = vadd.f32 %v698, %v784
          %786 = vmatmul.bf16.gmra.mxu0 %v654
          %v787 = vpop.f32.mrf.mxu0
          %v788 = vadd.f32 %v698, %v787
          %v789 = vpop.f32.mrf.mxu0
          %v790 = vadd.f32 %v698, %v789
          %791 = vmatmul.bf16.gmra.mxu0 %v655
          %v792 = vpop.f32.mrf.mxu0
          %v793 = vadd.f32 %v698, %v792
          %v794 = vpop.f32.mrf.mxu0
          %v795 = vadd.f32 %v698, %v794
          %796 = vdwg.mxu0
          %v797 = vpack.c.bf16 %v758, %v758
          %v798 = vpack.c.bf16 %v760, %v760
          %v799 = vpack.c.bf16 %v763, %v763
          %v800 = vpack.c.bf16 %v765, %v765
          %v801 = vpack.c.bf16 %v768, %v768
          %v802 = vpack.c.bf16 %v770, %v770
          %v803 = vpack.c.bf16 %v773, %v773
          %v804 = vpack.c.bf16 %v775, %v775
          %v805 = vpack.c.bf16 %v778, %v778
          %v806 = vpack.c.bf16 %v780, %v780
          %v807 = vpack.c.bf16 %v783, %v783
          %v808 = vpack.c.bf16 %v785, %v785
          %v809 = vpack.c.bf16 %v788, %v788
          %v810 = vpack.c.bf16 %v790, %v790
          %v811 = vpack.c.bf16 %v793, %v793
          %v812 = vpack.c.bf16 %v795, %v795
          %813 = vst [vmem:[#allocation3] sm:$0xf] %v797
          %814 = vst [vmem:[#allocation3 + $0x4] sm:$0xf] %v798
          %815 = vst [vmem:[#allocation3 + $0x8] sm:$0xf] %v799
          %816 = vst [vmem:[#allocation3 + $0xc] sm:$0xf] %v800
          %817 = vst [vmem:[#allocation3 + $0x10] sm:$0xf] %v801
          %818 = vst [vmem:[#allocation3 + $0x14] sm:$0xf] %v802
          %819 = vst [vmem:[#allocation3 + $0x18] sm:$0xf] %v803
          %820 = vst [vmem:[#allocation3 + $0x1c] sm:$0xf] %v804
          %821 = vst [vmem:[#allocation3 + $0x20] sm:$0xf] %v805
          %822 = vst [vmem:[#allocation3 + $0x24] sm:$0xf] %v806
          %823 = vst [vmem:[#allocation3 + $0x28] sm:$0xf] %v807
          %824 = vst [vmem:[#allocation3 + $0x2c] sm:$0xf] %v808
          %825 = vst [vmem:[#allocation3 + $0x30] sm:$0xf] %v809
          %826 = vst [vmem:[#allocation3 + $0x34] sm:$0xf] %v810
          %827 = vst [vmem:[#allocation3 + $0x38] sm:$0xf] %v811
          %828 = vst [vmem:[#allocation3 + $0x3c] sm:$0xf] %v812
          %v829 = vld [vmem:[#allocation15] sm:$0xf]
          %v830 = vld [vmem:[#allocation15 + $0x4] sm:$0xf]
          %v831 = vld [vmem:[#allocation15 + $0x8] sm:$0xf]
          %v832 = vld [vmem:[#allocation15 + $0xc] sm:$0xf]
          %v833 = vld [vmem:[#allocation15 + $0x10] sm:$0xf]
          %v834 = vld [vmem:[#allocation15 + $0x14] sm:$0xf]
          %v835 = vld [vmem:[#allocation15 + $0x18] sm:$0xf]
          %v836 = vld [vmem:[#allocation15 + $0x1c] sm:$0xf]
          %v837 = vld [vmem:[#allocation15 + $0x20] sm:$0xf]
          %v838 = vld [vmem:[#allocation15 + $0x24] sm:$0xf]
          %v839 = vld [vmem:[#allocation15 + $0x28] sm:$0xf]
          %v840 = vld [vmem:[#allocation15 + $0x2c] sm:$0xf]
          %v841 = vld [vmem:[#allocation15 + $0x30] sm:$0xf]
          %v842 = vld [vmem:[#allocation15 + $0x34] sm:$0xf]
          %v843 = vld [vmem:[#allocation15 + $0x38] sm:$0xf]
          %v844 = vld [vmem:[#allocation15 + $0x3c] sm:$0xf]
          %v845 = vld [vmem:[%s8] sm:$0x1]
          %v847 = vperm.slane %v845, 0
          %v865 = vunpack.c.l.b16 %v829
          %v866 = vunpack.c.l.b16 %v830
          %v867 = vunpack.c.l.b16 %v831
          %v868 = vunpack.c.l.b16 %v832
          %v869 = vunpack.c.l.b16 %v833
          %v870 = vunpack.c.l.b16 %v834
          %v871 = vunpack.c.l.b16 %v835
          %v872 = vunpack.c.l.b16 %v836
          %v873 = vunpack.c.l.b16 %v837
          %v874 = vunpack.c.l.b16 %v838
          %v875 = vunpack.c.l.b16 %v839
          %v876 = vunpack.c.l.b16 %v840
          %v877 = vunpack.c.l.b16 %v841
          %v878 = vunpack.c.l.b16 %v842
          %v879 = vunpack.c.l.b16 %v843
          %v880 = vunpack.c.l.b16 %v844
          %v881 = vpack.c.b16 %v866, %v865
          %v882 = vpack.c.b16 %v868, %v867
          %v883 = vpack.c.b16 %v870, %v869
          %v884 = vpack.c.b16 %v872, %v871
          %v885 = vpack.c.b16 %v874, %v873
          %v886 = vpack.c.b16 %v876, %v875
          %v887 = vpack.c.b16 %v878, %v877
          %v888 = vpack.c.b16 %v880, %v879
          %897 = vmatpush.bf16.msra.mxu0 %v888
          %898 = vmatpush.bf16.msra.mxu0 %v887
          %899 = vmatpush.bf16.msra.mxu0 %v886
          %900 = vmatpush.bf16.msra.mxu0 %v885
          %901 = vmatpush.bf16.msra.mxu0 %v884
          %902 = vmatpush.bf16.msra.mxu0 %v883
          %903 = vmatpush.bf16.msra.mxu0 %v882
          %904 = vmatpush.bf16.msra.mxu0 %v881
          %905 = vmatmul.bf16.gmra.mxu0 %v672
          %v906 = vpop.f32.mrf.mxu0
          %v907 = vadd.f32 %v847, %v906
          %v908 = vpop.f32.mrf.mxu0
          %v909 = vadd.f32 %v847, %v908
          %910 = vmatmul.bf16.gmra.mxu0 %v673
          %v911 = vpop.f32.mrf.mxu0
          %v912 = vadd.f32 %v847, %v911
          %v913 = vpop.f32.mrf.mxu0
          %v914 = vadd.f32 %v847, %v913
          %915 = vmatmul.bf16.gmra.mxu0 %v674
          %v916 = vpop.f32.mrf.mxu0
          %v917 = vadd.f32 %v847, %v916
          %v918 = vpop.f32.mrf.mxu0
          %v919 = vadd.f32 %v847, %v918
          %920 = vmatmul.bf16.gmra.mxu0 %v675
          %v921 = vpop.f32.mrf.mxu0
          %v922 = vadd.f32 %v847, %v921
          %v923 = vpop.f32.mrf.mxu0
          %v924 = vadd.f32 %v847, %v923
          %925 = vmatmul.bf16.gmra.mxu0 %v676
          %v926 = vpop.f32.mrf.mxu0
          %v927 = vadd.f32 %v847, %v926
          %v928 = vpop.f32.mrf.mxu0
          %v929 = vadd.f32 %v847, %v928
          %930 = vmatmul.bf16.gmra.mxu0 %v677
          %v931 = vpop.f32.mrf.mxu0
          %v932 = vadd.f32 %v847, %v931
          %v933 = vpop.f32.mrf.mxu0
          %v934 = vadd.f32 %v847, %v933
          %935 = vmatmul.bf16.gmra.mxu0 %v678
          %v936 = vpop.f32.mrf.mxu0
          %v937 = vadd.f32 %v847, %v936
          %v938 = vpop.f32.mrf.mxu0
          %v939 = vadd.f32 %v847, %v938
          %940 = vmatmul.bf16.gmra.mxu0 %v679
          %v941 = vpop.f32.mrf.mxu0
          %v942 = vadd.f32 %v847, %v941
          %v943 = vpop.f32.mrf.mxu0
          %v944 = vadd.f32 %v847, %v943
          %945 = vdwg.mxu0
          %v946 = vpack.c.bf16 %v907, %v907
          %v947 = vpack.c.bf16 %v909, %v909
          %v948 = vpack.c.bf16 %v912, %v912
          %v949 = vpack.c.bf16 %v914, %v914
          %v950 = vpack.c.bf16 %v917, %v917
          %v951 = vpack.c.bf16 %v919, %v919
          %v952 = vpack.c.bf16 %v922, %v922
          %v953 = vpack.c.bf16 %v924, %v924
          %v954 = vpack.c.bf16 %v927, %v927
          %v955 = vpack.c.bf16 %v929, %v929
          %v956 = vpack.c.bf16 %v932, %v932
          %v957 = vpack.c.bf16 %v934, %v934
          %v958 = vpack.c.bf16 %v937, %v937
          %v959 = vpack.c.bf16 %v939, %v939
          %v960 = vpack.c.bf16 %v942, %v942
          %v961 = vpack.c.bf16 %v944, %v944
          %962 = vst [vmem:[#allocation4] sm:$0xf] %v946
          %963 = vst [vmem:[#allocation4 + $0x4] sm:$0xf] %v947
          %964 = vst [vmem:[#allocation4 + $0x8] sm:$0xf] %v948
          %965 = vst [vmem:[#allocation4 + $0xc] sm:$0xf] %v949
          %966 = vst [vmem:[#allocation4 + $0x10] sm:$0xf] %v950
          %967 = vst [vmem:[#allocation4 + $0x14] sm:$0xf] %v951
          %968 = vst [vmem:[#allocation4 + $0x18] sm:$0xf] %v952
          %969 = vst [vmem:[#allocation4 + $0x1c] sm:$0xf] %v953
          %970 = vst [vmem:[#allocation4 + $0x20] sm:$0xf] %v954
          %971 = vst [vmem:[#allocation4 + $0x24] sm:$0xf] %v955
          %972 = vst [vmem:[#allocation4 + $0x28] sm:$0xf] %v956
          %973 = vst [vmem:[#allocation4 + $0x2c] sm:$0xf] %v957
          %974 = vst [vmem:[#allocation4 + $0x30] sm:$0xf] %v958
          %975 = vst [vmem:[#allocation4 + $0x34] sm:$0xf] %v959
          %976 = vst [vmem:[#allocation4 + $0x38] sm:$0xf] %v960
          %977 = vst [vmem:[#allocation4 + $0x3c] sm:$0xf] %v961
        $region104: #{tpu_custom_call.1} parent=71 // pred_fallthru
          _
        %v978 = vld [vmem:[%s532] sm:$0xff]
        %v979 = vld [vmem:[%s532 + $0x8] sm:$0xff]
        %v980 = vld [vmem:[%s532 + $0x10] sm:$0xff]
        %v981 = vld [vmem:[%s532 + $0x18] sm:$0xff]
        %v982 = vld [vmem:[%s532 + $0x20] sm:$0xff]
        %v983 = vld [vmem:[%s532 + $0x28] sm:$0xff]
        %v984 = vld [vmem:[%s532 + $0x30] sm:$0xff]
        %v985 = vld [vmem:[%s532 + $0x38] sm:$0xff]
        %v986 = vld [vmem:[%s532 + $0x40] sm:$0xff]
        %v987 = vld [vmem:[%s532 + $0x48] sm:$0xff]
        %v988 = vld [vmem:[%s532 + $0x50] sm:$0xff]
        %v989 = vld [vmem:[%s532 + $0x58] sm:$0xff]
        %v990 = vld [vmem:[%s532 + $0x60] sm:$0xff]
        %v991 = vld [vmem:[%s532 + $0x68] sm:$0xff]
        %v992 = vld [vmem:[%s532 + $0x70] sm:$0xff]
        %v993 = vld [vmem:[%s532 + $0x78] sm:$0xff]
        %v994 = vpack.c.bf16 %v979, %v978
        %v995 = vpack.c.bf16 %v981, %v980
        %v996 = vpack.c.bf16 %v983, %v982
        %v997 = vpack.c.bf16 %v985, %v984
        %v998 = vpack.c.bf16 %v987, %v986
        %v999 = vpack.c.bf16 %v989, %v988
        %v1000 = vpack.c.bf16 %v991, %v990
        %v1001 = vpack.c.bf16 %v993, %v992
        %v1002 = vld [vmem:[#allocation12] sm:$0xf]
        %v1003 = vld [vmem:[#allocation12 + $0x4] sm:$0xf]
        %v1004 = vld [vmem:[#allocation12 + $0x8] sm:$0xf]
        %v1005 = vld [vmem:[#allocation12 + $0xc] sm:$0xf]
        %v1006 = vld [vmem:[#allocation12 + $0x10] sm:$0xf]
        %v1007 = vld [vmem:[#allocation12 + $0x14] sm:$0xf]
        %v1008 = vld [vmem:[#allocation12 + $0x18] sm:$0xf]
        %v1009 = vld [vmem:[#allocation12 + $0x1c] sm:$0xf]
        %v1010 = vld [vmem:[#allocation12 + $0x20] sm:$0xf]
        %v1011 = vld [vmem:[#allocation12 + $0x24] sm:$0xf]
        %v1012 = vld [vmem:[#allocation12 + $0x28] sm:$0xf]
        %v1013 = vld [vmem:[#allocation12 + $0x2c] sm:$0xf]
        %v1014 = vld [vmem:[#allocation12 + $0x30] sm:$0xf]
        %v1015 = vld [vmem:[#allocation12 + $0x34] sm:$0xf]
        %v1016 = vld [vmem:[#allocation12 + $0x38] sm:$0xf]
        %v1017 = vld [vmem:[#allocation12 + $0x3c] sm:$0xf]
        %v1018 = vld [vmem:[%s4] sm:$0x1]
        %v1020 = vperm.slane %v1018, 0
        %v1038 = vunpack.c.l.b16 %v1002
        %v1039 = vunpack.c.l.b16 %v1003
        %v1040 = vunpack.c.l.b16 %v1004
        %v1041 = vunpack.c.l.b16 %v1005
        %v1042 = vunpack.c.l.b16 %v1006
        %v1043 = vunpack.c.l.b16 %v1007
        %v1044 = vunpack.c.l.b16 %v1008
        %v1045 = vunpack.c.l.b16 %v1009
        %v1046 = vunpack.c.l.b16 %v1010
        %v1047 = vunpack.c.l.b16 %v1011
        %v1048 = vunpack.c.l.b16 %v1012
        %v1049 = vunpack.c.l.b16 %v1013
        %v1050 = vunpack.c.l.b16 %v1014
        %v1051 = vunpack.c.l.b16 %v1015
        %v1052 = vunpack.c.l.b16 %v1016
        %v1053 = vunpack.c.l.b16 %v1017
        %v1054 = vpack.c.b16 %v1039, %v1038
        %v1055 = vpack.c.b16 %v1041, %v1040
        %v1056 = vpack.c.b16 %v1043, %v1042
        %v1057 = vpack.c.b16 %v1045, %v1044
        %v1058 = vpack.c.b16 %v1047, %v1046
        %v1059 = vpack.c.b16 %v1049, %v1048
        %v1060 = vpack.c.b16 %v1051, %v1050
        %v1061 = vpack.c.b16 %v1053, %v1052
        %1070 = vmatpush.bf16.msra.mxu0 %v1061
        %1071 = vmatpush.bf16.msra.mxu0 %v1060
        %1072 = vmatpush.bf16.msra.mxu0 %v1059
        %1073 = vmatpush.bf16.msra.mxu0 %v1058
        %1074 = vmatpush.bf16.msra.mxu0 %v1057
        %1075 = vmatpush.bf16.msra.mxu0 %v1056
        %1076 = vmatpush.bf16.msra.mxu0 %v1055
        %1077 = vmatpush.bf16.msra.mxu0 %v1054
        %1078 = vmatmul.bf16.gmra.mxu0 %v994
        %v1079 = vpop.f32.mrf.mxu0
        %v1080 = vadd.f32 %v1020, %v1079
        %v1081 = vpop.f32.mrf.mxu0
        %v1082 = vadd.f32 %v1020, %v1081
        %1083 = vmatmul.bf16.gmra.mxu0 %v995
        %v1084 = vpop.f32.mrf.mxu0
        %v1085 = vadd.f32 %v1020, %v1084
        %v1086 = vpop.f32.mrf.mxu0
        %v1087 = vadd.f32 %v1020, %v1086
        %1088 = vmatmul.bf16.gmra.mxu0 %v996
        %v1089 = vpop.f32.mrf.mxu0
        %v1090 = vadd.f32 %v1020, %v1089
        %v1091 = vpop.f32.mrf.mxu0
        %v1092 = vadd.f32 %v1020, %v1091
        %1093 = vmatmul.bf16.gmra.mxu0 %v997
        %v1094 = vpop.f32.mrf.mxu0
        %v1095 = vadd.f32 %v1020, %v1094
        %v1096 = vpop.f32.mrf.mxu0
        %v1097 = vadd.f32 %v1020, %v1096
        %1098 = vmatmul.bf16.gmra.mxu0 %v998
        %v1099 = vpop.f32.mrf.mxu0
        %v1100 = vadd.f32 %v1020, %v1099
        %v1101 = vpop.f32.mrf.mxu0
        %v1102 = vadd.f32 %v1020, %v1101
        %1103 = vmatmul.bf16.gmra.mxu0 %v999
        %v1104 = vpop.f32.mrf.mxu0
        %v1105 = vadd.f32 %v1020, %v1104
        %v1106 = vpop.f32.mrf.mxu0
        %v1107 = vadd.f32 %v1020, %v1106
        %1108 = vmatmul.bf16.gmra.mxu0 %v1000
        %v1109 = vpop.f32.mrf.mxu0
        %v1110 = vadd.f32 %v1020, %v1109
        %v1111 = vpop.f32.mrf.mxu0
        %v1112 = vadd.f32 %v1020, %v1111
        %1113 = vmatmul.bf16.gmra.mxu0 %v1001
        %v1114 = vpop.f32.mrf.mxu0
        %v1115 = vadd.f32 %v1020, %v1114
        %v1116 = vpop.f32.mrf.mxu0
        %v1117 = vadd.f32 %v1020, %v1116
        %1118 = vdwg.mxu0
        %v1119 = vpack.c.bf16 %v1080, %v1080
        %v1120 = vpack.c.bf16 %v1082, %v1082
        %v1121 = vpack.c.bf16 %v1085, %v1085
        %v1122 = vpack.c.bf16 %v1087, %v1087
        %v1123 = vpack.c.bf16 %v1090, %v1090
        %v1124 = vpack.c.bf16 %v1092, %v1092
        %v1125 = vpack.c.bf16 %v1095, %v1095
        %v1126 = vpack.c.bf16 %v1097, %v1097
        %v1127 = vpack.c.bf16 %v1100, %v1100
        %v1128 = vpack.c.bf16 %v1102, %v1102
        %v1129 = vpack.c.bf16 %v1105, %v1105
        %v1130 = vpack.c.bf16 %v1107, %v1107
        %v1131 = vpack.c.bf16 %v1110, %v1110
        %v1132 = vpack.c.bf16 %v1112, %v1112
        %v1133 = vpack.c.bf16 %v1115, %v1115
        %v1134 = vpack.c.bf16 %v1117, %v1117
        %1135 = vst [vmem:[#allocation2] sm:$0xf] %v1119
        %1136 = vst [vmem:[#allocation2 + $0x4] sm:$0xf] %v1120
        %1137 = vst [vmem:[#allocation2 + $0x8] sm:$0xf] %v1121
        %1138 = vst [vmem:[#allocation2 + $0xc] sm:$0xf] %v1122
        %1139 = vst [vmem:[#allocation2 + $0x10] sm:$0xf] %v1123
        %1140 = vst [vmem:[#allocation2 + $0x14] sm:$0xf] %v1124
        %1141 = vst [vmem:[#allocation2 + $0x18] sm:$0xf] %v1125
        %1142 = vst [vmem:[#allocation2 + $0x1c] sm:$0xf] %v1126
        %1143 = vst [vmem:[#allocation2 + $0x20] sm:$0xf] %v1127
        %1144 = vst [vmem:[#allocation2 + $0x24] sm:$0xf] %v1128
        %1145 = vst [vmem:[#allocation2 + $0x28] sm:$0xf] %v1129
        %1146 = vst [vmem:[#allocation2 + $0x2c] sm:$0xf] %v1130
        %1147 = vst [vmem:[#allocation2 + $0x30] sm:$0xf] %v1131
        %1148 = vst [vmem:[#allocation2 + $0x34] sm:$0xf] %v1132
        %1149 = vst [vmem:[#allocation2 + $0x38] sm:$0xf] %v1133
        %1150 = vst [vmem:[#allocation2 + $0x3c] sm:$0xf] %v1134
        %v1151 = vld [vmem:[#allocation2] sm:$0xf]
        %v1152 = vld [vmem:[#allocation2 + $0x4] sm:$0xf]
        %v1153 = vld [vmem:[#allocation2 + $0x8] sm:$0xf]
        %v1154 = vld [vmem:[#allocation2 + $0xc] sm:$0xf]
        %v1155 = vld [vmem:[#allocation2 + $0x10] sm:$0xf]
        %v1156 = vld [vmem:[#allocation2 + $0x14] sm:$0xf]
        %v1157 = vld [vmem:[#allocation2 + $0x18] sm:$0xf]
        %v1158 = vld [vmem:[#allocation2 + $0x1c] sm:$0xf]
        %v1159 = vld [vmem:[#allocation2 + $0x20] sm:$0xf]
        %v1160 = vld [vmem:[#allocation2 + $0x24] sm:$0xf]
        %v1161 = vld [vmem:[#allocation2 + $0x28] sm:$0xf]
        %v1162 = vld [vmem:[#allocation2 + $0x2c] sm:$0xf]
        %v1163 = vld [vmem:[#allocation2 + $0x30] sm:$0xf]
        %v1164 = vld [vmem:[#allocation2 + $0x34] sm:$0xf]
        %v1165 = vld [vmem:[#allocation2 + $0x38] sm:$0xf]
        %v1166 = vld [vmem:[#allocation2 + $0x3c] sm:$0xf]
        %v1167 = vld [vmem:[#allocation3] sm:$0xf]
        %v1168 = vld [vmem:[#allocation3 + $0x4] sm:$0xf]
        %v1169 = vld [vmem:[#allocation3 + $0x8] sm:$0xf]
        %v1170 = vld [vmem:[#allocation3 + $0xc] sm:$0xf]
        %v1171 = vld [vmem:[#allocation3 + $0x10] sm:$0xf]
        %v1172 = vld [vmem:[#allocation3 + $0x14] sm:$0xf]
        %v1173 = vld [vmem:[#allocation3 + $0x18] sm:$0xf]
        %v1174 = vld [vmem:[#allocation3 + $0x1c] sm:$0xf]
        %v1175 = vld [vmem:[#allocation3 + $0x20] sm:$0xf]
        %v1176 = vld [vmem:[#allocation3 + $0x24] sm:$0xf]
        %v1177 = vld [vmem:[#allocation3 + $0x28] sm:$0xf]
        %v1178 = vld [vmem:[#allocation3 + $0x2c] sm:$0xf]
        %v1179 = vld [vmem:[#allocation3 + $0x30] sm:$0xf]
        %v1180 = vld [vmem:[#allocation3 + $0x34] sm:$0xf]
        %v1181 = vld [vmem:[#allocation3 + $0x38] sm:$0xf]
        %v1182 = vld [vmem:[#allocation3 + $0x3c] sm:$0xf]
        %v1183 = vld [vmem:[#allocation4] sm:$0xf]
        %v1184 = vld [vmem:[#allocation4 + $0x4] sm:$0xf]
        %v1185 = vld [vmem:[#allocation4 + $0x8] sm:$0xf]
        %v1186 = vld [vmem:[#allocation4 + $0xc] sm:$0xf]
        %v1187 = vld [vmem:[#allocation4 + $0x10] sm:$0xf]
        %v1188 = vld [vmem:[#allocation4 + $0x14] sm:$0xf]
        %v1189 = vld [vmem:[#allocation4 + $0x18] sm:$0xf]
        %v1190 = vld [vmem:[#allocation4 + $0x1c] sm:$0xf]
        %v1191 = vld [vmem:[#allocation4 + $0x20] sm:$0xf]
        %v1192 = vld [vmem:[#allocation4 + $0x24] sm:$0xf]
        %v1193 = vld [vmem:[#allocation4 + $0x28] sm:$0xf]
        %v1194 = vld [vmem:[#allocation4 + $0x2c] sm:$0xf]
        %v1195 = vld [vmem:[#allocation4 + $0x30] sm:$0xf]
        %v1196 = vld [vmem:[#allocation4 + $0x34] sm:$0xf]
        %v1197 = vld [vmem:[#allocation4 + $0x38] sm:$0xf]
        %v1198 = vld [vmem:[#allocation4 + $0x3c] sm:$0xf]
        %v1215 = vunpack.c.l.b16 %v1151
        %v1216 = vunpack.c.l.b16 %v1152
        %v1217 = vunpack.c.l.b16 %v1153
        %v1218 = vunpack.c.l.b16 %v1154
        %v1219 = vunpack.c.l.b16 %v1155
        %v1220 = vunpack.c.l.b16 %v1156
        %v1221 = vunpack.c.l.b16 %v1157
        %v1222 = vunpack.c.l.b16 %v1158
        %v1223 = vunpack.c.l.b16 %v1159
        %v1224 = vunpack.c.l.b16 %v1160
        %v1225 = vunpack.c.l.b16 %v1161
        %v1226 = vunpack.c.l.b16 %v1162
        %v1227 = vunpack.c.l.b16 %v1163
        %v1228 = vunpack.c.l.b16 %v1164
        %v1229 = vunpack.c.l.b16 %v1165
        %v1230 = vunpack.c.l.b16 %v1166
        %v1231 = vpack.c.b16 %v1216, %v1215
        %v1232 = vpack.c.b16 %v1218, %v1217
        %v1233 = vpack.c.b16 %v1220, %v1219
        %v1234 = vpack.c.b16 %v1222, %v1221
        %v1235 = vpack.c.b16 %v1224, %v1223
        %v1236 = vpack.c.b16 %v1226, %v1225
        %v1237 = vpack.c.b16 %v1228, %v1227
        %v1238 = vpack.c.b16 %v1230, %v1229
        %v1255 = vunpack.c.l.b16 %v1167
        %v1256 = vunpack.c.l.b16 %v1168
        %v1257 = vunpack.c.l.b16 %v1169
        %v1258 = vunpack.c.l.b16 %v1170
        %v1259 = vunpack.c.l.b16 %v1171
        %v1260 = vunpack.c.l.b16 %v1172
        %v1261 = vunpack.c.l.b16 %v1173
        %v1262 = vunpack.c.l.b16 %v1174
        %v1263 = vunpack.c.l.b16 %v1175
        %v1264 = vunpack.c.l.b16 %v1176
        %v1265 = vunpack.c.l.b16 %v1177
        %v1266 = vunpack.c.l.b16 %v1178
        %v1267 = vunpack.c.l.b16 %v1179
        %v1268 = vunpack.c.l.b16 %v1180
        %v1269 = vunpack.c.l.b16 %v1181
        %v1270 = vunpack.c.l.b16 %v1182
        %v1271 = vpack.c.b16 %v1256, %v1255
        %v1272 = vpack.c.b16 %v1258, %v1257
        %v1273 = vpack.c.b16 %v1260, %v1259
        %v1274 = vpack.c.b16 %v1262, %v1261
        %v1275 = vpack.c.b16 %v1264, %v1263
        %v1276 = vpack.c.b16 %v1266, %v1265
        %v1277 = vpack.c.b16 %v1268, %v1267
        %v1278 = vpack.c.b16 %v1270, %v1269
        %vm1279 = vcmask 261120
        %v1281 = vsel %vm1279, %v1231, 0
        %v1284 = vsel %vm1279, %v1232, 0
        %v1287 = vsel %vm1279, %v1233, 0
        %v1290 = vsel %vm1279, %v1234, 0
        %v1293 = vsel %vm1279, %v1235, 0
        %v1296 = vsel %vm1279, %v1236, 0
        %v1299 = vsel %vm1279, %v1237, 0
        %v1302 = vsel %vm1279, %v1238, 0
        %v1305 = vsel %vm1279, %v1271, 0
        %v1308 = vsel %vm1279, %v1272, 0
        %v1311 = vsel %vm1279, %v1273, 0
        %v1314 = vsel %vm1279, %v1274, 0
        %v1317 = vsel %vm1279, %v1275, 0
        %v1320 = vsel %vm1279, %v1276, 0
        %v1323 = vsel %vm1279, %v1277, 0
        %v1326 = vsel %vm1279, %v1278, 0
        %1328 = vmatpush.bf16.xpose.msra.mxu0 %v1326
        %1329 = vmatpush.bf16.xpose.msra.mxu0 %v1323
        %1330 = vmatpush.bf16.xpose.msra.mxu0 %v1320
        %1331 = vmatpush.bf16.xpose.msra.mxu0 %v1317
        %1332 = vmatpush.bf16.xpose.msra.mxu0 %v1314
        %1333 = vmatpush.bf16.xpose.msra.mxu0 %v1311
        %1334 = vmatpush.bf16.xpose.msra.mxu0 %v1308
        %1335 = vmatpush.bf16.xpose.msra.mxu0 %v1305
        %1336 = vmatmul.bf16.gmra.mxu0 %v1281
        %v1337 = vpop.f32.mrf.mxu0
        %v1338 = vadd.f32 0.0, %v1337
        %v1339 = vpop.f32.mrf.mxu0
        %v1340 = vadd.f32 0.0, %v1339
        %1341 = vmatmul.bf16.gmra.mxu0 %v1284
        %v1342 = vpop.f32.mrf.mxu0
        %v1343 = vadd.f32 0.0, %v1342
        %v1344 = vpop.f32.mrf.mxu0
        %v1345 = vadd.f32 0.0, %v1344
        %1346 = vmatmul.bf16.gmra.mxu0 %v1287
        %v1347 = vpop.f32.mrf.mxu0
        %v1348 = vadd.f32 0.0, %v1347
        %v1349 = vpop.f32.mrf.mxu0
        %v1350 = vadd.f32 0.0, %v1349
        %1351 = vmatmul.bf16.gmra.mxu0 %v1290
        %v1352 = vpop.f32.mrf.mxu0
        %v1353 = vadd.f32 0.0, %v1352
        %v1354 = vpop.f32.mrf.mxu0
        %v1355 = vadd.f32 0.0, %v1354
        %1356 = vmatmul.bf16.gmra.mxu0 %v1293
        %v1357 = vpop.f32.mrf.mxu0
        %v1358 = vadd.f32 0.0, %v1357
        %v1359 = vpop.f32.mrf.mxu0
        %v1360 = vadd.f32 0.0, %v1359
        %1361 = vmatmul.bf16.gmra.mxu0 %v1296
        %v1362 = vpop.f32.mrf.mxu0
        %v1363 = vadd.f32 0.0, %v1362
        %v1364 = vpop.f32.mrf.mxu0
        %v1365 = vadd.f32 0.0, %v1364
        %1366 = vmatmul.bf16.gmra.mxu0 %v1299
        %v1367 = vpop.f32.mrf.mxu0
        %v1368 = vadd.f32 0.0, %v1367
        %v1369 = vpop.f32.mrf.mxu0
        %v1370 = vadd.f32 0.0, %v1369
        %1371 = vmatmul.bf16.gmra.mxu0 %v1302
        %v1372 = vpop.f32.mrf.mxu0
        %v1373 = vadd.f32 0.0, %v1372
        %v1374 = vpop.f32.mrf.mxu0
        %v1375 = vadd.f32 0.0, %v1374
        %1376 = vdwg.mxu0
        %1377 = vmax.xlane.f32.xlu0 %v1338
        %v1378 = vpop.xlane.xlu0 %1377
        %1379 = vmax.xlane.f32.xlu0 %v1340
        %v1380 = vpop.xlane.xlu0 %1379
        %1381 = vmax.xlane.f32.xlu0 %v1343
        %v1382 = vpop.xlane.xlu0 %1381
        %1383 = vmax.xlane.f32.xlu0 %v1345
        %v1384 = vpop.xlane.xlu0 %1383
        %1385 = vmax.xlane.f32.xlu0 %v1348
        %v1386 = vpop.xlane.xlu0 %1385
        %1387 = vmax.xlane.f32.xlu0 %v1350
        %v1388 = vpop.xlane.xlu0 %1387
        %1389 = vmax.xlane.f32.xlu0 %v1353
        %v1390 = vpop.xlane.xlu0 %1389
        %1391 = vmax.xlane.f32.xlu0 %v1355
        %v1392 = vpop.xlane.xlu0 %1391
        %1393 = vmax.xlane.f32.xlu0 %v1358
        %v1394 = vpop.xlane.xlu0 %1393
        %1395 = vmax.xlane.f32.xlu0 %v1360
        %v1396 = vpop.xlane.xlu0 %1395
        %1397 = vmax.xlane.f32.xlu0 %v1363
        %v1398 = vpop.xlane.xlu0 %1397
        %1399 = vmax.xlane.f32.xlu0 %v1365
        %v1400 = vpop.xlane.xlu0 %1399
        %1401 = vmax.xlane.f32.xlu0 %v1368
        %v1402 = vpop.xlane.xlu0 %1401
        %1403 = vmax.xlane.f32.xlu0 %v1370
        %v1404 = vpop.xlane.xlu0 %1403
        %1405 = vmax.xlane.f32.xlu0 %v1373
        %v1406 = vpop.xlane.xlu0 %1405
        %1407 = vmax.xlane.f32.xlu0 %v1375
        %v1408 = vpop.xlane.xlu0 %1407
        %v1409 = vsub.f32 %v1338, %v1378
        %v1410 = vsub.f32 %v1340, %v1380
        %v1411 = vsub.f32 %v1343, %v1382
        %v1412 = vsub.f32 %v1345, %v1384
        %v1413 = vsub.f32 %v1348, %v1386
        %v1414 = vsub.f32 %v1350, %v1388
        %v1415 = vsub.f32 %v1353, %v1390
        %v1416 = vsub.f32 %v1355, %v1392
        %v1417 = vsub.f32 %v1358, %v1394
        %v1418 = vsub.f32 %v1360, %v1396
        %v1419 = vsub.f32 %v1363, %v1398
        %v1420 = vsub.f32 %v1365, %v1400
        %v1421 = vsub.f32 %v1368, %v1402
        %v1422 = vsub.f32 %v1370, %v1404
        %v1423 = vsub.f32 %v1373, %v1406
        %v1424 = vsub.f32 %v1375, %v1408
        %v1425 = vmul.f32 %v1409, 1.442695
        %v1426 = vpow.pop %v1425
        %v1427 = vmul.f32 %v1410, 1.442695
        %v1428 = vpow.pop %v1427
        %v1429 = vmul.f32 %v1411, 1.442695
        %v1430 = vpow.pop %v1429
        %v1431 = vmul.f32 %v1412, 1.442695
        %v1432 = vpow.pop %v1431
        %v1433 = vmul.f32 %v1413, 1.442695
        %v1434 = vpow.pop %v1433
        %v1435 = vmul.f32 %v1414, 1.442695
        %v1436 = vpow.pop %v1435
        %v1437 = vmul.f32 %v1415, 1.442695
        %v1438 = vpow.pop %v1437
        %v1439 = vmul.f32 %v1416, 1.442695
        %v1440 = vpow.pop %v1439
        %v1441 = vmul.f32 %v1417, 1.442695
        %v1442 = vpow.pop %v1441
        %v1443 = vmul.f32 %v1418, 1.442695
        %v1444 = vpow.pop %v1443
        %v1445 = vmul.f32 %v1419, 1.442695
        %v1446 = vpow.pop %v1445
        %v1447 = vmul.f32 %v1420, 1.442695
        %v1448 = vpow.pop %v1447
        %v1449 = vmul.f32 %v1421, 1.442695
        %v1450 = vpow.pop %v1449
        %v1451 = vmul.f32 %v1422, 1.442695
        %v1452 = vpow.pop %v1451
        %v1453 = vmul.f32 %v1423, 1.442695
        %v1454 = vpow.pop %v1453
        %v1455 = vmul.f32 %v1424, 1.442695
        %v1456 = vpow.pop %v1455
        %1457 = vadd.xlane.f32.xlu0 %v1426
        %v1458 = vpop.xlane.xlu0 %1457
        %1459 = vadd.xlane.f32.xlu0 %v1428
        %v1460 = vpop.xlane.xlu0 %1459
        %1461 = vadd.xlane.f32.xlu0 %v1430
        %v1462 = vpop.xlane.xlu0 %1461
        %1463 = vadd.xlane.f32.xlu0 %v1432
        %v1464 = vpop.xlane.xlu0 %1463
        %1465 = vadd.xlane.f32.xlu0 %v1434
        %v1466 = vpop.xlane.xlu0 %1465
        %1467 = vadd.xlane.f32.xlu0 %v1436
        %v1468 = vpop.xlane.xlu0 %1467
        %1469 = vadd.xlane.f32.xlu0 %v1438
        %v1470 = vpop.xlane.xlu0 %1469
        %1471 = vadd.xlane.f32.xlu0 %v1440
        %v1472 = vpop.xlane.xlu0 %1471
        %1473 = vadd.xlane.f32.xlu0 %v1442
        %v1474 = vpop.xlane.xlu0 %1473
        %1475 = vadd.xlane.f32.xlu0 %v1444
        %v1476 = vpop.xlane.xlu0 %1475
        %1477 = vadd.xlane.f32.xlu0 %v1446
        %v1478 = vpop.xlane.xlu0 %1477
        %1479 = vadd.xlane.f32.xlu0 %v1448
        %v1480 = vpop.xlane.xlu0 %1479
        %1481 = vadd.xlane.f32.xlu0 %v1450
        %v1482 = vpop.xlane.xlu0 %1481
        %1483 = vadd.xlane.f32.xlu0 %v1452
        %v1484 = vpop.xlane.xlu0 %1483
        %1485 = vadd.xlane.f32.xlu0 %v1454
        %v1486 = vpop.xlane.xlu0 %1485
        %1487 = vadd.xlane.f32.xlu0 %v1456
        %v1488 = vpop.xlane.xlu0 %1487
        %v1489 = vpack.c.bf16 %v1428, %v1426
        %v1490 = vpack.c.bf16 %v1432, %v1430
        %v1491 = vpack.c.bf16 %v1436, %v1434
        %v1492 = vpack.c.bf16 %v1440, %v1438
        %v1493 = vpack.c.bf16 %v1444, %v1442
        %v1494 = vpack.c.bf16 %v1448, %v1446
        %v1495 = vpack.c.bf16 %v1452, %v1450
        %v1496 = vpack.c.bf16 %v1456, %v1454
        %v1513 = vunpack.c.l.b16 %v1183
        %v1514 = vunpack.c.l.b16 %v1184
        %v1515 = vunpack.c.l.b16 %v1185
        %v1516 = vunpack.c.l.b16 %v1186
        %v1517 = vunpack.c.l.b16 %v1187
        %v1518 = vunpack.c.l.b16 %v1188
        %v1519 = vunpack.c.l.b16 %v1189
        %v1520 = vunpack.c.l.b16 %v1190
        %v1521 = vunpack.c.l.b16 %v1191
        %v1522 = vunpack.c.l.b16 %v1192
        %v1523 = vunpack.c.l.b16 %v1193
        %v1524 = vunpack.c.l.b16 %v1194
        %v1525 = vunpack.c.l.b16 %v1195
        %v1526 = vunpack.c.l.b16 %v1196
        %v1527 = vunpack.c.l.b16 %v1197
        %v1528 = vunpack.c.l.b16 %v1198
        %v1529 = vpack.c.b16 %v1514, %v1513
        %v1530 = vpack.c.b16 %v1516, %v1515
        %v1531 = vpack.c.b16 %v1518, %v1517
        %v1532 = vpack.c.b16 %v1520, %v1519
        %v1533 = vpack.c.b16 %v1522, %v1521
        %v1534 = vpack.c.b16 %v1524, %v1523
        %v1535 = vpack.c.b16 %v1526, %v1525
        %v1536 = vpack.c.b16 %v1528, %v1527
        %1545 = vmatpush.bf16.msra.mxu0 %v1536
        %1546 = vmatpush.bf16.msra.mxu0 %v1535
        %1547 = vmatpush.bf16.msra.mxu0 %v1534
        %1548 = vmatpush.bf16.msra.mxu0 %v1533
        %1549 = vmatpush.bf16.msra.mxu0 %v1532
        %1550 = vmatpush.bf16.msra.mxu0 %v1531
        %1551 = vmatpush.bf16.msra.mxu0 %v1530
        %1552 = vmatpush.bf16.msra.mxu0 %v1529
        %1553 = vmatmul.bf16.gmra.mxu0 %v1489
        %v1554 = vpop.f32.mrf.mxu0
        %v1555 = vadd.f32 0.0, %v1554
        %v1556 = vpop.f32.mrf.mxu0
        %v1557 = vadd.f32 0.0, %v1556
        %1558 = vmatmul.bf16.gmra.mxu0 %v1490
        %v1559 = vpop.f32.mrf.mxu0
        %v1560 = vadd.f32 0.0, %v1559
        %v1561 = vpop.f32.mrf.mxu0
        %v1562 = vadd.f32 0.0, %v1561
        %1563 = vmatmul.bf16.gmra.mxu0 %v1491
        %v1564 = vpop.f32.mrf.mxu0
        %v1565 = vadd.f32 0.0, %v1564
        %v1566 = vpop.f32.mrf.mxu0
        %v1567 = vadd.f32 0.0, %v1566
        %1568 = vmatmul.bf16.gmra.mxu0 %v1492
        %v1569 = vpop.f32.mrf.mxu0
        %v1570 = vadd.f32 0.0, %v1569
        %v1571 = vpop.f32.mrf.mxu0
        %v1572 = vadd.f32 0.0, %v1571
        %1573 = vmatmul.bf16.gmra.mxu0 %v1493
        %v1574 = vpop.f32.mrf.mxu0
        %v1575 = vadd.f32 0.0, %v1574
        %v1576 = vpop.f32.mrf.mxu0
        %v1577 = vadd.f32 0.0, %v1576
        %1578 = vmatmul.bf16.gmra.mxu0 %v1494
        %v1579 = vpop.f32.mrf.mxu0
        %v1580 = vadd.f32 0.0, %v1579
        %v1581 = vpop.f32.mrf.mxu0
        %v1582 = vadd.f32 0.0, %v1581
        %1583 = vmatmul.bf16.gmra.mxu0 %v1495
        %v1584 = vpop.f32.mrf.mxu0
        %v1585 = vadd.f32 0.0, %v1584
        %v1586 = vpop.f32.mrf.mxu0
        %v1587 = vadd.f32 0.0, %v1586
        %1588 = vmatmul.bf16.gmra.mxu0 %v1496
        %v1589 = vpop.f32.mrf.mxu0
        %v1590 = vadd.f32 0.0, %v1589
        %v1591 = vpop.f32.mrf.mxu0
        %v1592 = vadd.f32 0.0, %v1591
        %1593 = vdwg.mxu0
        %v1594 = vrcp.pop %v1458
        %v1595 = vmul.f32 %v1458, %v1594
        %v1596 = vsub.f32 1.0, %v1595
        %v1597 = vmul.f32 %v1594, %v1596
        %v1598 = vadd.f32 %v1594, %v1597
        %vm1599 = vweird.f32 %v1458
        %vm1600 = vweird.f32 %v1594
        %vm1601 = vmor %vm1599, %vm1600
        %v1602 = vsel %vm1601, %v1594, %v1598
        %v1603 = vand.u32 2147483647, %v1458
        %vm1604 = vcmp.eq.f32.partialorder %v1603, 8.507059e+37
        %v1605 = vand.u32 %v1458, 2147483648
        %v1606 = vor.u32 1.1754944e-38, %v1605
        %v1607 = vsel %vm1604, %v1606, %v1602
        %v1608 = vrcp.pop %v1460
        %v1609 = vmul.f32 %v1460, %v1608
        %v1610 = vsub.f32 1.0, %v1609
        %v1611 = vmul.f32 %v1608, %v1610
        %v1612 = vadd.f32 %v1608, %v1611
        %vm1613 = vweird.f32 %v1460
        %vm1614 = vweird.f32 %v1608
        %vm1615 = vmor %vm1613, %vm1614
        %v1616 = vsel %vm1615, %v1608, %v1612
        %v1617 = vand.u32 2147483647, %v1460
        %vm1618 = vcmp.eq.f32.partialorder %v1617, 8.507059e+37
        %v1619 = vand.u32 %v1460, 2147483648
        %v1620 = vor.u32 1.1754944e-38, %v1619
        %v1621 = vsel %vm1618, %v1620, %v1616
        %v1622 = vrcp.pop %v1462
        %v1623 = vmul.f32 %v1462, %v1622
        %v1624 = vsub.f32 1.0, %v1623
        %v1625 = vmul.f32 %v1622, %v1624
        %v1626 = vadd.f32 %v1622, %v1625
        %vm1627 = vweird.f32 %v1462
        %vm1628 = vweird.f32 %v1622
        %vm1629 = vmor %vm1627, %vm1628
        %v1630 = vsel %vm1629, %v1622, %v1626
        %v1631 = vand.u32 2147483647, %v1462
        %vm1632 = vcmp.eq.f32.partialorder %v1631, 8.507059e+37
        %v1633 = vand.u32 %v1462, 2147483648
        %v1634 = vor.u32 1.1754944e-38, %v1633
        %v1635 = vsel %vm1632, %v1634, %v1630
        %v1636 = vrcp.pop %v1464
        %v1637 = vmul.f32 %v1464, %v1636
        %v1638 = vsub.f32 1.0, %v1637
        %v1639 = vmul.f32 %v1636, %v1638
        %v1640 = vadd.f32 %v1636, %v1639
        %vm1641 = vweird.f32 %v1464
        %vm1642 = vweird.f32 %v1636
        %vm1643 = vmor %vm1641, %vm1642
        %v1644 = vsel %vm1643, %v1636, %v1640
        %v1645 = vand.u32 2147483647, %v1464
        %vm1646 = vcmp.eq.f32.partialorder %v1645, 8.507059e+37
        %v1647 = vand.u32 %v1464, 2147483648
        %v1648 = vor.u32 1.1754944e-38, %v1647
        %v1649 = vsel %vm1646, %v1648, %v1644
        %v1650 = vrcp.pop %v1466
        %v1651 = vmul.f32 %v1466, %v1650
        %v1652 = vsub.f32 1.0, %v1651
        %v1653 = vmul.f32 %v1650, %v1652
        %v1654 = vadd.f32 %v1650, %v1653
        %vm1655 = vweird.f32 %v1466
        %vm1656 = vweird.f32 %v1650
        %vm1657 = vmor %vm1655, %vm1656
        %v1658 = vsel %vm1657, %v1650, %v1654
        %v1659 = vand.u32 2147483647, %v1466
        %vm1660 = vcmp.eq.f32.partialorder %v1659, 8.507059e+37
        %v1661 = vand.u32 %v1466, 2147483648
        %v1662 = vor.u32 1.1754944e-38, %v1661
        %v1663 = vsel %vm1660, %v1662, %v1658
        %v1664 = vrcp.pop %v1468
        %v1665 = vmul.f32 %v1468, %v1664
        %v1666 = vsub.f32 1.0, %v1665
        %v1667 = vmul.f32 %v1664, %v1666
        %v1668 = vadd.f32 %v1664, %v1667
        %vm1669 = vweird.f32 %v1468
        %vm1670 = vweird.f32 %v1664
        %vm1671 = vmor %vm1669, %vm1670
        %v1672 = vsel %vm1671, %v1664, %v1668
        %v1673 = vand.u32 2147483647, %v1468
        %vm1674 = vcmp.eq.f32.partialorder %v1673, 8.507059e+37
        %v1675 = vand.u32 %v1468, 2147483648
        %v1676 = vor.u32 1.1754944e-38, %v1675
        %v1677 = vsel %vm1674, %v1676, %v1672
        %v1678 = vrcp.pop %v1470
        %v1679 = vmul.f32 %v1470, %v1678
        %v1680 = vsub.f32 1.0, %v1679
        %v1681 = vmul.f32 %v1678, %v1680
        %v1682 = vadd.f32 %v1678, %v1681
        %vm1683 = vweird.f32 %v1470
        %vm1684 = vweird.f32 %v1678
        %vm1685 = vmor %vm1683, %vm1684
        %v1686 = vsel %vm1685, %v1678, %v1682
        %v1687 = vand.u32 2147483647, %v1470
        %vm1688 = vcmp.eq.f32.partialorder %v1687, 8.507059e+37
        %v1689 = vand.u32 %v1470, 2147483648
        %v1690 = vor.u32 1.1754944e-38, %v1689
        %v1691 = vsel %vm1688, %v1690, %v1686
        %v1692 = vrcp.pop %v1472
        %v1693 = vmul.f32 %v1472, %v1692
        %v1694 = vsub.f32 1.0, %v1693
        %v1695 = vmul.f32 %v1692, %v1694
        %v1696 = vadd.f32 %v1692, %v1695
        %vm1697 = vweird.f32 %v1472
        %vm1698 = vweird.f32 %v1692
        %vm1699 = vmor %vm1697, %vm1698
        %v1700 = vsel %vm1699, %v1692, %v1696
        %v1701 = vand.u32 2147483647, %v1472
        %vm1702 = vcmp.eq.f32.partialorder %v1701, 8.507059e+37
        %v1703 = vand.u32 %v1472, 2147483648
        %v1704 = vor.u32 1.1754944e-38, %v1703
        %v1705 = vsel %vm1702, %v1704, %v1700
        %v1706 = vrcp.pop %v1474
        %v1707 = vmul.f32 %v1474, %v1706
        %v1708 = vsub.f32 1.0, %v1707
        %v1709 = vmul.f32 %v1706, %v1708
        %v1710 = vadd.f32 %v1706, %v1709
        %vm1711 = vweird.f32 %v1474
        %vm1712 = vweird.f32 %v1706
        %vm1713 = vmor %vm1711, %vm1712
        %v1714 = vsel %vm1713, %v1706, %v1710
        %v1715 = vand.u32 2147483647, %v1474
        %vm1716 = vcmp.eq.f32.partialorder %v1715, 8.507059e+37
        %v1717 = vand.u32 %v1474, 2147483648
        %v1718 = vor.u32 1.1754944e-38, %v1717
        %v1719 = vsel %vm1716, %v1718, %v1714
        %v1720 = vrcp.pop %v1476
        %v1721 = vmul.f32 %v1476, %v1720
        %v1722 = vsub.f32 1.0, %v1721
        %v1723 = vmul.f32 %v1720, %v1722
        %v1724 = vadd.f32 %v1720, %v1723
        %vm1725 = vweird.f32 %v1476
        %vm1726 = vweird.f32 %v1720
        %vm1727 = vmor %vm1725, %vm1726
        %v1728 = vsel %vm1727, %v1720, %v1724
        %v1729 = vand.u32 2147483647, %v1476
        %vm1730 = vcmp.eq.f32.partialorder %v1729, 8.507059e+37
        %v1731 = vand.u32 %v1476, 2147483648
        %v1732 = vor.u32 1.1754944e-38, %v1731
        %v1733 = vsel %vm1730, %v1732, %v1728
        %v1734 = vrcp.pop %v1478
        %v1735 = vmul.f32 %v1478, %v1734
        %v1736 = vsub.f32 1.0, %v1735
        %v1737 = vmul.f32 %v1734, %v1736
        %v1738 = vadd.f32 %v1734, %v1737
        %vm1739 = vweird.f32 %v1478
        %vm1740 = vweird.f32 %v1734
        %vm1741 = vmor %vm1739, %vm1740
        %v1742 = vsel %vm1741, %v1734, %v1738
        %v1743 = vand.u32 2147483647, %v1478
        %vm1744 = vcmp.eq.f32.partialorder %v1743, 8.507059e+37
        %v1745 = vand.u32 %v1478, 2147483648
        %v1746 = vor.u32 1.1754944e-38, %v1745
        %v1747 = vsel %vm1744, %v1746, %v1742
        %v1748 = vrcp.pop %v1480
        %v1749 = vmul.f32 %v1480, %v1748
        %v1750 = vsub.f32 1.0, %v1749
        %v1751 = vmul.f32 %v1748, %v1750
        %v1752 = vadd.f32 %v1748, %v1751
        %vm1753 = vweird.f32 %v1480
        %vm1754 = vweird.f32 %v1748
        %vm1755 = vmor %vm1753, %vm1754
        %v1756 = vsel %vm1755, %v1748, %v1752
        %v1757 = vand.u32 2147483647, %v1480
        %vm1758 = vcmp.eq.f32.partialorder %v1757, 8.507059e+37
        %v1759 = vand.u32 %v1480, 2147483648
        %v1760 = vor.u32 1.1754944e-38, %v1759
        %v1761 = vsel %vm1758, %v1760, %v1756
        %v1762 = vrcp.pop %v1482
        %v1763 = vmul.f32 %v1482, %v1762
        %v1764 = vsub.f32 1.0, %v1763
        %v1765 = vmul.f32 %v1762, %v1764
        %v1766 = vadd.f32 %v1762, %v1765
        %vm1767 = vweird.f32 %v1482
        %vm1768 = vweird.f32 %v1762
        %vm1769 = vmor %vm1767, %vm1768
        %v1770 = vsel %vm1769, %v1762, %v1766
        %v1771 = vand.u32 2147483647, %v1482
        %vm1772 = vcmp.eq.f32.partialorder %v1771, 8.507059e+37
        %v1773 = vand.u32 %v1482, 2147483648
        %v1774 = vor.u32 1.1754944e-38, %v1773
        %v1775 = vsel %vm1772, %v1774, %v1770
        %v1776 = vrcp.pop %v1484
        %v1777 = vmul.f32 %v1484, %v1776
        %v1778 = vsub.f32 1.0, %v1777
        %v1779 = vmul.f32 %v1776, %v1778
        %v1780 = vadd.f32 %v1776, %v1779
        %vm1781 = vweird.f32 %v1484
        %vm1782 = vweird.f32 %v1776
        %vm1783 = vmor %vm1781, %vm1782
        %v1784 = vsel %vm1783, %v1776, %v1780
        %v1785 = vand.u32 2147483647, %v1484
        %vm1786 = vcmp.eq.f32.partialorder %v1785, 8.507059e+37
        %v1787 = vand.u32 %v1484, 2147483648
        %v1788 = vor.u32 1.1754944e-38, %v1787
        %v1789 = vsel %vm1786, %v1788, %v1784
        %v1790 = vrcp.pop %v1486
        %v1791 = vmul.f32 %v1486, %v1790
        %v1792 = vsub.f32 1.0, %v1791
        %v1793 = vmul.f32 %v1790, %v1792
        %v1794 = vadd.f32 %v1790, %v1793
        %vm1795 = vweird.f32 %v1486
        %vm1796 = vweird.f32 %v1790
        %vm1797 = vmor %vm1795, %vm1796
        %v1798 = vsel %vm1797, %v1790, %v1794
        %v1799 = vand.u32 2147483647, %v1486
        %vm1800 = vcmp.eq.f32.partialorder %v1799, 8.507059e+37
        %v1801 = vand.u32 %v1486, 2147483648
        %v1802 = vor.u32 1.1754944e-38, %v1801
        %v1803 = vsel %vm1800, %v1802, %v1798
        %v1804 = vrcp.pop %v1488
        %v1805 = vmul.f32 %v1488, %v1804
        %v1806 = vsub.f32 1.0, %v1805
        %v1807 = vmul.f32 %v1804, %v1806
        %v1808 = vadd.f32 %v1804, %v1807
        %vm1809 = vweird.f32 %v1488
        %vm1810 = vweird.f32 %v1804
        %vm1811 = vmor %vm1809, %vm1810
        %v1812 = vsel %vm1811, %v1804, %v1808
        %v1813 = vand.u32 2147483647, %v1488
        %vm1814 = vcmp.eq.f32.partialorder %v1813, 8.507059e+37
        %v1815 = vand.u32 %v1488, 2147483648
        %v1816 = vor.u32 1.1754944e-38, %v1815
        %v1817 = vsel %vm1814, %v1816, %v1812
        %v1818 = vmul.f32 %v1555, %v1607
        %v1819 = vmul.f32 %v1557, %v1621
        %v1820 = vmul.f32 %v1560, %v1635
        %v1821 = vmul.f32 %v1562, %v1649
        %v1822 = vmul.f32 %v1565, %v1663
        %v1823 = vmul.f32 %v1567, %v1677
        %v1824 = vmul.f32 %v1570, %v1691
        %v1825 = vmul.f32 %v1572, %v1705
        %v1826 = vmul.f32 %v1575, %v1719
        %v1827 = vmul.f32 %v1577, %v1733
        %v1828 = vmul.f32 %v1580, %v1747
        %v1829 = vmul.f32 %v1582, %v1761
        %v1830 = vmul.f32 %v1585, %v1775
        %v1831 = vmul.f32 %v1587, %v1789
        %v1832 = vmul.f32 %v1590, %v1803
        %v1833 = vmul.f32 %v1592, %v1817
        %v1834 = vpack.c.bf16 %v1818, %v1818
        %v1835 = vpack.c.bf16 %v1819, %v1819
        %v1836 = vpack.c.bf16 %v1820, %v1820
        %v1837 = vpack.c.bf16 %v1821, %v1821
        %v1838 = vpack.c.bf16 %v1822, %v1822
        %v1839 = vpack.c.bf16 %v1823, %v1823
        %v1840 = vpack.c.bf16 %v1824, %v1824
        %v1841 = vpack.c.bf16 %v1825, %v1825
        %v1842 = vpack.c.bf16 %v1826, %v1826
        %v1843 = vpack.c.bf16 %v1827, %v1827
        %v1844 = vpack.c.bf16 %v1828, %v1828
        %v1845 = vpack.c.bf16 %v1829, %v1829
        %v1846 = vpack.c.bf16 %v1830, %v1830
        %v1847 = vpack.c.bf16 %v1831, %v1831
        %v1848 = vpack.c.bf16 %v1832, %v1832
        %v1849 = vpack.c.bf16 %v1833, %v1833
        %vm1850 = vcmask 257024
        %1851 = vst.msk [vmem:[#allocation5] sm:$0xf] %vm1850, %v1834
        %1852 = vst.msk [vmem:[#allocation5 + $0x4] sm:$0xf] %vm1850, %v1835
        %1853 = vst.msk [vmem:[#allocation5 + $0x8] sm:$0xf] %vm1850, %v1836
        %1854 = vst.msk [vmem:[#allocation5 + $0xc] sm:$0xf] %vm1850, %v1837
        %1855 = vst.msk [vmem:[#allocation5 + $0x10] sm:$0xf] %vm1850, %v1838
        %1856 = vst.msk [vmem:[#allocation5 + $0x14] sm:$0xf] %vm1850, %v1839
        %1857 = vst.msk [vmem:[#allocation5 + $0x18] sm:$0xf] %vm1850, %v1840
        %1858 = vst.msk [vmem:[#allocation5 + $0x1c] sm:$0xf] %vm1850, %v1841
        %1859 = vst.msk [vmem:[#allocation5 + $0x20] sm:$0xf] %vm1850, %v1842
        %1860 = vst.msk [vmem:[#allocation5 + $0x24] sm:$0xf] %vm1850, %v1843
        %1861 = vst.msk [vmem:[#allocation5 + $0x28] sm:$0xf] %vm1850, %v1844
        %1862 = vst.msk [vmem:[#allocation5 + $0x2c] sm:$0xf] %vm1850, %v1845
        %1863 = vst.msk [vmem:[#allocation5 + $0x30] sm:$0xf] %vm1850, %v1846
        %1864 = vst.msk [vmem:[#allocation5 + $0x34] sm:$0xf] %vm1850, %v1847
        %1865 = vst.msk [vmem:[#allocation5 + $0x38] sm:$0xf] %vm1850, %v1848
        %1866 = vst.msk [vmem:[#allocation5 + $0x3c] sm:$0xf] %vm1850, %v1849
        %v1867 = vld [vmem:[#allocation2] sm:$0xf]
        %v1868 = vld [vmem:[#allocation2 + $0x4] sm:$0xf]
        %v1869 = vld [vmem:[#allocation2 + $0x8] sm:$0xf]
        %v1870 = vld [vmem:[#allocation2 + $0xc] sm:$0xf]
        %v1871 = vld [vmem:[#allocation2 + $0x10] sm:$0xf]
        %v1872 = vld [vmem:[#allocation2 + $0x14] sm:$0xf]
        %v1873 = vld [vmem:[#allocation2 + $0x18] sm:$0xf]
        %v1874 = vld [vmem:[#allocation2 + $0x1c] sm:$0xf]
        %v1875 = vld [vmem:[#allocation2 + $0x20] sm:$0xf]
        %v1876 = vld [vmem:[#allocation2 + $0x24] sm:$0xf]
        %v1877 = vld [vmem:[#allocation2 + $0x28] sm:$0xf]
        %v1878 = vld [vmem:[#allocation2 + $0x2c] sm:$0xf]
        %v1879 = vld [vmem:[#allocation2 + $0x30] sm:$0xf]
        %v1880 = vld [vmem:[#allocation2 + $0x34] sm:$0xf]
        %v1881 = vld [vmem:[#allocation2 + $0x38] sm:$0xf]
        %v1882 = vld [vmem:[#allocation2 + $0x3c] sm:$0xf]
        %v1883 = vld [vmem:[#allocation3] sm:$0xf]
        %v1884 = vld [vmem:[#allocation3 + $0x4] sm:$0xf]
        %v1885 = vld [vmem:[#allocation3 + $0x8] sm:$0xf]
        %v1886 = vld [vmem:[#allocation3 + $0xc] sm:$0xf]
        %v1887 = vld [vmem:[#allocation3 + $0x10] sm:$0xf]
        %v1888 = vld [vmem:[#allocation3 + $0x14] sm:$0xf]
        %v1889 = vld [vmem:[#allocation3 + $0x18] sm:$0xf]
        %v1890 = vld [vmem:[#allocation3 + $0x1c] sm:$0xf]
        %v1891 = vld [vmem:[#allocation3 + $0x20] sm:$0xf]
        %v1892 = vld [vmem:[#allocation3 + $0x24] sm:$0xf]
        %v1893 = vld [vmem:[#allocation3 + $0x28] sm:$0xf]
        %v1894 = vld [vmem:[#allocation3 + $0x2c] sm:$0xf]
        %v1895 = vld [vmem:[#allocation3 + $0x30] sm:$0xf]
        %v1896 = vld [vmem:[#allocation3 + $0x34] sm:$0xf]
        %v1897 = vld [vmem:[#allocation3 + $0x38] sm:$0xf]
        %v1898 = vld [vmem:[#allocation3 + $0x3c] sm:$0xf]
        %v1899 = vld [vmem:[#allocation4] sm:$0xf]
        %v1900 = vld [vmem:[#allocation4 + $0x4] sm:$0xf]
        %v1901 = vld [vmem:[#allocation4 + $0x8] sm:$0xf]
        %v1902 = vld [vmem:[#allocation4 + $0xc] sm:$0xf]
        %v1903 = vld [vmem:[#allocation4 + $0x10] sm:$0xf]
        %v1904 = vld [vmem:[#allocation4 + $0x14] sm:$0xf]
        %v1905 = vld [vmem:[#allocation4 + $0x18] sm:$0xf]
        %v1906 = vld [vmem:[#allocation4 + $0x1c] sm:$0xf]
        %v1907 = vld [vmem:[#allocation4 + $0x20] sm:$0xf]
        %v1908 = vld [vmem:[#allocation4 + $0x24] sm:$0xf]
        %v1909 = vld [vmem:[#allocation4 + $0x28] sm:$0xf]
        %v1910 = vld [vmem:[#allocation4 + $0x2c] sm:$0xf]
        %v1911 = vld [vmem:[#allocation4 + $0x30] sm:$0xf]
        %v1912 = vld [vmem:[#allocation4 + $0x34] sm:$0xf]
        %v1913 = vld [vmem:[#allocation4 + $0x38] sm:$0xf]
        %v1914 = vld [vmem:[#allocation4 + $0x3c] sm:$0xf]
        %v1931 = vunpack.c.l.b16 %v1867
        %v1932 = vunpack.c.l.b16 %v1868
        %v1933 = vunpack.c.l.b16 %v1869
        %v1934 = vunpack.c.l.b16 %v1870
        %v1935 = vunpack.c.l.b16 %v1871
        %v1936 = vunpack.c.l.b16 %v1872
        %v1937 = vunpack.c.l.b16 %v1873
        %v1938 = vunpack.c.l.b16 %v1874
        %v1939 = vunpack.c.l.b16 %v1875
        %v1940 = vunpack.c.l.b16 %v1876
        %v1941 = vunpack.c.l.b16 %v1877
        %v1942 = vunpack.c.l.b16 %v1878
        %v1943 = vunpack.c.l.b16 %v1879
        %v1944 = vunpack.c.l.b16 %v1880
        %v1945 = vunpack.c.l.b16 %v1881
        %v1946 = vunpack.c.l.b16 %v1882
        %v1947 = vpack.c.b16 %v1932, %v1931
        %v1948 = vpack.c.b16 %v1934, %v1933
        %v1949 = vpack.c.b16 %v1936, %v1935
        %v1950 = vpack.c.b16 %v1938, %v1937
        %v1951 = vpack.c.b16 %v1940, %v1939
        %v1952 = vpack.c.b16 %v1942, %v1941
        %v1953 = vpack.c.b16 %v1944, %v1943
        %v1954 = vpack.c.b16 %v1946, %v1945
        %1955 = vrot.lane.b32.xlu0 %v1947, 96
        %v1956 = vpop.permute.xlu0 %1955
        %1957 = vrot.lane.b32.xlu0 %v1948, 96
        %v1958 = vpop.permute.xlu0 %1957
        %1959 = vrot.lane.b32.xlu0 %v1949, 96
        %v1960 = vpop.permute.xlu0 %1959
        %1961 = vrot.lane.b32.xlu0 %v1950, 96
        %v1962 = vpop.permute.xlu0 %1961
        %1963 = vrot.lane.b32.xlu0 %v1951, 96
        %v1964 = vpop.permute.xlu0 %1963
        %1965 = vrot.lane.b32.xlu0 %v1952, 96
        %v1966 = vpop.permute.xlu0 %1965
        %1967 = vrot.lane.b32.xlu0 %v1953, 96
        %v1968 = vpop.permute.xlu0 %1967
        %1969 = vrot.lane.b32.xlu0 %v1954, 96
        %v1970 = vpop.permute.xlu0 %1969
        %v1987 = vunpack.c.l.b16 %v1883
        %v1988 = vunpack.c.l.b16 %v1884
        %v1989 = vunpack.c.l.b16 %v1885
        %v1990 = vunpack.c.l.b16 %v1886
        %v1991 = vunpack.c.l.b16 %v1887
        %v1992 = vunpack.c.l.b16 %v1888
        %v1993 = vunpack.c.l.b16 %v1889
        %v1994 = vunpack.c.l.b16 %v1890
        %v1995 = vunpack.c.l.b16 %v1891
        %v1996 = vunpack.c.l.b16 %v1892
        %v1997 = vunpack.c.l.b16 %v1893
        %v1998 = vunpack.c.l.b16 %v1894
        %v1999 = vunpack.c.l.b16 %v1895
        %v2000 = vunpack.c.l.b16 %v1896
        %v2001 = vunpack.c.l.b16 %v1897
        %v2002 = vunpack.c.l.b16 %v1898
        %v2003 = vpack.c.b16 %v1988, %v1987
        %v2004 = vpack.c.b16 %v1990, %v1989
        %v2005 = vpack.c.b16 %v1992, %v1991
        %v2006 = vpack.c.b16 %v1994, %v1993
        %v2007 = vpack.c.b16 %v1996, %v1995
        %v2008 = vpack.c.b16 %v1998, %v1997
        %v2009 = vpack.c.b16 %v2000, %v1999
        %v2010 = vpack.c.b16 %v2002, %v2001
        %2011 = vrot.lane.b32.xlu0 %v2003, 96
        %v2012 = vpop.permute.xlu0 %2011
        %2013 = vrot.lane.b32.xlu0 %v2004, 96
        %v2014 = vpop.permute.xlu0 %2013
        %2015 = vrot.lane.b32.xlu0 %v2005, 96
        %v2016 = vpop.permute.xlu0 %2015
        %2017 = vrot.lane.b32.xlu0 %v2006, 96
        %v2018 = vpop.permute.xlu0 %2017
        %2019 = vrot.lane.b32.xlu0 %v2007, 96
        %v2020 = vpop.permute.xlu0 %2019
        %2021 = vrot.lane.b32.xlu0 %v2008, 96
        %v2022 = vpop.permute.xlu0 %2021
        %2023 = vrot.lane.b32.xlu0 %v2009, 96
        %v2024 = vpop.permute.xlu0 %2023
        %2025 = vrot.lane.b32.xlu0 %v2010, 96
        %v2026 = vpop.permute.xlu0 %2025
        %v2028 = vsel %vm1279, %v1956, 0
        %v2031 = vsel %vm1279, %v1958, 0
        %v2034 = vsel %vm1279, %v1960, 0
        %v2037 = vsel %vm1279, %v1962, 0
        %v2040 = vsel %vm1279, %v1964, 0
        %v2043 = vsel %vm1279, %v1966, 0
        %v2046 = vsel %vm1279, %v1968, 0
        %v2049 = vsel %vm1279, %v1970, 0
        %v2052 = vsel %vm1279, %v2012, 0
        %v2055 = vsel %vm1279, %v2014, 0
        %v2058 = vsel %vm1279, %v2016, 0
        %v2061 = vsel %vm1279, %v2018, 0
        %v2064 = vsel %vm1279, %v2020, 0
        %v2067 = vsel %vm1279, %v2022, 0
        %v2070 = vsel %vm1279, %v2024, 0
        %v2073 = vsel %vm1279, %v2026, 0
        %2075 = vmatpush.bf16.xpose.msra.mxu0 %v2073
        %2076 = vmatpush.bf16.xpose.msra.mxu0 %v2070
        %2077 = vmatpush.bf16.xpose.msra.mxu0 %v2067
        %2078 = vmatpush.bf16.xpose.msra.mxu0 %v2064
        %2079 = vmatpush.bf16.xpose.msra.mxu0 %v2061
        %2080 = vmatpush.bf16.xpose.msra.mxu0 %v2058
        %2081 = vmatpush.bf16.xpose.msra.mxu0 %v2055
        %2082 = vmatpush.bf16.xpose.msra.mxu0 %v2052
        %2083 = vmatmul.bf16.gmra.mxu0 %v2028
        %v2084 = vpop.f32.mrf.mxu0
        %v2085 = vadd.f32 0.0, %v2084
        %v2086 = vpop.f32.mrf.mxu0
        %v2087 = vadd.f32 0.0, %v2086
        %2088 = vmatmul.bf16.gmra.mxu0 %v2031
        %v2089 = vpop.f32.mrf.mxu0
        %v2090 = vadd.f32 0.0, %v2089
        %v2091 = vpop.f32.mrf.mxu0
        %v2092 = vadd.f32 0.0, %v2091
        %2093 = vmatmul.bf16.gmra.mxu0 %v2034
        %v2094 = vpop.f32.mrf.mxu0
        %v2095 = vadd.f32 0.0, %v2094
        %v2096 = vpop.f32.mrf.mxu0
        %v2097 = vadd.f32 0.0, %v2096
        %2098 = vmatmul.bf16.gmra.mxu0 %v2037
        %v2099 = vpop.f32.mrf.mxu0
        %v2100 = vadd.f32 0.0, %v2099
        %v2101 = vpop.f32.mrf.mxu0
        %v2102 = vadd.f32 0.0, %v2101
        %2103 = vmatmul.bf16.gmra.mxu0 %v2040
        %v2104 = vpop.f32.mrf.mxu0
        %v2105 = vadd.f32 0.0, %v2104
        %v2106 = vpop.f32.mrf.mxu0
        %v2107 = vadd.f32 0.0, %v2106
        %2108 = vmatmul.bf16.gmra.mxu0 %v2043
        %v2109 = vpop.f32.mrf.mxu0
        %v2110 = vadd.f32 0.0, %v2109
        %v2111 = vpop.f32.mrf.mxu0
        %v2112 = vadd.f32 0.0, %v2111
        %2113 = vmatmul.bf16.gmra.mxu0 %v2046
        %v2114 = vpop.f32.mrf.mxu0
        %v2115 = vadd.f32 0.0, %v2114
        %v2116 = vpop.f32.mrf.mxu0
        %v2117 = vadd.f32 0.0, %v2116
        %2118 = vmatmul.bf16.gmra.mxu0 %v2049
        %v2119 = vpop.f32.mrf.mxu0
        %v2120 = vadd.f32 0.0, %v2119
        %v2121 = vpop.f32.mrf.mxu0
        %v2122 = vadd.f32 0.0, %v2121
        %2123 = vdwg.mxu0
        %2124 = vmax.xlane.f32.xlu0 %v2085
        %v2125 = vpop.xlane.xlu0 %2124
        %2126 = vmax.xlane.f32.xlu0 %v2087
        %v2127 = vpop.xlane.xlu0 %2126
        %2128 = vmax.xlane.f32.xlu0 %v2090
        %v2129 = vpop.xlane.xlu0 %2128
        %2130 = vmax.xlane.f32.xlu0 %v2092
        %v2131 = vpop.xlane.xlu0 %2130
        %2132 = vmax.xlane.f32.xlu0 %v2095
        %v2133 = vpop.xlane.xlu0 %2132
        %2134 = vmax.xlane.f32.xlu0 %v2097
        %v2135 = vpop.xlane.xlu0 %2134
        %2136 = vmax.xlane.f32.xlu0 %v2100
        %v2137 = vpop.xlane.xlu0 %2136
        %2138 = vmax.xlane.f32.xlu0 %v2102
        %v2139 = vpop.xlane.xlu0 %2138
        %2140 = vmax.xlane.f32.xlu0 %v2105
        %v2141 = vpop.xlane.xlu0 %2140
        %2142 = vmax.xlane.f32.xlu0 %v2107
        %v2143 = vpop.xlane.xlu0 %2142
        %2144 = vmax.xlane.f32.xlu0 %v2110
        %v2145 = vpop.xlane.xlu0 %2144
        %2146 = vmax.xlane.f32.xlu0 %v2112
        %v2147 = vpop.xlane.xlu0 %2146
        %2148 = vmax.xlane.f32.xlu0 %v2115
        %v2149 = vpop.xlane.xlu0 %2148
        %2150 = vmax.xlane.f32.xlu0 %v2117
        %v2151 = vpop.xlane.xlu0 %2150
        %2152 = vmax.xlane.f32.xlu0 %v2120
        %v2153 = vpop.xlane.xlu0 %2152
        %2154 = vmax.xlane.f32.xlu0 %v2122
        %v2155 = vpop.xlane.xlu0 %2154
        %v2156 = vsub.f32 %v2085, %v2125
        %v2157 = vsub.f32 %v2087, %v2127
        %v2158 = vsub.f32 %v2090, %v2129
        %v2159 = vsub.f32 %v2092, %v2131
        %v2160 = vsub.f32 %v2095, %v2133
        %v2161 = vsub.f32 %v2097, %v2135
        %v2162 = vsub.f32 %v2100, %v2137
        %v2163 = vsub.f32 %v2102, %v2139
        %v2164 = vsub.f32 %v2105, %v2141
        %v2165 = vsub.f32 %v2107, %v2143
        %v2166 = vsub.f32 %v2110, %v2145
        %v2167 = vsub.f32 %v2112, %v2147
        %v2168 = vsub.f32 %v2115, %v2149
        %v2169 = vsub.f32 %v2117, %v2151
        %v2170 = vsub.f32 %v2120, %v2153
        %v2171 = vsub.f32 %v2122, %v2155
        %v2172 = vmul.f32 %v2156, 1.442695
        %v2173 = vpow.pop %v2172
        %v2174 = vmul.f32 %v2157, 1.442695
        %v2175 = vpow.pop %v2174
        %v2176 = vmul.f32 %v2158, 1.442695
        %v2177 = vpow.pop %v2176
        %v2178 = vmul.f32 %v2159, 1.442695
        %v2179 = vpow.pop %v2178
        %v2180 = vmul.f32 %v2160, 1.442695
        %v2181 = vpow.pop %v2180
        %v2182 = vmul.f32 %v2161, 1.442695
        %v2183 = vpow.pop %v2182
        %v2184 = vmul.f32 %v2162, 1.442695
        %v2185 = vpow.pop %v2184
        %v2186 = vmul.f32 %v2163, 1.442695
        %v2187 = vpow.pop %v2186
        %v2188 = vmul.f32 %v2164, 1.442695
        %v2189 = vpow.pop %v2188
        %v2190 = vmul.f32 %v2165, 1.442695
        %v2191 = vpow.pop %v2190
        %v2192 = vmul.f32 %v2166, 1.442695
        %v2193 = vpow.pop %v2192
        %v2194 = vmul.f32 %v2167, 1.442695
        %v2195 = vpow.pop %v2194
        %v2196 = vmul.f32 %v2168, 1.442695
        %v2197 = vpow.pop %v2196
        %v2198 = vmul.f32 %v2169, 1.442695
        %v2199 = vpow.pop %v2198
        %v2200 = vmul.f32 %v2170, 1.442695
        %v2201 = vpow.pop %v2200
        %v2202 = vmul.f32 %v2171, 1.442695
        %v2203 = vpow.pop %v2202
        %2204 = vadd.xlane.f32.xlu0 %v2173
        %v2205 = vpop.xlane.xlu0 %2204
        %2206 = vadd.xlane.f32.xlu0 %v2175
        %v2207 = vpop.xlane.xlu0 %2206
        %2208 = vadd.xlane.f32.xlu0 %v2177
        %v2209 = vpop.xlane.xlu0 %2208
        %2210 = vadd.xlane.f32.xlu0 %v2179
        %v2211 = vpop.xlane.xlu0 %2210
        %2212 = vadd.xlane.f32.xlu0 %v2181
        %v2213 = vpop.xlane.xlu0 %2212
        %2214 = vadd.xlane.f32.xlu0 %v2183
        %v2215 = vpop.xlane.xlu0 %2214
        %2216 = vadd.xlane.f32.xlu0 %v2185
        %v2217 = vpop.xlane.xlu0 %2216
        %2218 = vadd.xlane.f32.xlu0 %v2187
        %v2219 = vpop.xlane.xlu0 %2218
        %2220 = vadd.xlane.f32.xlu0 %v2189
        %v2221 = vpop.xlane.xlu0 %2220
        %2222 = vadd.xlane.f32.xlu0 %v2191
        %v2223 = vpop.xlane.xlu0 %2222
        %2224 = vadd.xlane.f32.xlu0 %v2193
        %v2225 = vpop.xlane.xlu0 %2224
        %2226 = vadd.xlane.f32.xlu0 %v2195
        %v2227 = vpop.xlane.xlu0 %2226
        %2228 = vadd.xlane.f32.xlu0 %v2197
        %v2229 = vpop.xlane.xlu0 %2228
        %2230 = vadd.xlane.f32.xlu0 %v2199
        %v2231 = vpop.xlane.xlu0 %2230
        %2232 = vadd.xlane.f32.xlu0 %v2201
        %v2233 = vpop.xlane.xlu0 %2232
        %2234 = vadd.xlane.f32.xlu0 %v2203
        %v2235 = vpop.xlane.xlu0 %2234
        %v2236 = vpack.c.bf16 %v2175, %v2173
        %v2237 = vpack.c.bf16 %v2179, %v2177
        %v2238 = vpack.c.bf16 %v2183, %v2181
        %v2239 = vpack.c.bf16 %v2187, %v2185
        %v2240 = vpack.c.bf16 %v2191, %v2189
        %v2241 = vpack.c.bf16 %v2195, %v2193
        %v2242 = vpack.c.bf16 %v2199, %v2197
        %v2243 = vpack.c.bf16 %v2203, %v2201
        %v2260 = vunpack.c.l.b16 %v1899
        %v2261 = vunpack.c.l.b16 %v1900
        %v2262 = vunpack.c.l.b16 %v1901
        %v2263 = vunpack.c.l.b16 %v1902
        %v2264 = vunpack.c.l.b16 %v1903
        %v2265 = vunpack.c.l.b16 %v1904
        %v2266 = vunpack.c.l.b16 %v1905
        %v2267 = vunpack.c.l.b16 %v1906
        %v2268 = vunpack.c.l.b16 %v1907
        %v2269 = vunpack.c.l.b16 %v1908
        %v2270 = vunpack.c.l.b16 %v1909
        %v2271 = vunpack.c.l.b16 %v1910
        %v2272 = vunpack.c.l.b16 %v1911
        %v2273 = vunpack.c.l.b16 %v1912
        %v2274 = vunpack.c.l.b16 %v1913
        %v2275 = vunpack.c.l.b16 %v1914
        %v2276 = vpack.c.b16 %v2261, %v2260
        %v2277 = vpack.c.b16 %v2263, %v2262
        %v2278 = vpack.c.b16 %v2265, %v2264
        %v2279 = vpack.c.b16 %v2267, %v2266
        %v2280 = vpack.c.b16 %v2269, %v2268
        %v2281 = vpack.c.b16 %v2271, %v2270
        %v2282 = vpack.c.b16 %v2273, %v2272
        %v2283 = vpack.c.b16 %v2275, %v2274
        %2284 = vrot.lane.b32.xlu0 %v2276, 96
        %v2285 = vpop.permute.xlu0 %2284
        %2286 = vrot.lane.b32.xlu0 %v2277, 96
        %v2287 = vpop.permute.xlu0 %2286
        %2288 = vrot.lane.b32.xlu0 %v2278, 96
        %v2289 = vpop.permute.xlu0 %2288
        %2290 = vrot.lane.b32.xlu0 %v2279, 96
        %v2291 = vpop.permute.xlu0 %2290
        %2292 = vrot.lane.b32.xlu0 %v2280, 96
        %v2293 = vpop.permute.xlu0 %2292
        %2294 = vrot.lane.b32.xlu0 %v2281, 96
        %v2295 = vpop.permute.xlu0 %2294
        %2296 = vrot.lane.b32.xlu0 %v2282, 96
        %v2297 = vpop.permute.xlu0 %2296
        %2298 = vrot.lane.b32.xlu0 %v2283, 96
        %v2299 = vpop.permute.xlu0 %2298
        %2308 = vmatpush.bf16.msra.mxu0 %v2299
        %2309 = vmatpush.bf16.msra.mxu0 %v2297
        %2310 = vmatpush.bf16.msra.mxu0 %v2295
        %2311 = vmatpush.bf16.msra.mxu0 %v2293
        %2312 = vmatpush.bf16.msra.mxu0 %v2291
        %2313 = vmatpush.bf16.msra.mxu0 %v2289
        %2314 = vmatpush.bf16.msra.mxu0 %v2287
        %2315 = vmatpush.bf16.msra.mxu0 %v2285
        %2316 = vmatmul.bf16.gmra.mxu0 %v2236
        %v2317 = vpop.f32.mrf.mxu0
        %v2318 = vadd.f32 0.0, %v2317
        %v2319 = vpop.f32.mrf.mxu0
        %v2320 = vadd.f32 0.0, %v2319
        %2321 = vmatmul.bf16.gmra.mxu0 %v2237
        %v2322 = vpop.f32.mrf.mxu0
        %v2323 = vadd.f32 0.0, %v2322
        %v2324 = vpop.f32.mrf.mxu0
        %v2325 = vadd.f32 0.0, %v2324
        %2326 = vmatmul.bf16.gmra.mxu0 %v2238
        %v2327 = vpop.f32.mrf.mxu0
        %v2328 = vadd.f32 0.0, %v2327
        %v2329 = vpop.f32.mrf.mxu0
        %v2330 = vadd.f32 0.0, %v2329
        %2331 = vmatmul.bf16.gmra.mxu0 %v2239
        %v2332 = vpop.f32.mrf.mxu0
        %v2333 = vadd.f32 0.0, %v2332
        %v2334 = vpop.f32.mrf.mxu0
        %v2335 = vadd.f32 0.0, %v2334
        %2336 = vmatmul.bf16.gmra.mxu0 %v2240
        %v2337 = vpop.f32.mrf.mxu0
        %v2338 = vadd.f32 0.0, %v2337
        %v2339 = vpop.f32.mrf.mxu0
        %v2340 = vadd.f32 0.0, %v2339
        %2341 = vmatmul.bf16.gmra.mxu0 %v2241
        %v2342 = vpop.f32.mrf.mxu0
        %v2343 = vadd.f32 0.0, %v2342
        %v2344 = vpop.f32.mrf.mxu0
        %v2345 = vadd.f32 0.0, %v2344
        %2346 = vmatmul.bf16.gmra.mxu0 %v2242
        %v2347 = vpop.f32.mrf.mxu0
        %v2348 = vadd.f32 0.0, %v2347
        %v2349 = vpop.f32.mrf.mxu0
        %v2350 = vadd.f32 0.0, %v2349
        %2351 = vmatmul.bf16.gmra.mxu0 %v2243
        %v2352 = vpop.f32.mrf.mxu0
        %v2353 = vadd.f32 0.0, %v2352
        %v2354 = vpop.f32.mrf.mxu0
        %v2355 = vadd.f32 0.0, %v2354
        %2356 = vdwg.mxu0
        %v2357 = vrcp.pop %v2205
        %v2358 = vmul.f32 %v2205, %v2357
        %v2359 = vsub.f32 1.0, %v2358
        %v2360 = vmul.f32 %v2357, %v2359
        %v2361 = vadd.f32 %v2357, %v2360
        %vm2362 = vweird.f32 %v2205
        %vm2363 = vweird.f32 %v2357
        %vm2364 = vmor %vm2362, %vm2363
        %v2365 = vsel %vm2364, %v2357, %v2361
        %v2366 = vand.u32 2147483647, %v2205
        %vm2367 = vcmp.eq.f32.partialorder %v2366, 8.507059e+37
        %v2368 = vand.u32 %v2205, 2147483648
        %v2369 = vor.u32 1.1754944e-38, %v2368
        %v2370 = vsel %vm2367, %v2369, %v2365
        %v2371 = vrcp.pop %v2207
        %v2372 = vmul.f32 %v2207, %v2371
        %v2373 = vsub.f32 1.0, %v2372
        %v2374 = vmul.f32 %v2371, %v2373
        %v2375 = vadd.f32 %v2371, %v2374
        %vm2376 = vweird.f32 %v2207
        %vm2377 = vweird.f32 %v2371
        %vm2378 = vmor %vm2376, %vm2377
        %v2379 = vsel %vm2378, %v2371, %v2375
        %v2380 = vand.u32 2147483647, %v2207
        %vm2381 = vcmp.eq.f32.partialorder %v2380, 8.507059e+37
        %v2382 = vand.u32 %v2207, 2147483648
        %v2383 = vor.u32 1.1754944e-38, %v2382
        %v2384 = vsel %vm2381, %v2383, %v2379
        %v2385 = vrcp.pop %v2209
        %v2386 = vmul.f32 %v2209, %v2385
        %v2387 = vsub.f32 1.0, %v2386
        %v2388 = vmul.f32 %v2385, %v2387
        %v2389 = vadd.f32 %v2385, %v2388
        %vm2390 = vweird.f32 %v2209
        %vm2391 = vweird.f32 %v2385
        %vm2392 = vmor %vm2390, %vm2391
        %v2393 = vsel %vm2392, %v2385, %v2389
        %v2394 = vand.u32 2147483647, %v2209
        %vm2395 = vcmp.eq.f32.partialorder %v2394, 8.507059e+37
        %v2396 = vand.u32 %v2209, 2147483648
        %v2397 = vor.u32 1.1754944e-38, %v2396
        %v2398 = vsel %vm2395, %v2397, %v2393
        %v2399 = vrcp.pop %v2211
        %v2400 = vmul.f32 %v2211, %v2399
        %v2401 = vsub.f32 1.0, %v2400
        %v2402 = vmul.f32 %v2399, %v2401
        %v2403 = vadd.f32 %v2399, %v2402
        %vm2404 = vweird.f32 %v2211
        %vm2405 = vweird.f32 %v2399
        %vm2406 = vmor %vm2404, %vm2405
        %v2407 = vsel %vm2406, %v2399, %v2403
        %v2408 = vand.u32 2147483647, %v2211
        %vm2409 = vcmp.eq.f32.partialorder %v2408, 8.507059e+37
        %v2410 = vand.u32 %v2211, 2147483648
        %v2411 = vor.u32 1.1754944e-38, %v2410
        %v2412 = vsel %vm2409, %v2411, %v2407
        %v2413 = vrcp.pop %v2213
        %v2414 = vmul.f32 %v2213, %v2413
        %v2415 = vsub.f32 1.0, %v2414
        %v2416 = vmul.f32 %v2413, %v2415
        %v2417 = vadd.f32 %v2413, %v2416
        %vm2418 = vweird.f32 %v2213
        %vm2419 = vweird.f32 %v2413
        %vm2420 = vmor %vm2418, %vm2419
        %v2421 = vsel %vm2420, %v2413, %v2417
        %v2422 = vand.u32 2147483647, %v2213
        %vm2423 = vcmp.eq.f32.partialorder %v2422, 8.507059e+37
        %v2424 = vand.u32 %v2213, 2147483648
        %v2425 = vor.u32 1.1754944e-38, %v2424
        %v2426 = vsel %vm2423, %v2425, %v2421
        %v2427 = vrcp.pop %v2215
        %v2428 = vmul.f32 %v2215, %v2427
        %v2429 = vsub.f32 1.0, %v2428
        %v2430 = vmul.f32 %v2427, %v2429
        %v2431 = vadd.f32 %v2427, %v2430
        %vm2432 = vweird.f32 %v2215
        %vm2433 = vweird.f32 %v2427
        %vm2434 = vmor %vm2432, %vm2433
        %v2435 = vsel %vm2434, %v2427, %v2431
        %v2436 = vand.u32 2147483647, %v2215
        %vm2437 = vcmp.eq.f32.partialorder %v2436, 8.507059e+37
        %v2438 = vand.u32 %v2215, 2147483648
        %v2439 = vor.u32 1.1754944e-38, %v2438
        %v2440 = vsel %vm2437, %v2439, %v2435
        %v2441 = vrcp.pop %v2217
        %v2442 = vmul.f32 %v2217, %v2441
        %v2443 = vsub.f32 1.0, %v2442
        %v2444 = vmul.f32 %v2441, %v2443
        %v2445 = vadd.f32 %v2441, %v2444
        %vm2446 = vweird.f32 %v2217
        %vm2447 = vweird.f32 %v2441
        %vm2448 = vmor %vm2446, %vm2447
        %v2449 = vsel %vm2448, %v2441, %v2445
        %v2450 = vand.u32 2147483647, %v2217
        %vm2451 = vcmp.eq.f32.partialorder %v2450, 8.507059e+37
        %v2452 = vand.u32 %v2217, 2147483648
        %v2453 = vor.u32 1.1754944e-38, %v2452
        %v2454 = vsel %vm2451, %v2453, %v2449
        %v2455 = vrcp.pop %v2219
        %v2456 = vmul.f32 %v2219, %v2455
        %v2457 = vsub.f32 1.0, %v2456
        %v2458 = vmul.f32 %v2455, %v2457
        %v2459 = vadd.f32 %v2455, %v2458
        %vm2460 = vweird.f32 %v2219
        %vm2461 = vweird.f32 %v2455
        %vm2462 = vmor %vm2460, %vm2461
        %v2463 = vsel %vm2462, %v2455, %v2459
        %v2464 = vand.u32 2147483647, %v2219
        %vm2465 = vcmp.eq.f32.partialorder %v2464, 8.507059e+37
        %v2466 = vand.u32 %v2219, 2147483648
        %v2467 = vor.u32 1.1754944e-38, %v2466
        %v2468 = vsel %vm2465, %v2467, %v2463
        %v2469 = vrcp.pop %v2221
        %v2470 = vmul.f32 %v2221, %v2469
        %v2471 = vsub.f32 1.0, %v2470
        %v2472 = vmul.f32 %v2469, %v2471
        %v2473 = vadd.f32 %v2469, %v2472
        %vm2474 = vweird.f32 %v2221
        %vm2475 = vweird.f32 %v2469
        %vm2476 = vmor %vm2474, %vm2475
        %v2477 = vsel %vm2476, %v2469, %v2473
        %v2478 = vand.u32 2147483647, %v2221
        %vm2479 = vcmp.eq.f32.partialorder %v2478, 8.507059e+37
        %v2480 = vand.u32 %v2221, 2147483648
        %v2481 = vor.u32 1.1754944e-38, %v2480
        %v2482 = vsel %vm2479, %v2481, %v2477
        %v2483 = vrcp.pop %v2223
        %v2484 = vmul.f32 %v2223, %v2483
        %v2485 = vsub.f32 1.0, %v2484
        %v2486 = vmul.f32 %v2483, %v2485
        %v2487 = vadd.f32 %v2483, %v2486
        %vm2488 = vweird.f32 %v2223
        %vm2489 = vweird.f32 %v2483
        %vm2490 = vmor %vm2488, %vm2489
        %v2491 = vsel %vm2490, %v2483, %v2487
        %v2492 = vand.u32 2147483647, %v2223
        %vm2493 = vcmp.eq.f32.partialorder %v2492, 8.507059e+37
        %v2494 = vand.u32 %v2223, 2147483648
        %v2495 = vor.u32 1.1754944e-38, %v2494
        %v2496 = vsel %vm2493, %v2495, %v2491
        %v2497 = vrcp.pop %v2225
        %v2498 = vmul.f32 %v2225, %v2497
        %v2499 = vsub.f32 1.0, %v2498
        %v2500 = vmul.f32 %v2497, %v2499
        %v2501 = vadd.f32 %v2497, %v2500
        %vm2502 = vweird.f32 %v2225
        %vm2503 = vweird.f32 %v2497
        %vm2504 = vmor %vm2502, %vm2503
        %v2505 = vsel %vm2504, %v2497, %v2501
        %v2506 = vand.u32 2147483647, %v2225
        %vm2507 = vcmp.eq.f32.partialorder %v2506, 8.507059e+37
        %v2508 = vand.u32 %v2225, 2147483648
        %v2509 = vor.u32 1.1754944e-38, %v2508
        %v2510 = vsel %vm2507, %v2509, %v2505
        %v2511 = vrcp.pop %v2227
        %v2512 = vmul.f32 %v2227, %v2511
        %v2513 = vsub.f32 1.0, %v2512
        %v2514 = vmul.f32 %v2511, %v2513
        %v2515 = vadd.f32 %v2511, %v2514
        %vm2516 = vweird.f32 %v2227
        %vm2517 = vweird.f32 %v2511
        %vm2518 = vmor %vm2516, %vm2517
        %v2519 = vsel %vm2518, %v2511, %v2515
        %v2520 = vand.u32 2147483647, %v2227
        %vm2521 = vcmp.eq.f32.partialorder %v2520, 8.507059e+37
        %v2522 = vand.u32 %v2227, 2147483648
        %v2523 = vor.u32 1.1754944e-38, %v2522
        %v2524 = vsel %vm2521, %v2523, %v2519
        %v2525 = vrcp.pop %v2229
        %v2526 = vmul.f32 %v2229, %v2525
        %v2527 = vsub.f32 1.0, %v2526
        %v2528 = vmul.f32 %v2525, %v2527
        %v2529 = vadd.f32 %v2525, %v2528
        %vm2530 = vweird.f32 %v2229
        %vm2531 = vweird.f32 %v2525
        %vm2532 = vmor %vm2530, %vm2531
        %v2533 = vsel %vm2532, %v2525, %v2529
        %v2534 = vand.u32 2147483647, %v2229
        %vm2535 = vcmp.eq.f32.partialorder %v2534, 8.507059e+37
        %v2536 = vand.u32 %v2229, 2147483648
        %v2537 = vor.u32 1.1754944e-38, %v2536
        %v2538 = vsel %vm2535, %v2537, %v2533
        %v2539 = vrcp.pop %v2231
        %v2540 = vmul.f32 %v2231, %v2539
        %v2541 = vsub.f32 1.0, %v2540
        %v2542 = vmul.f32 %v2539, %v2541
        %v2543 = vadd.f32 %v2539, %v2542
        %vm2544 = vweird.f32 %v2231
        %vm2545 = vweird.f32 %v2539
        %vm2546 = vmor %vm2544, %vm2545
        %v2547 = vsel %vm2546, %v2539, %v2543
        %v2548 = vand.u32 2147483647, %v2231
        %vm2549 = vcmp.eq.f32.partialorder %v2548, 8.507059e+37
        %v2550 = vand.u32 %v2231, 2147483648
        %v2551 = vor.u32 1.1754944e-38, %v2550
        %v2552 = vsel %vm2549, %v2551, %v2547
        %v2553 = vrcp.pop %v2233
        %v2554 = vmul.f32 %v2233, %v2553
        %v2555 = vsub.f32 1.0, %v2554
        %v2556 = vmul.f32 %v2553, %v2555
        %v2557 = vadd.f32 %v2553, %v2556
        %vm2558 = vweird.f32 %v2233
        %vm2559 = vweird.f32 %v2553
        %vm2560 = vmor %vm2558, %vm2559
        %v2561 = vsel %vm2560, %v2553, %v2557
        %v2562 = vand.u32 2147483647, %v2233
        %vm2563 = vcmp.eq.f32.partialorder %v2562, 8.507059e+37
        %v2564 = vand.u32 %v2233, 2147483648
        %v2565 = vor.u32 1.1754944e-38, %v2564
        %v2566 = vsel %vm2563, %v2565, %v2561
        %v2567 = vrcp.pop %v2235
        %v2568 = vmul.f32 %v2235, %v2567
        %v2569 = vsub.f32 1.0, %v2568
        %v2570 = vmul.f32 %v2567, %v2569
        %v2571 = vadd.f32 %v2567, %v2570
        %vm2572 = vweird.f32 %v2235
        %vm2573 = vweird.f32 %v2567
        %vm2574 = vmor %vm2572, %vm2573
        %v2575 = vsel %vm2574, %v2567, %v2571
        %v2576 = vand.u32 2147483647, %v2235
        %vm2577 = vcmp.eq.f32.partialorder %v2576, 8.507059e+37
        %v2578 = vand.u32 %v2235, 2147483648
        %v2579 = vor.u32 1.1754944e-38, %v2578
        %v2580 = vsel %vm2577, %v2579, %v2575
        %v2581 = vmul.f32 %v2318, %v2370
        %v2582 = vmul.f32 %v2320, %v2384
        %v2583 = vmul.f32 %v2323, %v2398
        %v2584 = vmul.f32 %v2325, %v2412
        %v2585 = vmul.f32 %v2328, %v2426
        %v2586 = vmul.f32 %v2330, %v2440
        %v2587 = vmul.f32 %v2333, %v2454
        %v2588 = vmul.f32 %v2335, %v2468
        %v2589 = vmul.f32 %v2338, %v2482
        %v2590 = vmul.f32 %v2340, %v2496
        %v2591 = vmul.f32 %v2343, %v2510
        %v2592 = vmul.f32 %v2345, %v2524
        %v2593 = vmul.f32 %v2348, %v2538
        %v2594 = vmul.f32 %v2350, %v2552
        %v2595 = vmul.f32 %v2353, %v2566
        %v2596 = vmul.f32 %v2355, %v2580
        %v2597 = vpack.c.bf16 %v2581, %v2581
        %v2598 = vpack.c.bf16 %v2582, %v2582
        %v2599 = vpack.c.bf16 %v2583, %v2583
        %v2600 = vpack.c.bf16 %v2584, %v2584
        %v2601 = vpack.c.bf16 %v2585, %v2585
        %v2602 = vpack.c.bf16 %v2586, %v2586
        %v2603 = vpack.c.bf16 %v2587, %v2587
        %v2604 = vpack.c.bf16 %v2588, %v2588
        %v2605 = vpack.c.bf16 %v2589, %v2589
        %v2606 = vpack.c.bf16 %v2590, %v2590
        %v2607 = vpack.c.bf16 %v2591, %v2591
        %v2608 = vpack.c.bf16 %v2592, %v2592
        %v2609 = vpack.c.bf16 %v2593, %v2593
        %v2610 = vpack.c.bf16 %v2594, %v2594
        %v2611 = vpack.c.bf16 %v2595, %v2595
        %v2612 = vpack.c.bf16 %v2596, %v2596
        %2629 = vrot.lane.b32.xlu0 %v2597, 32
        %v2630 = vpop.permute.xlu0 %2629
        %2631 = vrot.lane.b32.xlu0 %v2598, 32
        %v2632 = vpop.permute.xlu0 %2631
        %2633 = vrot.lane.b32.xlu0 %v2599, 32
        %v2634 = vpop.permute.xlu0 %2633
        %2635 = vrot.lane.b32.xlu0 %v2600, 32
        %v2636 = vpop.permute.xlu0 %2635
        %2637 = vrot.lane.b32.xlu0 %v2601, 32
        %v2638 = vpop.permute.xlu0 %2637
        %2639 = vrot.lane.b32.xlu0 %v2602, 32
        %v2640 = vpop.permute.xlu0 %2639
        %2641 = vrot.lane.b32.xlu0 %v2603, 32
        %v2642 = vpop.permute.xlu0 %2641
        %2643 = vrot.lane.b32.xlu0 %v2604, 32
        %v2644 = vpop.permute.xlu0 %2643
        %2645 = vrot.lane.b32.xlu0 %v2605, 32
        %v2646 = vpop.permute.xlu0 %2645
        %2647 = vrot.lane.b32.xlu0 %v2606, 32
        %v2648 = vpop.permute.xlu0 %2647
        %2649 = vrot.lane.b32.xlu0 %v2607, 32
        %v2650 = vpop.permute.xlu0 %2649
        %2651 = vrot.lane.b32.xlu0 %v2608, 32
        %v2652 = vpop.permute.xlu0 %2651
        %2653 = vrot.lane.b32.xlu0 %v2609, 32
        %v2654 = vpop.permute.xlu0 %2653
        %2655 = vrot.lane.b32.xlu0 %v2610, 32
        %v2656 = vpop.permute.xlu0 %2655
        %2657 = vrot.lane.b32.xlu0 %v2611, 32
        %v2658 = vpop.permute.xlu0 %2657
        %2659 = vrot.lane.b32.xlu0 %v2612, 32
        %v2660 = vpop.permute.xlu0 %2659
        %vm2677 = vcmask 519424
        %2678 = vst.msk [vmem:[#allocation5] sm:$0xf] %vm2677, %v2630
        %2679 = vst.msk [vmem:[#allocation5 + $0x4] sm:$0xf] %vm2677, %v2632
        %2680 = vst.msk [vmem:[#allocation5 + $0x8] sm:$0xf] %vm2677, %v2634
        %2681 = vst.msk [vmem:[#allocation5 + $0xc] sm:$0xf] %vm2677, %v2636
        %2682 = vst.msk [vmem:[#allocation5 + $0x10] sm:$0xf] %vm2677, %v2638
        %2683 = vst.msk [vmem:[#allocation5 + $0x14] sm:$0xf] %vm2677, %v2640
        %2684 = vst.msk [vmem:[#allocation5 + $0x18] sm:$0xf] %vm2677, %v2642
        %2685 = vst.msk [vmem:[#allocation5 + $0x1c] sm:$0xf] %vm2677, %v2644
        %2686 = vst.msk [vmem:[#allocation5 + $0x20] sm:$0xf] %vm2677, %v2646
        %2687 = vst.msk [vmem:[#allocation5 + $0x24] sm:$0xf] %vm2677, %v2648
        %2688 = vst.msk [vmem:[#allocation5 + $0x28] sm:$0xf] %vm2677, %v2650
        %2689 = vst.msk [vmem:[#allocation5 + $0x2c] sm:$0xf] %vm2677, %v2652
        %2690 = vst.msk [vmem:[#allocation5 + $0x30] sm:$0xf] %vm2677, %v2654
        %2691 = vst.msk [vmem:[#allocation5 + $0x34] sm:$0xf] %vm2677, %v2656
        %2692 = vst.msk [vmem:[#allocation5 + $0x38] sm:$0xf] %vm2677, %v2658
        %2693 = vst.msk [vmem:[#allocation5 + $0x3c] sm:$0xf] %vm2677, %v2660
        %v2694 = vld [vmem:[#allocation2] sm:$0xf]
        %v2695 = vld [vmem:[#allocation2 + $0x4] sm:$0xf]
        %v2696 = vld [vmem:[#allocation2 + $0x8] sm:$0xf]
        %v2697 = vld [vmem:[#allocation2 + $0xc] sm:$0xf]
        %v2698 = vld [vmem:[#allocation2 + $0x10] sm:$0xf]
        %v2699 = vld [vmem:[#allocation2 + $0x14] sm:$0xf]
        %v2700 = vld [vmem:[#allocation2 + $0x18] sm:$0xf]
        %v2701 = vld [vmem:[#allocation2 + $0x1c] sm:$0xf]
        %v2702 = vld [vmem:[#allocation2 + $0x20] sm:$0xf]
        %v2703 = vld [vmem:[#allocation2 + $0x24] sm:$0xf]
        %v2704 = vld [vmem:[#allocation2 + $0x28] sm:$0xf]
        %v2705 = vld [vmem:[#allocation2 + $0x2c] sm:$0xf]
        %v2706 = vld [vmem:[#allocation2 + $0x30] sm:$0xf]
        %v2707 = vld [vmem:[#allocation2 + $0x34] sm:$0xf]
        %v2708 = vld [vmem:[#allocation2 + $0x38] sm:$0xf]
        %v2709 = vld [vmem:[#allocation2 + $0x3c] sm:$0xf]
        %v2710 = vld [vmem:[#allocation3] sm:$0xf]
        %v2711 = vld [vmem:[#allocation3 + $0x4] sm:$0xf]
        %v2712 = vld [vmem:[#allocation3 + $0x8] sm:$0xf]
        %v2713 = vld [vmem:[#allocation3 + $0xc] sm:$0xf]
        %v2714 = vld [vmem:[#allocation3 + $0x10] sm:$0xf]
        %v2715 = vld [vmem:[#allocation3 + $0x14] sm:$0xf]
        %v2716 = vld [vmem:[#allocation3 + $0x18] sm:$0xf]
        %v2717 = vld [vmem:[#allocation3 + $0x1c] sm:$0xf]
        %v2718 = vld [vmem:[#allocation3 + $0x20] sm:$0xf]
        %v2719 = vld [vmem:[#allocation3 + $0x24] sm:$0xf]
        %v2720 = vld [vmem:[#allocation3 + $0x28] sm:$0xf]
        %v2721 = vld [vmem:[#allocation3 + $0x2c] sm:$0xf]
        %v2722 = vld [vmem:[#allocation3 + $0x30] sm:$0xf]
        %v2723 = vld [vmem:[#allocation3 + $0x34] sm:$0xf]
        %v2724 = vld [vmem:[#allocation3 + $0x38] sm:$0xf]
        %v2725 = vld [vmem:[#allocation3 + $0x3c] sm:$0xf]
        %v2726 = vld [vmem:[#allocation4] sm:$0xf]
        %v2727 = vld [vmem:[#allocation4 + $0x4] sm:$0xf]
        %v2728 = vld [vmem:[#allocation4 + $0x8] sm:$0xf]
        %v2729 = vld [vmem:[#allocation4 + $0xc] sm:$0xf]
        %v2730 = vld [vmem:[#allocation4 + $0x10] sm:$0xf]
        %v2731 = vld [vmem:[#allocation4 + $0x14] sm:$0xf]
        %v2732 = vld [vmem:[#allocation4 + $0x18] sm:$0xf]
        %v2733 = vld [vmem:[#allocation4 + $0x1c] sm:$0xf]
        %v2734 = vld [vmem:[#allocation4 + $0x20] sm:$0xf]
        %v2735 = vld [vmem:[#allocation4 + $0x24] sm:$0xf]
        %v2736 = vld [vmem:[#allocation4 + $0x28] sm:$0xf]
        %v2737 = vld [vmem:[#allocation4 + $0x2c] sm:$0xf]
        %v2738 = vld [vmem:[#allocation4 + $0x30] sm:$0xf]
        %v2739 = vld [vmem:[#allocation4 + $0x34] sm:$0xf]
        %v2740 = vld [vmem:[#allocation4 + $0x38] sm:$0xf]
        %v2741 = vld [vmem:[#allocation4 + $0x3c] sm:$0xf]
        %v2758 = vunpack.c.l.b16 %v2694
        %v2759 = vunpack.c.l.b16 %v2695
        %v2760 = vunpack.c.l.b16 %v2696
        %v2761 = vunpack.c.l.b16 %v2697
        %v2762 = vunpack.c.l.b16 %v2698
        %v2763 = vunpack.c.l.b16 %v2699
        %v2764 = vunpack.c.l.b16 %v2700
        %v2765 = vunpack.c.l.b16 %v2701
        %v2766 = vunpack.c.l.b16 %v2702
        %v2767 = vunpack.c.l.b16 %v2703
        %v2768 = vunpack.c.l.b16 %v2704
        %v2769 = vunpack.c.l.b16 %v2705
        %v2770 = vunpack.c.l.b16 %v2706
        %v2771 = vunpack.c.l.b16 %v2707
        %v2772 = vunpack.c.l.b16 %v2708
        %v2773 = vunpack.c.l.b16 %v2709
        %v2774 = vpack.c.b16 %v2759, %v2758
        %v2775 = vpack.c.b16 %v2761, %v2760
        %v2776 = vpack.c.b16 %v2763, %v2762
        %v2777 = vpack.c.b16 %v2765, %v2764
        %v2778 = vpack.c.b16 %v2767, %v2766
        %v2779 = vpack.c.b16 %v2769, %v2768
        %v2780 = vpack.c.b16 %v2771, %v2770
        %v2781 = vpack.c.b16 %v2773, %v2772
        %2782 = vrot.lane.b32.xlu0 %v2774, 64
        %v2783 = vpop.permute.xlu0 %2782
        %2784 = vrot.lane.b32.xlu0 %v2775, 64
        %v2785 = vpop.permute.xlu0 %2784
        %2786 = vrot.lane.b32.xlu0 %v2776, 64
        %v2787 = vpop.permute.xlu0 %2786
        %2788 = vrot.lane.b32.xlu0 %v2777, 64
        %v2789 = vpop.permute.xlu0 %2788
        %2790 = vrot.lane.b32.xlu0 %v2778, 64
        %v2791 = vpop.permute.xlu0 %2790
        %2792 = vrot.lane.b32.xlu0 %v2779, 64
        %v2793 = vpop.permute.xlu0 %2792
        %2794 = vrot.lane.b32.xlu0 %v2780, 64
        %v2795 = vpop.permute.xlu0 %2794
        %2796 = vrot.lane.b32.xlu0 %v2781, 64
        %v2797 = vpop.permute.xlu0 %2796
        %v2814 = vunpack.c.l.b16 %v2710
        %v2815 = vunpack.c.l.b16 %v2711
        %v2816 = vunpack.c.l.b16 %v2712
        %v2817 = vunpack.c.l.b16 %v2713
        %v2818 = vunpack.c.l.b16 %v2714
        %v2819 = vunpack.c.l.b16 %v2715
        %v2820 = vunpack.c.l.b16 %v2716
        %v2821 = vunpack.c.l.b16 %v2717
        %v2822 = vunpack.c.l.b16 %v2718
        %v2823 = vunpack.c.l.b16 %v2719
        %v2824 = vunpack.c.l.b16 %v2720
        %v2825 = vunpack.c.l.b16 %v2721
        %v2826 = vunpack.c.l.b16 %v2722
        %v2827 = vunpack.c.l.b16 %v2723
        %v2828 = vunpack.c.l.b16 %v2724
        %v2829 = vunpack.c.l.b16 %v2725
        %v2830 = vpack.c.b16 %v2815, %v2814
        %v2831 = vpack.c.b16 %v2817, %v2816
        %v2832 = vpack.c.b16 %v2819, %v2818
        %v2833 = vpack.c.b16 %v2821, %v2820
        %v2834 = vpack.c.b16 %v2823, %v2822
        %v2835 = vpack.c.b16 %v2825, %v2824
        %v2836 = vpack.c.b16 %v2827, %v2826
        %v2837 = vpack.c.b16 %v2829, %v2828
        %2838 = vrot.lane.b32.xlu0 %v2830, 64
        %v2839 = vpop.permute.xlu0 %2838
        %2840 = vrot.lane.b32.xlu0 %v2831, 64
        %v2841 = vpop.permute.xlu0 %2840
        %2842 = vrot.lane.b32.xlu0 %v2832, 64
        %v2843 = vpop.permute.xlu0 %2842
        %2844 = vrot.lane.b32.xlu0 %v2833, 64
        %v2845 = vpop.permute.xlu0 %2844
        %2846 = vrot.lane.b32.xlu0 %v2834, 64
        %v2847 = vpop.permute.xlu0 %2846
        %2848 = vrot.lane.b32.xlu0 %v2835, 64
        %v2849 = vpop.permute.xlu0 %2848
        %2850 = vrot.lane.b32.xlu0 %v2836, 64
        %v2851 = vpop.permute.xlu0 %2850
        %2852 = vrot.lane.b32.xlu0 %v2837, 64
        %v2853 = vpop.permute.xlu0 %2852
        %v2855 = vsel %vm1279, %v2783, 0
        %v2858 = vsel %vm1279, %v2785, 0
        %v2861 = vsel %vm1279, %v2787, 0
        %v2864 = vsel %vm1279, %v2789, 0
        %v2867 = vsel %vm1279, %v2791, 0
        %v2870 = vsel %vm1279, %v2793, 0
        %v2873 = vsel %vm1279, %v2795, 0
        %v2876 = vsel %vm1279, %v2797, 0
        %v2879 = vsel %vm1279, %v2839, 0
        %v2882 = vsel %vm1279, %v2841, 0
        %v2885 = vsel %vm1279, %v2843, 0
        %v2888 = vsel %vm1279, %v2845, 0
        %v2891 = vsel %vm1279, %v2847, 0
        %v2894 = vsel %vm1279, %v2849, 0
        %v2897 = vsel %vm1279, %v2851, 0
        %v2900 = vsel %vm1279, %v2853, 0
        %2902 = vmatpush.bf16.xpose.msra.mxu0 %v2900
        %2903 = vmatpush.bf16.xpose.msra.mxu0 %v2897
        %2904 = vmatpush.bf16.xpose.msra.mxu0 %v2894
        %2905 = vmatpush.bf16.xpose.msra.mxu0 %v2891
        %2906 = vmatpush.bf16.xpose.msra.mxu0 %v2888
        %2907 = vmatpush.bf16.xpose.msra.mxu0 %v2885
        %2908 = vmatpush.bf16.xpose.msra.mxu0 %v2882
        %2909 = vmatpush.bf16.xpose.msra.mxu0 %v2879
        %2910 = vmatmul.bf16.gmra.mxu0 %v2855
        %v2911 = vpop.f32.mrf.mxu0
        %v2912 = vadd.f32 0.0, %v2911
        %v2913 = vpop.f32.mrf.mxu0
        %v2914 = vadd.f32 0.0, %v2913
        %2915 = vmatmul.bf16.gmra.mxu0 %v2858
        %v2916 = vpop.f32.mrf.mxu0
        %v2917 = vadd.f32 0.0, %v2916
        %v2918 = vpop.f32.mrf.mxu0
        %v2919 = vadd.f32 0.0, %v2918
        %2920 = vmatmul.bf16.gmra.mxu0 %v2861
        %v2921 = vpop.f32.mrf.mxu0
        %v2922 = vadd.f32 0.0, %v2921
        %v2923 = vpop.f32.mrf.mxu0
        %v2924 = vadd.f32 0.0, %v2923
        %2925 = vmatmul.bf16.gmra.mxu0 %v2864
        %v2926 = vpop.f32.mrf.mxu0
        %v2927 = vadd.f32 0.0, %v2926
        %v2928 = vpop.f32.mrf.mxu0
        %v2929 = vadd.f32 0.0, %v2928
        %2930 = vmatmul.bf16.gmra.mxu0 %v2867
        %v2931 = vpop.f32.mrf.mxu0
        %v2932 = vadd.f32 0.0, %v2931
        %v2933 = vpop.f32.mrf.mxu0
        %v2934 = vadd.f32 0.0, %v2933
        %2935 = vmatmul.bf16.gmra.mxu0 %v2870
        %v2936 = vpop.f32.mrf.mxu0
        %v2937 = vadd.f32 0.0, %v2936
        %v2938 = vpop.f32.mrf.mxu0
        %v2939 = vadd.f32 0.0, %v2938
        %2940 = vmatmul.bf16.gmra.mxu0 %v2873
        %v2941 = vpop.f32.mrf.mxu0
        %v2942 = vadd.f32 0.0, %v2941
        %v2943 = vpop.f32.mrf.mxu0
        %v2944 = vadd.f32 0.0, %v2943
        %2945 = vmatmul.bf16.gmra.mxu0 %v2876
        %v2946 = vpop.f32.mrf.mxu0
        %v2947 = vadd.f32 0.0, %v2946
        %v2948 = vpop.f32.mrf.mxu0
        %v2949 = vadd.f32 0.0, %v2948
        %2950 = vdwg.mxu0
        %2951 = vmax.xlane.f32.xlu0 %v2912
        %v2952 = vpop.xlane.xlu0 %2951
        %2953 = vmax.xlane.f32.xlu0 %v2914
        %v2954 = vpop.xlane.xlu0 %2953
        %2955 = vmax.xlane.f32.xlu0 %v2917
        %v2956 = vpop.xlane.xlu0 %2955
        %2957 = vmax.xlane.f32.xlu0 %v2919
        %v2958 = vpop.xlane.xlu0 %2957
        %2959 = vmax.xlane.f32.xlu0 %v2922
        %v2960 = vpop.xlane.xlu0 %2959
        %2961 = vmax.xlane.f32.xlu0 %v2924
        %v2962 = vpop.xlane.xlu0 %2961
        %2963 = vmax.xlane.f32.xlu0 %v2927
        %v2964 = vpop.xlane.xlu0 %2963
        %2965 = vmax.xlane.f32.xlu0 %v2929
        %v2966 = vpop.xlane.xlu0 %2965
        %2967 = vmax.xlane.f32.xlu0 %v2932
        %v2968 = vpop.xlane.xlu0 %2967
        %2969 = vmax.xlane.f32.xlu0 %v2934
        %v2970 = vpop.xlane.xlu0 %2969
        %2971 = vmax.xlane.f32.xlu0 %v2937
        %v2972 = vpop.xlane.xlu0 %2971
        %2973 = vmax.xlane.f32.xlu0 %v2939
        %v2974 = vpop.xlane.xlu0 %2973
        %2975 = vmax.xlane.f32.xlu0 %v2942
        %v2976 = vpop.xlane.xlu0 %2975
        %2977 = vmax.xlane.f32.xlu0 %v2944
        %v2978 = vpop.xlane.xlu0 %2977
        %2979 = vmax.xlane.f32.xlu0 %v2947
        %v2980 = vpop.xlane.xlu0 %2979
        %2981 = vmax.xlane.f32.xlu0 %v2949
        %v2982 = vpop.xlane.xlu0 %2981
        %v2983 = vsub.f32 %v2912, %v2952
        %v2984 = vsub.f32 %v2914, %v2954
        %v2985 = vsub.f32 %v2917, %v2956
        %v2986 = vsub.f32 %v2919, %v2958
        %v2987 = vsub.f32 %v2922, %v2960
        %v2988 = vsub.f32 %v2924, %v2962
        %v2989 = vsub.f32 %v2927, %v2964
        %v2990 = vsub.f32 %v2929, %v2966
        %v2991 = vsub.f32 %v2932, %v2968
        %v2992 = vsub.f32 %v2934, %v2970
        %v2993 = vsub.f32 %v2937, %v2972
        %v2994 = vsub.f32 %v2939, %v2974
        %v2995 = vsub.f32 %v2942, %v2976
        %v2996 = vsub.f32 %v2944, %v2978
        %v2997 = vsub.f32 %v2947, %v2980
        %v2998 = vsub.f32 %v2949, %v2982
        %v2999 = vmul.f32 %v2983, 1.442695
        %v3000 = vpow.pop %v2999
        %v3001 = vmul.f32 %v2984, 1.442695
        %v3002 = vpow.pop %v3001
        %v3003 = vmul.f32 %v2985, 1.442695
        %v3004 = vpow.pop %v3003
        %v3005 = vmul.f32 %v2986, 1.442695
        %v3006 = vpow.pop %v3005
        %v3007 = vmul.f32 %v2987, 1.442695
        %v3008 = vpow.pop %v3007
        %v3009 = vmul.f32 %v2988, 1.442695
        %v3010 = vpow.pop %v3009
        %v3011 = vmul.f32 %v2989, 1.442695
        %v3012 = vpow.pop %v3011
        %v3013 = vmul.f32 %v2990, 1.442695
        %v3014 = vpow.pop %v3013
        %v3015 = vmul.f32 %v2991, 1.442695
        %v3016 = vpow.pop %v3015
        %v3017 = vmul.f32 %v2992, 1.442695
        %v3018 = vpow.pop %v3017
        %v3019 = vmul.f32 %v2993, 1.442695
        %v3020 = vpow.pop %v3019
        %v3021 = vmul.f32 %v2994, 1.442695
        %v3022 = vpow.pop %v3021
        %v3023 = vmul.f32 %v2995, 1.442695
        %v3024 = vpow.pop %v3023
        %v3025 = vmul.f32 %v2996, 1.442695
        %v3026 = vpow.pop %v3025
        %v3027 = vmul.f32 %v2997, 1.442695
        %v3028 = vpow.pop %v3027
        %v3029 = vmul.f32 %v2998, 1.442695
        %v3030 = vpow.pop %v3029
        %3031 = vadd.xlane.f32.xlu0 %v3000
        %v3032 = vpop.xlane.xlu0 %3031
        %3033 = vadd.xlane.f32.xlu0 %v3002
        %v3034 = vpop.xlane.xlu0 %3033
        %3035 = vadd.xlane.f32.xlu0 %v3004
        %v3036 = vpop.xlane.xlu0 %3035
        %3037 = vadd.xlane.f32.xlu0 %v3006
        %v3038 = vpop.xlane.xlu0 %3037
        %3039 = vadd.xlane.f32.xlu0 %v3008
        %v3040 = vpop.xlane.xlu0 %3039
        %3041 = vadd.xlane.f32.xlu0 %v3010
        %v3042 = vpop.xlane.xlu0 %3041
        %3043 = vadd.xlane.f32.xlu0 %v3012
        %v3044 = vpop.xlane.xlu0 %3043
        %3045 = vadd.xlane.f32.xlu0 %v3014
        %v3046 = vpop.xlane.xlu0 %3045
        %3047 = vadd.xlane.f32.xlu0 %v3016
        %v3048 = vpop.xlane.xlu0 %3047
        %3049 = vadd.xlane.f32.xlu0 %v3018
        %v3050 = vpop.xlane.xlu0 %3049
        %3051 = vadd.xlane.f32.xlu0 %v3020
        %v3052 = vpop.xlane.xlu0 %3051
        %3053 = vadd.xlane.f32.xlu0 %v3022
        %v3054 = vpop.xlane.xlu0 %3053
        %3055 = vadd.xlane.f32.xlu0 %v3024
        %v3056 = vpop.xlane.xlu0 %3055
        %3057 = vadd.xlane.f32.xlu0 %v3026
        %v3058 = vpop.xlane.xlu0 %3057
        %3059 = vadd.xlane.f32.xlu0 %v3028
        %v3060 = vpop.xlane.xlu0 %3059
        %3061 = vadd.xlane.f32.xlu0 %v3030
        %v3062 = vpop.xlane.xlu0 %3061
        %v3063 = vpack.c.bf16 %v3002, %v3000
        %v3064 = vpack.c.bf16 %v3006, %v3004
        %v3065 = vpack.c.bf16 %v3010, %v3008
        %v3066 = vpack.c.bf16 %v3014, %v3012
        %v3067 = vpack.c.bf16 %v3018, %v3016
        %v3068 = vpack.c.bf16 %v3022, %v3020
        %v3069 = vpack.c.bf16 %v3026, %v3024
        %v3070 = vpack.c.bf16 %v3030, %v3028
        %v3087 = vunpack.c.l.b16 %v2726
        %v3088 = vunpack.c.l.b16 %v2727
        %v3089 = vunpack.c.l.b16 %v2728
        %v3090 = vunpack.c.l.b16 %v2729
        %v3091 = vunpack.c.l.b16 %v2730
        %v3092 = vunpack.c.l.b16 %v2731
        %v3093 = vunpack.c.l.b16 %v2732
        %v3094 = vunpack.c.l.b16 %v2733
        %v3095 = vunpack.c.l.b16 %v2734
        %v3096 = vunpack.c.l.b16 %v2735
        %v3097 = vunpack.c.l.b16 %v2736
        %v3098 = vunpack.c.l.b16 %v2737
        %v3099 = vunpack.c.l.b16 %v2738
        %v3100 = vunpack.c.l.b16 %v2739
        %v3101 = vunpack.c.l.b16 %v2740
        %v3102 = vunpack.c.l.b16 %v2741
        %v3103 = vpack.c.b16 %v3088, %v3087
        %v3104 = vpack.c.b16 %v3090, %v3089
        %v3105 = vpack.c.b16 %v3092, %v3091
        %v3106 = vpack.c.b16 %v3094, %v3093
        %v3107 = vpack.c.b16 %v3096, %v3095
        %v3108 = vpack.c.b16 %v3098, %v3097
        %v3109 = vpack.c.b16 %v3100, %v3099
        %v3110 = vpack.c.b16 %v3102, %v3101
        %3111 = vrot.lane.b32.xlu0 %v3103, 64
        %v3112 = vpop.permute.xlu0 %3111
        %3113 = vrot.lane.b32.xlu0 %v3104, 64
        %v3114 = vpop.permute.xlu0 %3113
        %3115 = vrot.lane.b32.xlu0 %v3105, 64
        %v3116 = vpop.permute.xlu0 %3115
        %3117 = vrot.lane.b32.xlu0 %v3106, 64
        %v3118 = vpop.permute.xlu0 %3117
        %3119 = vrot.lane.b32.xlu0 %v3107, 64
        %v3120 = vpop.permute.xlu0 %3119
        %3121 = vrot.lane.b32.xlu0 %v3108, 64
        %v3122 = vpop.permute.xlu0 %3121
        %3123 = vrot.lane.b32.xlu0 %v3109, 64
        %v3124 = vpop.permute.xlu0 %3123
        %3125 = vrot.lane.b32.xlu0 %v3110, 64
        %v3126 = vpop.permute.xlu0 %3125
        %3135 = vmatpush.bf16.msra.mxu0 %v3126
        %3136 = vmatpush.bf16.msra.mxu0 %v3124
        %3137 = vmatpush.bf16.msra.mxu0 %v3122
        %3138 = vmatpush.bf16.msra.mxu0 %v3120
        %3139 = vmatpush.bf16.msra.mxu0 %v3118
        %3140 = vmatpush.bf16.msra.mxu0 %v3116
        %3141 = vmatpush.bf16.msra.mxu0 %v3114
        %3142 = vmatpush.bf16.msra.mxu0 %v3112
        %3143 = vmatmul.bf16.gmra.mxu0 %v3063
        %v3144 = vpop.f32.mrf.mxu0
        %v3145 = vadd.f32 0.0, %v3144
        %v3146 = vpop.f32.mrf.mxu0
        %v3147 = vadd.f32 0.0, %v3146
        %3148 = vmatmul.bf16.gmra.mxu0 %v3064
        %v3149 = vpop.f32.mrf.mxu0
        %v3150 = vadd.f32 0.0, %v3149
        %v3151 = vpop.f32.mrf.mxu0
        %v3152 = vadd.f32 0.0, %v3151
        %3153 = vmatmul.bf16.gmra.mxu0 %v3065
        %v3154 = vpop.f32.mrf.mxu0
        %v3155 = vadd.f32 0.0, %v3154
        %v3156 = vpop.f32.mrf.mxu0
        %v3157 = vadd.f32 0.0, %v3156
        %3158 = vmatmul.bf16.gmra.mxu0 %v3066
        %v3159 = vpop.f32.mrf.mxu0
        %v3160 = vadd.f32 0.0, %v3159
        %v3161 = vpop.f32.mrf.mxu0
        %v3162 = vadd.f32 0.0, %v3161
        %3163 = vmatmul.bf16.gmra.mxu0 %v3067
        %v3164 = vpop.f32.mrf.mxu0
        %v3165 = vadd.f32 0.0, %v3164
        %v3166 = vpop.f32.mrf.mxu0
        %v3167 = vadd.f32 0.0, %v3166
        %3168 = vmatmul.bf16.gmra.mxu0 %v3068
        %v3169 = vpop.f32.mrf.mxu0
        %v3170 = vadd.f32 0.0, %v3169
        %v3171 = vpop.f32.mrf.mxu0
        %v3172 = vadd.f32 0.0, %v3171
        %3173 = vmatmul.bf16.gmra.mxu0 %v3069
        %v3174 = vpop.f32.mrf.mxu0
        %v3175 = vadd.f32 0.0, %v3174
        %v3176 = vpop.f32.mrf.mxu0
        %v3177 = vadd.f32 0.0, %v3176
        %3178 = vmatmul.bf16.gmra.mxu0 %v3070
        %v3179 = vpop.f32.mrf.mxu0
        %v3180 = vadd.f32 0.0, %v3179
        %v3181 = vpop.f32.mrf.mxu0
        %v3182 = vadd.f32 0.0, %v3181
        %3183 = vdwg.mxu0
        %v3184 = vrcp.pop %v3032
        %v3185 = vmul.f32 %v3032, %v3184
        %v3186 = vsub.f32 1.0, %v3185
        %v3187 = vmul.f32 %v3184, %v3186
        %v3188 = vadd.f32 %v3184, %v3187
        %vm3189 = vweird.f32 %v3032
        %vm3190 = vweird.f32 %v3184
        %vm3191 = vmor %vm3189, %vm3190
        %v3192 = vsel %vm3191, %v3184, %v3188
        %v3193 = vand.u32 2147483647, %v3032
        %vm3194 = vcmp.eq.f32.partialorder %v3193, 8.507059e+37
        %v3195 = vand.u32 %v3032, 2147483648
        %v3196 = vor.u32 1.1754944e-38, %v3195
        %v3197 = vsel %vm3194, %v3196, %v3192
        %v3198 = vrcp.pop %v3034
        %v3199 = vmul.f32 %v3034, %v3198
        %v3200 = vsub.f32 1.0, %v3199
        %v3201 = vmul.f32 %v3198, %v3200
        %v3202 = vadd.f32 %v3198, %v3201
        %vm3203 = vweird.f32 %v3034
        %vm3204 = vweird.f32 %v3198
        %vm3205 = vmor %vm3203, %vm3204
        %v3206 = vsel %vm3205, %v3198, %v3202
        %v3207 = vand.u32 2147483647, %v3034
        %vm3208 = vcmp.eq.f32.partialorder %v3207, 8.507059e+37
        %v3209 = vand.u32 %v3034, 2147483648
        %v3210 = vor.u32 1.1754944e-38, %v3209
        %v3211 = vsel %vm3208, %v3210, %v3206
        %v3212 = vrcp.pop %v3036
        %v3213 = vmul.f32 %v3036, %v3212
        %v3214 = vsub.f32 1.0, %v3213
        %v3215 = vmul.f32 %v3212, %v3214
        %v3216 = vadd.f32 %v3212, %v3215
        %vm3217 = vweird.f32 %v3036
        %vm3218 = vweird.f32 %v3212
        %vm3219 = vmor %vm3217, %vm3218
        %v3220 = vsel %vm3219, %v3212, %v3216
        %v3221 = vand.u32 2147483647, %v3036
        %vm3222 = vcmp.eq.f32.partialorder %v3221, 8.507059e+37
        %v3223 = vand.u32 %v3036, 2147483648
        %v3224 = vor.u32 1.1754944e-38, %v3223
        %v3225 = vsel %vm3222, %v3224, %v3220
        %v3226 = vrcp.pop %v3038
        %v3227 = vmul.f32 %v3038, %v3226
        %v3228 = vsub.f32 1.0, %v3227
        %v3229 = vmul.f32 %v3226, %v3228
        %v3230 = vadd.f32 %v3226, %v3229
        %vm3231 = vweird.f32 %v3038
        %vm3232 = vweird.f32 %v3226
        %vm3233 = vmor %vm3231, %vm3232
        %v3234 = vsel %vm3233, %v3226, %v3230
        %v3235 = vand.u32 2147483647, %v3038
        %vm3236 = vcmp.eq.f32.partialorder %v3235, 8.507059e+37
        %v3237 = vand.u32 %v3038, 2147483648
        %v3238 = vor.u32 1.1754944e-38, %v3237
        %v3239 = vsel %vm3236, %v3238, %v3234
        %v3240 = vrcp.pop %v3040
        %v3241 = vmul.f32 %v3040, %v3240
        %v3242 = vsub.f32 1.0, %v3241
        %v3243 = vmul.f32 %v3240, %v3242
        %v3244 = vadd.f32 %v3240, %v3243
        %vm3245 = vweird.f32 %v3040
        %vm3246 = vweird.f32 %v3240
        %vm3247 = vmor %vm3245, %vm3246
        %v3248 = vsel %vm3247, %v3240, %v3244
        %v3249 = vand.u32 2147483647, %v3040
        %vm3250 = vcmp.eq.f32.partialorder %v3249, 8.507059e+37
        %v3251 = vand.u32 %v3040, 2147483648
        %v3252 = vor.u32 1.1754944e-38, %v3251
        %v3253 = vsel %vm3250, %v3252, %v3248
        %v3254 = vrcp.pop %v3042
        %v3255 = vmul.f32 %v3042, %v3254
        %v3256 = vsub.f32 1.0, %v3255
        %v3257 = vmul.f32 %v3254, %v3256
        %v3258 = vadd.f32 %v3254, %v3257
        %vm3259 = vweird.f32 %v3042
        %vm3260 = vweird.f32 %v3254
        %vm3261 = vmor %vm3259, %vm3260
        %v3262 = vsel %vm3261, %v3254, %v3258
        %v3263 = vand.u32 2147483647, %v3042
        %vm3264 = vcmp.eq.f32.partialorder %v3263, 8.507059e+37
        %v3265 = vand.u32 %v3042, 2147483648
        %v3266 = vor.u32 1.1754944e-38, %v3265
        %v3267 = vsel %vm3264, %v3266, %v3262
        %v3268 = vrcp.pop %v3044
        %v3269 = vmul.f32 %v3044, %v3268
        %v3270 = vsub.f32 1.0, %v3269
        %v3271 = vmul.f32 %v3268, %v3270
        %v3272 = vadd.f32 %v3268, %v3271
        %vm3273 = vweird.f32 %v3044
        %vm3274 = vweird.f32 %v3268
        %vm3275 = vmor %vm3273, %vm3274
        %v3276 = vsel %vm3275, %v3268, %v3272
        %v3277 = vand.u32 2147483647, %v3044
        %vm3278 = vcmp.eq.f32.partialorder %v3277, 8.507059e+37
        %v3279 = vand.u32 %v3044, 2147483648
        %v3280 = vor.u32 1.1754944e-38, %v3279
        %v3281 = vsel %vm3278, %v3280, %v3276
        %v3282 = vrcp.pop %v3046
        %v3283 = vmul.f32 %v3046, %v3282
        %v3284 = vsub.f32 1.0, %v3283
        %v3285 = vmul.f32 %v3282, %v3284
        %v3286 = vadd.f32 %v3282, %v3285
        %vm3287 = vweird.f32 %v3046
        %vm3288 = vweird.f32 %v3282
        %vm3289 = vmor %vm3287, %vm3288
        %v3290 = vsel %vm3289, %v3282, %v3286
        %v3291 = vand.u32 2147483647, %v3046
        %vm3292 = vcmp.eq.f32.partialorder %v3291, 8.507059e+37
        %v3293 = vand.u32 %v3046, 2147483648
        %v3294 = vor.u32 1.1754944e-38, %v3293
        %v3295 = vsel %vm3292, %v3294, %v3290
        %v3296 = vrcp.pop %v3048
        %v3297 = vmul.f32 %v3048, %v3296
        %v3298 = vsub.f32 1.0, %v3297
        %v3299 = vmul.f32 %v3296, %v3298
        %v3300 = vadd.f32 %v3296, %v3299
        %vm3301 = vweird.f32 %v3048
        %vm3302 = vweird.f32 %v3296
        %vm3303 = vmor %vm3301, %vm3302
        %v3304 = vsel %vm3303, %v3296, %v3300
        %v3305 = vand.u32 2147483647, %v3048
        %vm3306 = vcmp.eq.f32.partialorder %v3305, 8.507059e+37
        %v3307 = vand.u32 %v3048, 2147483648
        %v3308 = vor.u32 1.1754944e-38, %v3307
        %v3309 = vsel %vm3306, %v3308, %v3304
        %v3310 = vrcp.pop %v3050
        %v3311 = vmul.f32 %v3050, %v3310
        %v3312 = vsub.f32 1.0, %v3311
        %v3313 = vmul.f32 %v3310, %v3312
        %v3314 = vadd.f32 %v3310, %v3313
        %vm3315 = vweird.f32 %v3050
        %vm3316 = vweird.f32 %v3310
        %vm3317 = vmor %vm3315, %vm3316
        %v3318 = vsel %vm3317, %v3310, %v3314
        %v3319 = vand.u32 2147483647, %v3050
        %vm3320 = vcmp.eq.f32.partialorder %v3319, 8.507059e+37
        %v3321 = vand.u32 %v3050, 2147483648
        %v3322 = vor.u32 1.1754944e-38, %v3321
        %v3323 = vsel %vm3320, %v3322, %v3318
        %v3324 = vrcp.pop %v3052
        %v3325 = vmul.f32 %v3052, %v3324
        %v3326 = vsub.f32 1.0, %v3325
        %v3327 = vmul.f32 %v3324, %v3326
        %v3328 = vadd.f32 %v3324, %v3327
        %vm3329 = vweird.f32 %v3052
        %vm3330 = vweird.f32 %v3324
        %vm3331 = vmor %vm3329, %vm3330
        %v3332 = vsel %vm3331, %v3324, %v3328
        %v3333 = vand.u32 2147483647, %v3052
        %vm3334 = vcmp.eq.f32.partialorder %v3333, 8.507059e+37
        %v3335 = vand.u32 %v3052, 2147483648
        %v3336 = vor.u32 1.1754944e-38, %v3335
        %v3337 = vsel %vm3334, %v3336, %v3332
        %v3338 = vrcp.pop %v3054
        %v3339 = vmul.f32 %v3054, %v3338
        %v3340 = vsub.f32 1.0, %v3339
        %v3341 = vmul.f32 %v3338, %v3340
        %v3342 = vadd.f32 %v3338, %v3341
        %vm3343 = vweird.f32 %v3054
        %vm3344 = vweird.f32 %v3338
        %vm3345 = vmor %vm3343, %vm3344
        %v3346 = vsel %vm3345, %v3338, %v3342
        %v3347 = vand.u32 2147483647, %v3054
        %vm3348 = vcmp.eq.f32.partialorder %v3347, 8.507059e+37
        %v3349 = vand.u32 %v3054, 2147483648
        %v3350 = vor.u32 1.1754944e-38, %v3349
        %v3351 = vsel %vm3348, %v3350, %v3346
        %v3352 = vrcp.pop %v3056
        %v3353 = vmul.f32 %v3056, %v3352
        %v3354 = vsub.f32 1.0, %v3353
        %v3355 = vmul.f32 %v3352, %v3354
        %v3356 = vadd.f32 %v3352, %v3355
        %vm3357 = vweird.f32 %v3056
        %vm3358 = vweird.f32 %v3352
        %vm3359 = vmor %vm3357, %vm3358
        %v3360 = vsel %vm3359, %v3352, %v3356
        %v3361 = vand.u32 2147483647, %v3056
        %vm3362 = vcmp.eq.f32.partialorder %v3361, 8.507059e+37
        %v3363 = vand.u32 %v3056, 2147483648
        %v3364 = vor.u32 1.1754944e-38, %v3363
        %v3365 = vsel %vm3362, %v3364, %v3360
        %v3366 = vrcp.pop %v3058
        %v3367 = vmul.f32 %v3058, %v3366
        %v3368 = vsub.f32 1.0, %v3367
        %v3369 = vmul.f32 %v3366, %v3368
        %v3370 = vadd.f32 %v3366, %v3369
        %vm3371 = vweird.f32 %v3058
        %vm3372 = vweird.f32 %v3366
        %vm3373 = vmor %vm3371, %vm3372
        %v3374 = vsel %vm3373, %v3366, %v3370
        %v3375 = vand.u32 2147483647, %v3058
        %vm3376 = vcmp.eq.f32.partialorder %v3375, 8.507059e+37
        %v3377 = vand.u32 %v3058, 2147483648
        %v3378 = vor.u32 1.1754944e-38, %v3377
        %v3379 = vsel %vm3376, %v3378, %v3374
        %v3380 = vrcp.pop %v3060
        %v3381 = vmul.f32 %v3060, %v3380
        %v3382 = vsub.f32 1.0, %v3381
        %v3383 = vmul.f32 %v3380, %v3382
        %v3384 = vadd.f32 %v3380, %v3383
        %vm3385 = vweird.f32 %v3060
        %vm3386 = vweird.f32 %v3380
        %vm3387 = vmor %vm3385, %vm3386
        %v3388 = vsel %vm3387, %v3380, %v3384
        %v3389 = vand.u32 2147483647, %v3060
        %vm3390 = vcmp.eq.f32.partialorder %v3389, 8.507059e+37
        %v3391 = vand.u32 %v3060, 2147483648
        %v3392 = vor.u32 1.1754944e-38, %v3391
        %v3393 = vsel %vm3390, %v3392, %v3388
        %v3394 = vrcp.pop %v3062
        %v3395 = vmul.f32 %v3062, %v3394
        %v3396 = vsub.f32 1.0, %v3395
        %v3397 = vmul.f32 %v3394, %v3396
        %v3398 = vadd.f32 %v3394, %v3397
        %vm3399 = vweird.f32 %v3062
        %vm3400 = vweird.f32 %v3394
        %vm3401 = vmor %vm3399, %vm3400
        %v3402 = vsel %vm3401, %v3394, %v3398
        %v3403 = vand.u32 2147483647, %v3062
        %vm3404 = vcmp.eq.f32.partialorder %v3403, 8.507059e+37
        %v3405 = vand.u32 %v3062, 2147483648
        %v3406 = vor.u32 1.1754944e-38, %v3405
        %v3407 = vsel %vm3404, %v3406, %v3402
        %v3408 = vmul.f32 %v3145, %v3197
        %v3409 = vmul.f32 %v3147, %v3211
        %v3410 = vmul.f32 %v3150, %v3225
        %v3411 = vmul.f32 %v3152, %v3239
        %v3412 = vmul.f32 %v3155, %v3253
        %v3413 = vmul.f32 %v3157, %v3267
        %v3414 = vmul.f32 %v3160, %v3281
        %v3415 = vmul.f32 %v3162, %v3295
        %v3416 = vmul.f32 %v3165, %v3309
        %v3417 = vmul.f32 %v3167, %v3323
        %v3418 = vmul.f32 %v3170, %v3337
        %v3419 = vmul.f32 %v3172, %v3351
        %v3420 = vmul.f32 %v3175, %v3365
        %v3421 = vmul.f32 %v3177, %v3379
        %v3422 = vmul.f32 %v3180, %v3393
        %v3423 = vmul.f32 %v3182, %v3407
        %v3424 = vpack.c.bf16 %v3408, %v3408
        %v3425 = vpack.c.bf16 %v3409, %v3409
        %v3426 = vpack.c.bf16 %v3410, %v3410
        %v3427 = vpack.c.bf16 %v3411, %v3411
        %v3428 = vpack.c.bf16 %v3412, %v3412
        %v3429 = vpack.c.bf16 %v3413, %v3413
        %v3430 = vpack.c.bf16 %v3414, %v3414
        %v3431 = vpack.c.bf16 %v3415, %v3415
        %v3432 = vpack.c.bf16 %v3416, %v3416
        %v3433 = vpack.c.bf16 %v3417, %v3417
        %v3434 = vpack.c.bf16 %v3418, %v3418
        %v3435 = vpack.c.bf16 %v3419, %v3419
        %v3436 = vpack.c.bf16 %v3420, %v3420
        %v3437 = vpack.c.bf16 %v3421, %v3421
        %v3438 = vpack.c.bf16 %v3422, %v3422
        %v3439 = vpack.c.bf16 %v3423, %v3423
        %3456 = vrot.lane.b32.xlu0 %v3424, 64
        %v3457 = vpop.permute.xlu0 %3456
        %3458 = vrot.lane.b32.xlu0 %v3425, 64
        %v3459 = vpop.permute.xlu0 %3458
        %3460 = vrot.lane.b32.xlu0 %v3426, 64
        %v3461 = vpop.permute.xlu0 %3460
        %3462 = vrot.lane.b32.xlu0 %v3427, 64
        %v3463 = vpop.permute.xlu0 %3462
        %3464 = vrot.lane.b32.xlu0 %v3428, 64
        %v3465 = vpop.permute.xlu0 %3464
        %3466 = vrot.lane.b32.xlu0 %v3429, 64
        %v3467 = vpop.permute.xlu0 %3466
        %3468 = vrot.lane.b32.xlu0 %v3430, 64
        %v3469 = vpop.permute.xlu0 %3468
        %3470 = vrot.lane.b32.xlu0 %v3431, 64
        %v3471 = vpop.permute.xlu0 %3470
        %3472 = vrot.lane.b32.xlu0 %v3432, 64
        %v3473 = vpop.permute.xlu0 %3472
        %3474 = vrot.lane.b32.xlu0 %v3433, 64
        %v3475 = vpop.permute.xlu0 %3474
        %3476 = vrot.lane.b32.xlu0 %v3434, 64
        %v3477 = vpop.permute.xlu0 %3476
        %3478 = vrot.lane.b32.xlu0 %v3435, 64
        %v3479 = vpop.permute.xlu0 %3478
        %3480 = vrot.lane.b32.xlu0 %v3436, 64
        %v3481 = vpop.permute.xlu0 %3480
        %3482 = vrot.lane.b32.xlu0 %v3437, 64
        %v3483 = vpop.permute.xlu0 %3482
        %3484 = vrot.lane.b32.xlu0 %v3438, 64
        %v3485 = vpop.permute.xlu0 %3484
        %3486 = vrot.lane.b32.xlu0 %v3439, 64
        %v3487 = vpop.permute.xlu0 %3486
        %vm3504 = vcmask 781824
        %3505 = vst.msk [vmem:[#allocation5] sm:$0xf] %vm3504, %v3457
        %3506 = vst.msk [vmem:[#allocation5 + $0x4] sm:$0xf] %vm3504, %v3459
        %3507 = vst.msk [vmem:[#allocation5 + $0x8] sm:$0xf] %vm3504, %v3461
        %3508 = vst.msk [vmem:[#allocation5 + $0xc] sm:$0xf] %vm3504, %v3463
        %3509 = vst.msk [vmem:[#allocation5 + $0x10] sm:$0xf] %vm3504, %v3465
        %3510 = vst.msk [vmem:[#allocation5 + $0x14] sm:$0xf] %vm3504, %v3467
        %3511 = vst.msk [vmem:[#allocation5 + $0x18] sm:$0xf] %vm3504, %v3469
        %3512 = vst.msk [vmem:[#allocation5 + $0x1c] sm:$0xf] %vm3504, %v3471
        %3513 = vst.msk [vmem:[#allocation5 + $0x20] sm:$0xf] %vm3504, %v3473
        %3514 = vst.msk [vmem:[#allocation5 + $0x24] sm:$0xf] %vm3504, %v3475
        %3515 = vst.msk [vmem:[#allocation5 + $0x28] sm:$0xf] %vm3504, %v3477
        %3516 = vst.msk [vmem:[#allocation5 + $0x2c] sm:$0xf] %vm3504, %v3479
        %3517 = vst.msk [vmem:[#allocation5 + $0x30] sm:$0xf] %vm3504, %v3481
        %3518 = vst.msk [vmem:[#allocation5 + $0x34] sm:$0xf] %vm3504, %v3483
        %3519 = vst.msk [vmem:[#allocation5 + $0x38] sm:$0xf] %vm3504, %v3485
        %3520 = vst.msk [vmem:[#allocation5 + $0x3c] sm:$0xf] %vm3504, %v3487
        %v3521 = vld [vmem:[#allocation2] sm:$0xf]
        %v3522 = vld [vmem:[#allocation2 + $0x4] sm:$0xf]
        %v3523 = vld [vmem:[#allocation2 + $0x8] sm:$0xf]
        %v3524 = vld [vmem:[#allocation2 + $0xc] sm:$0xf]
        %v3525 = vld [vmem:[#allocation2 + $0x10] sm:$0xf]
        %v3526 = vld [vmem:[#allocation2 + $0x14] sm:$0xf]
        %v3527 = vld [vmem:[#allocation2 + $0x18] sm:$0xf]
        %v3528 = vld [vmem:[#allocation2 + $0x1c] sm:$0xf]
        %v3529 = vld [vmem:[#allocation2 + $0x20] sm:$0xf]
        %v3530 = vld [vmem:[#allocation2 + $0x24] sm:$0xf]
        %v3531 = vld [vmem:[#allocation2 + $0x28] sm:$0xf]
        %v3532 = vld [vmem:[#allocation2 + $0x2c] sm:$0xf]
        %v3533 = vld [vmem:[#allocation2 + $0x30] sm:$0xf]
        %v3534 = vld [vmem:[#allocation2 + $0x34] sm:$0xf]
        %v3535 = vld [vmem:[#allocation2 + $0x38] sm:$0xf]
        %v3536 = vld [vmem:[#allocation2 + $0x3c] sm:$0xf]
        %v3537 = vld [vmem:[#allocation3] sm:$0xf]
        %v3538 = vld [vmem:[#allocation3 + $0x4] sm:$0xf]
        %v3539 = vld [vmem:[#allocation3 + $0x8] sm:$0xf]
        %v3540 = vld [vmem:[#allocation3 + $0xc] sm:$0xf]
        %v3541 = vld [vmem:[#allocation3 + $0x10] sm:$0xf]
        %v3542 = vld [vmem:[#allocation3 + $0x14] sm:$0xf]
        %v3543 = vld [vmem:[#allocation3 + $0x18] sm:$0xf]
        %v3544 = vld [vmem:[#allocation3 + $0x1c] sm:$0xf]
        %v3545 = vld [vmem:[#allocation3 + $0x20] sm:$0xf]
        %v3546 = vld [vmem:[#allocation3 + $0x24] sm:$0xf]
        %v3547 = vld [vmem:[#allocation3 + $0x28] sm:$0xf]
        %v3548 = vld [vmem:[#allocation3 + $0x2c] sm:$0xf]
        %v3549 = vld [vmem:[#allocation3 + $0x30] sm:$0xf]
        %v3550 = vld [vmem:[#allocation3 + $0x34] sm:$0xf]
        %v3551 = vld [vmem:[#allocation3 + $0x38] sm:$0xf]
        %v3552 = vld [vmem:[#allocation3 + $0x3c] sm:$0xf]
        %v3553 = vld [vmem:[#allocation4] sm:$0xf]
        %v3554 = vld [vmem:[#allocation4 + $0x4] sm:$0xf]
        %v3555 = vld [vmem:[#allocation4 + $0x8] sm:$0xf]
        %v3556 = vld [vmem:[#allocation4 + $0xc] sm:$0xf]
        %v3557 = vld [vmem:[#allocation4 + $0x10] sm:$0xf]
        %v3558 = vld [vmem:[#allocation4 + $0x14] sm:$0xf]
        %v3559 = vld [vmem:[#allocation4 + $0x18] sm:$0xf]
        %v3560 = vld [vmem:[#allocation4 + $0x1c] sm:$0xf]
        %v3561 = vld [vmem:[#allocation4 + $0x20] sm:$0xf]
        %v3562 = vld [vmem:[#allocation4 + $0x24] sm:$0xf]
        %v3563 = vld [vmem:[#allocation4 + $0x28] sm:$0xf]
        %v3564 = vld [vmem:[#allocation4 + $0x2c] sm:$0xf]
        %v3565 = vld [vmem:[#allocation4 + $0x30] sm:$0xf]
        %v3566 = vld [vmem:[#allocation4 + $0x34] sm:$0xf]
        %v3567 = vld [vmem:[#allocation4 + $0x38] sm:$0xf]
        %v3568 = vld [vmem:[#allocation4 + $0x3c] sm:$0xf]
        %v3585 = vunpack.c.l.b16 %v3521
        %v3586 = vunpack.c.l.b16 %v3522
        %v3587 = vunpack.c.l.b16 %v3523
        %v3588 = vunpack.c.l.b16 %v3524
        %v3589 = vunpack.c.l.b16 %v3525
        %v3590 = vunpack.c.l.b16 %v3526
        %v3591 = vunpack.c.l.b16 %v3527
        %v3592 = vunpack.c.l.b16 %v3528
        %v3593 = vunpack.c.l.b16 %v3529
        %v3594 = vunpack.c.l.b16 %v3530
        %v3595 = vunpack.c.l.b16 %v3531
        %v3596 = vunpack.c.l.b16 %v3532
        %v3597 = vunpack.c.l.b16 %v3533
        %v3598 = vunpack.c.l.b16 %v3534
        %v3599 = vunpack.c.l.b16 %v3535
        %v3600 = vunpack.c.l.b16 %v3536
        %v3601 = vpack.c.b16 %v3586, %v3585
        %v3602 = vpack.c.b16 %v3588, %v3587
        %v3603 = vpack.c.b16 %v3590, %v3589
        %v3604 = vpack.c.b16 %v3592, %v3591
        %v3605 = vpack.c.b16 %v3594, %v3593
        %v3606 = vpack.c.b16 %v3596, %v3595
        %v3607 = vpack.c.b16 %v3598, %v3597
        %v3608 = vpack.c.b16 %v3600, %v3599
        %3609 = vrot.lane.b32.xlu0 %v3601, 32
        %v3610 = vpop.permute.xlu0 %3609
        %3611 = vrot.lane.b32.xlu0 %v3602, 32
        %v3612 = vpop.permute.xlu0 %3611
        %3613 = vrot.lane.b32.xlu0 %v3603, 32
        %v3614 = vpop.permute.xlu0 %3613
        %3615 = vrot.lane.b32.xlu0 %v3604, 32
        %v3616 = vpop.permute.xlu0 %3615
        %3617 = vrot.lane.b32.xlu0 %v3605, 32
        %v3618 = vpop.permute.xlu0 %3617
        %3619 = vrot.lane.b32.xlu0 %v3606, 32
        %v3620 = vpop.permute.xlu0 %3619
        %3621 = vrot.lane.b32.xlu0 %v3607, 32
        %v3622 = vpop.permute.xlu0 %3621
        %3623 = vrot.lane.b32.xlu0 %v3608, 32
        %v3624 = vpop.permute.xlu0 %3623
        %v3641 = vunpack.c.l.b16 %v3537
        %v3642 = vunpack.c.l.b16 %v3538
        %v3643 = vunpack.c.l.b16 %v3539
        %v3644 = vunpack.c.l.b16 %v3540
        %v3645 = vunpack.c.l.b16 %v3541
        %v3646 = vunpack.c.l.b16 %v3542
        %v3647 = vunpack.c.l.b16 %v3543
        %v3648 = vunpack.c.l.b16 %v3544
        %v3649 = vunpack.c.l.b16 %v3545
        %v3650 = vunpack.c.l.b16 %v3546
        %v3651 = vunpack.c.l.b16 %v3547
        %v3652 = vunpack.c.l.b16 %v3548
        %v3653 = vunpack.c.l.b16 %v3549
        %v3654 = vunpack.c.l.b16 %v3550
        %v3655 = vunpack.c.l.b16 %v3551
        %v3656 = vunpack.c.l.b16 %v3552
        %v3657 = vpack.c.b16 %v3642, %v3641
        %v3658 = vpack.c.b16 %v3644, %v3643
        %v3659 = vpack.c.b16 %v3646, %v3645
        %v3660 = vpack.c.b16 %v3648, %v3647
        %v3661 = vpack.c.b16 %v3650, %v3649
        %v3662 = vpack.c.b16 %v3652, %v3651
        %v3663 = vpack.c.b16 %v3654, %v3653
        %v3664 = vpack.c.b16 %v3656, %v3655
        %3665 = vrot.lane.b32.xlu0 %v3657, 32
        %v3666 = vpop.permute.xlu0 %3665
        %3667 = vrot.lane.b32.xlu0 %v3658, 32
        %v3668 = vpop.permute.xlu0 %3667
        %3669 = vrot.lane.b32.xlu0 %v3659, 32
        %v3670 = vpop.permute.xlu0 %3669
        %3671 = vrot.lane.b32.xlu0 %v3660, 32
        %v3672 = vpop.permute.xlu0 %3671
        %3673 = vrot.lane.b32.xlu0 %v3661, 32
        %v3674 = vpop.permute.xlu0 %3673
        %3675 = vrot.lane.b32.xlu0 %v3662, 32
        %v3676 = vpop.permute.xlu0 %3675
        %3677 = vrot.lane.b32.xlu0 %v3663, 32
        %v3678 = vpop.permute.xlu0 %3677
        %3679 = vrot.lane.b32.xlu0 %v3664, 32
        %v3680 = vpop.permute.xlu0 %3679
        %v3682 = vsel %vm1279, %v3610, 0
        %v3685 = vsel %vm1279, %v3612, 0
        %v3688 = vsel %vm1279, %v3614, 0
        %v3691 = vsel %vm1279, %v3616, 0
        %v3694 = vsel %vm1279, %v3618, 0
        %v3697 = vsel %vm1279, %v3620, 0
        %v3700 = vsel %vm1279, %v3622, 0
        %v3703 = vsel %vm1279, %v3624, 0
        %v3706 = vsel %vm1279, %v3666, 0
        %v3709 = vsel %vm1279, %v3668, 0
        %v3712 = vsel %vm1279, %v3670, 0
        %v3715 = vsel %vm1279, %v3672, 0
        %v3718 = vsel %vm1279, %v3674, 0
        %v3721 = vsel %vm1279, %v3676, 0
        %v3724 = vsel %vm1279, %v3678, 0
        %v3727 = vsel %vm1279, %v3680, 0
        %3729 = vmatpush.bf16.xpose.msra.mxu0 %v3727
        %3730 = vmatpush.bf16.xpose.msra.mxu0 %v3724
        %3731 = vmatpush.bf16.xpose.msra.mxu0 %v3721
        %3732 = vmatpush.bf16.xpose.msra.mxu0 %v3718
        %3733 = vmatpush.bf16.xpose.msra.mxu0 %v3715
        %3734 = vmatpush.bf16.xpose.msra.mxu0 %v3712
        %3735 = vmatpush.bf16.xpose.msra.mxu0 %v3709
        %3736 = vmatpush.bf16.xpose.msra.mxu0 %v3706
        %3737 = vmatmul.bf16.gmra.mxu0 %v3682
        %v3738 = vpop.f32.mrf.mxu0
        %v3739 = vadd.f32 0.0, %v3738
        %v3740 = vpop.f32.mrf.mxu0
        %v3741 = vadd.f32 0.0, %v3740
        %3742 = vmatmul.bf16.gmra.mxu0 %v3685
        %v3743 = vpop.f32.mrf.mxu0
        %v3744 = vadd.f32 0.0, %v3743
        %v3745 = vpop.f32.mrf.mxu0
        %v3746 = vadd.f32 0.0, %v3745
        %3747 = vmatmul.bf16.gmra.mxu0 %v3688
        %v3748 = vpop.f32.mrf.mxu0
        %v3749 = vadd.f32 0.0, %v3748
        %v3750 = vpop.f32.mrf.mxu0
        %v3751 = vadd.f32 0.0, %v3750
        %3752 = vmatmul.bf16.gmra.mxu0 %v3691
        %v3753 = vpop.f32.mrf.mxu0
        %v3754 = vadd.f32 0.0, %v3753
        %v3755 = vpop.f32.mrf.mxu0
        %v3756 = vadd.f32 0.0, %v3755
        %3757 = vmatmul.bf16.gmra.mxu0 %v3694
        %v3758 = vpop.f32.mrf.mxu0
        %v3759 = vadd.f32 0.0, %v3758
        %v3760 = vpop.f32.mrf.mxu0
        %v3761 = vadd.f32 0.0, %v3760
        %3762 = vmatmul.bf16.gmra.mxu0 %v3697
        %v3763 = vpop.f32.mrf.mxu0
        %v3764 = vadd.f32 0.0, %v3763
        %v3765 = vpop.f32.mrf.mxu0
        %v3766 = vadd.f32 0.0, %v3765
        %3767 = vmatmul.bf16.gmra.mxu0 %v3700
        %v3768 = vpop.f32.mrf.mxu0
        %v3769 = vadd.f32 0.0, %v3768
        %v3770 = vpop.f32.mrf.mxu0
        %v3771 = vadd.f32 0.0, %v3770
        %3772 = vmatmul.bf16.gmra.mxu0 %v3703
        %v3773 = vpop.f32.mrf.mxu0
        %v3774 = vadd.f32 0.0, %v3773
        %v3775 = vpop.f32.mrf.mxu0
        %v3776 = vadd.f32 0.0, %v3775
        %3777 = vdwg.mxu0
        %3778 = vmax.xlane.f32.xlu0 %v3739
        %v3779 = vpop.xlane.xlu0 %3778
        %3780 = vmax.xlane.f32.xlu0 %v3741
        %v3781 = vpop.xlane.xlu0 %3780
        %3782 = vmax.xlane.f32.xlu0 %v3744
        %v3783 = vpop.xlane.xlu0 %3782
        %3784 = vmax.xlane.f32.xlu0 %v3746
        %v3785 = vpop.xlane.xlu0 %3784
        %3786 = vmax.xlane.f32.xlu0 %v3749
        %v3787 = vpop.xlane.xlu0 %3786
        %3788 = vmax.xlane.f32.xlu0 %v3751
        %v3789 = vpop.xlane.xlu0 %3788
        %3790 = vmax.xlane.f32.xlu0 %v3754
        %v3791 = vpop.xlane.xlu0 %3790
        %3792 = vmax.xlane.f32.xlu0 %v3756
        %v3793 = vpop.xlane.xlu0 %3792
        %3794 = vmax.xlane.f32.xlu0 %v3759
        %v3795 = vpop.xlane.xlu0 %3794
        %3796 = vmax.xlane.f32.xlu0 %v3761
        %v3797 = vpop.xlane.xlu0 %3796
        %3798 = vmax.xlane.f32.xlu0 %v3764
        %v3799 = vpop.xlane.xlu0 %3798
        %3800 = vmax.xlane.f32.xlu0 %v3766
        %v3801 = vpop.xlane.xlu0 %3800
        %3802 = vmax.xlane.f32.xlu0 %v3769
        %v3803 = vpop.xlane.xlu0 %3802
        %3804 = vmax.xlane.f32.xlu0 %v3771
        %v3805 = vpop.xlane.xlu0 %3804
        %3806 = vmax.xlane.f32.xlu0 %v3774
        %v3807 = vpop.xlane.xlu0 %3806
        %3808 = vmax.xlane.f32.xlu0 %v3776
        %v3809 = vpop.xlane.xlu0 %3808
        %v3810 = vsub.f32 %v3739, %v3779
        %v3811 = vsub.f32 %v3741, %v3781
        %v3812 = vsub.f32 %v3744, %v3783
        %v3813 = vsub.f32 %v3746, %v3785
        %v3814 = vsub.f32 %v3749, %v3787
        %v3815 = vsub.f32 %v3751, %v3789
        %v3816 = vsub.f32 %v3754, %v3791
        %v3817 = vsub.f32 %v3756, %v3793
        %v3818 = vsub.f32 %v3759, %v3795
        %v3819 = vsub.f32 %v3761, %v3797
        %v3820 = vsub.f32 %v3764, %v3799
        %v3821 = vsub.f32 %v3766, %v3801
        %v3822 = vsub.f32 %v3769, %v3803
        %v3823 = vsub.f32 %v3771, %v3805
        %v3824 = vsub.f32 %v3774, %v3807
        %v3825 = vsub.f32 %v3776, %v3809
        %v3826 = vmul.f32 %v3810, 1.442695
        %v3827 = vpow.pop %v3826
        %v3828 = vmul.f32 %v3811, 1.442695
        %v3829 = vpow.pop %v3828
        %v3830 = vmul.f32 %v3812, 1.442695
        %v3831 = vpow.pop %v3830
        %v3832 = vmul.f32 %v3813, 1.442695
        %v3833 = vpow.pop %v3832
        %v3834 = vmul.f32 %v3814, 1.442695
        %v3835 = vpow.pop %v3834
        %v3836 = vmul.f32 %v3815, 1.442695
        %v3837 = vpow.pop %v3836
        %v3838 = vmul.f32 %v3816, 1.442695
        %v3839 = vpow.pop %v3838
        %v3840 = vmul.f32 %v3817, 1.442695
        %v3841 = vpow.pop %v3840
        %v3842 = vmul.f32 %v3818, 1.442695
        %v3843 = vpow.pop %v3842
        %v3844 = vmul.f32 %v3819, 1.442695
        %v3845 = vpow.pop %v3844
        %v3846 = vmul.f32 %v3820, 1.442695
        %v3847 = vpow.pop %v3846
        %v3848 = vmul.f32 %v3821, 1.442695
        %v3849 = vpow.pop %v3848
        %v3850 = vmul.f32 %v3822, 1.442695
        %v3851 = vpow.pop %v3850
        %v3852 = vmul.f32 %v3823, 1.442695
        %v3853 = vpow.pop %v3852
        %v3854 = vmul.f32 %v3824, 1.442695
        %v3855 = vpow.pop %v3854
        %v3856 = vmul.f32 %v3825, 1.442695
        %v3857 = vpow.pop %v3856
        %3858 = vadd.xlane.f32.xlu0 %v3827
        %v3859 = vpop.xlane.xlu0 %3858
        %3860 = vadd.xlane.f32.xlu0 %v3829
        %v3861 = vpop.xlane.xlu0 %3860
        %3862 = vadd.xlane.f32.xlu0 %v3831
        %v3863 = vpop.xlane.xlu0 %3862
        %3864 = vadd.xlane.f32.xlu0 %v3833
        %v3865 = vpop.xlane.xlu0 %3864
        %3866 = vadd.xlane.f32.xlu0 %v3835
        %v3867 = vpop.xlane.xlu0 %3866
        %3868 = vadd.xlane.f32.xlu0 %v3837
        %v3869 = vpop.xlane.xlu0 %3868
        %3870 = vadd.xlane.f32.xlu0 %v3839
        %v3871 = vpop.xlane.xlu0 %3870
        %3872 = vadd.xlane.f32.xlu0 %v3841
        %v3873 = vpop.xlane.xlu0 %3872
        %3874 = vadd.xlane.f32.xlu0 %v3843
        %v3875 = vpop.xlane.xlu0 %3874
        %3876 = vadd.xlane.f32.xlu0 %v3845
        %v3877 = vpop.xlane.xlu0 %3876
        %3878 = vadd.xlane.f32.xlu0 %v3847
        %v3879 = vpop.xlane.xlu0 %3878
        %3880 = vadd.xlane.f32.xlu0 %v3849
        %v3881 = vpop.xlane.xlu0 %3880
        %3882 = vadd.xlane.f32.xlu0 %v3851
        %v3883 = vpop.xlane.xlu0 %3882
        %3884 = vadd.xlane.f32.xlu0 %v3853
        %v3885 = vpop.xlane.xlu0 %3884
        %3886 = vadd.xlane.f32.xlu0 %v3855
        %v3887 = vpop.xlane.xlu0 %3886
        %3888 = vadd.xlane.f32.xlu0 %v3857
        %v3889 = vpop.xlane.xlu0 %3888
        %v3890 = vpack.c.bf16 %v3829, %v3827
        %v3891 = vpack.c.bf16 %v3833, %v3831
        %v3892 = vpack.c.bf16 %v3837, %v3835
        %v3893 = vpack.c.bf16 %v3841, %v3839
        %v3894 = vpack.c.bf16 %v3845, %v3843
        %v3895 = vpack.c.bf16 %v3849, %v3847
        %v3896 = vpack.c.bf16 %v3853, %v3851
        %v3897 = vpack.c.bf16 %v3857, %v3855
        %v3914 = vunpack.c.l.b16 %v3553
        %v3915 = vunpack.c.l.b16 %v3554
        %v3916 = vunpack.c.l.b16 %v3555
        %v3917 = vunpack.c.l.b16 %v3556
        %v3918 = vunpack.c.l.b16 %v3557
        %v3919 = vunpack.c.l.b16 %v3558
        %v3920 = vunpack.c.l.b16 %v3559
        %v3921 = vunpack.c.l.b16 %v3560
        %v3922 = vunpack.c.l.b16 %v3561
        %v3923 = vunpack.c.l.b16 %v3562
        %v3924 = vunpack.c.l.b16 %v3563
        %v3925 = vunpack.c.l.b16 %v3564
        %v3926 = vunpack.c.l.b16 %v3565
        %v3927 = vunpack.c.l.b16 %v3566
        %v3928 = vunpack.c.l.b16 %v3567
        %v3929 = vunpack.c.l.b16 %v3568
        %v3930 = vpack.c.b16 %v3915, %v3914
        %v3931 = vpack.c.b16 %v3917, %v3916
        %v3932 = vpack.c.b16 %v3919, %v3918
        %v3933 = vpack.c.b16 %v3921, %v3920
        %v3934 = vpack.c.b16 %v3923, %v3922
        %v3935 = vpack.c.b16 %v3925, %v3924
        %v3936 = vpack.c.b16 %v3927, %v3926
        %v3937 = vpack.c.b16 %v3929, %v3928
        %3938 = vrot.lane.b32.xlu0 %v3930, 32
        %v3939 = vpop.permute.xlu0 %3938
        %3940 = vrot.lane.b32.xlu0 %v3931, 32
        %v3941 = vpop.permute.xlu0 %3940
        %3942 = vrot.lane.b32.xlu0 %v3932, 32
        %v3943 = vpop.permute.xlu0 %3942
        %3944 = vrot.lane.b32.xlu0 %v3933, 32
        %v3945 = vpop.permute.xlu0 %3944
        %3946 = vrot.lane.b32.xlu0 %v3934, 32
        %v3947 = vpop.permute.xlu0 %3946
        %3948 = vrot.lane.b32.xlu0 %v3935, 32
        %v3949 = vpop.permute.xlu0 %3948
        %3950 = vrot.lane.b32.xlu0 %v3936, 32
        %v3951 = vpop.permute.xlu0 %3950
        %3952 = vrot.lane.b32.xlu0 %v3937, 32
        %v3953 = vpop.permute.xlu0 %3952
        %3962 = vmatpush.bf16.msra.mxu0 %v3953
        %3963 = vmatpush.bf16.msra.mxu0 %v3951
        %3964 = vmatpush.bf16.msra.mxu0 %v3949
        %3965 = vmatpush.bf16.msra.mxu0 %v3947
        %3966 = vmatpush.bf16.msra.mxu0 %v3945
        %3967 = vmatpush.bf16.msra.mxu0 %v3943
        %3968 = vmatpush.bf16.msra.mxu0 %v3941
        %3969 = vmatpush.bf16.msra.mxu0 %v3939
        %3970 = vmatmul.bf16.gmra.mxu0 %v3890
        %v3971 = vpop.f32.mrf.mxu0
        %v3972 = vadd.f32 0.0, %v3971
        %v3973 = vpop.f32.mrf.mxu0
        %v3974 = vadd.f32 0.0, %v3973
        %3975 = vmatmul.bf16.gmra.mxu0 %v3891
        %v3976 = vpop.f32.mrf.mxu0
        %v3977 = vadd.f32 0.0, %v3976
        %v3978 = vpop.f32.mrf.mxu0
        %v3979 = vadd.f32 0.0, %v3978
        %3980 = vmatmul.bf16.gmra.mxu0 %v3892
        %v3981 = vpop.f32.mrf.mxu0
        %v3982 = vadd.f32 0.0, %v3981
        %v3983 = vpop.f32.mrf.mxu0
        %v3984 = vadd.f32 0.0, %v3983
        %3985 = vmatmul.bf16.gmra.mxu0 %v3893
        %v3986 = vpop.f32.mrf.mxu0
        %v3987 = vadd.f32 0.0, %v3986
        %v3988 = vpop.f32.mrf.mxu0
        %v3989 = vadd.f32 0.0, %v3988
        %3990 = vmatmul.bf16.gmra.mxu0 %v3894
        %v3991 = vpop.f32.mrf.mxu0
        %v3992 = vadd.f32 0.0, %v3991
        %v3993 = vpop.f32.mrf.mxu0
        %v3994 = vadd.f32 0.0, %v3993
        %3995 = vmatmul.bf16.gmra.mxu0 %v3895
        %v3996 = vpop.f32.mrf.mxu0
        %v3997 = vadd.f32 0.0, %v3996
        %v3998 = vpop.f32.mrf.mxu0
        %v3999 = vadd.f32 0.0, %v3998
        %4000 = vmatmul.bf16.gmra.mxu0 %v3896
        %v4001 = vpop.f32.mrf.mxu0
        %v4002 = vadd.f32 0.0, %v4001
        %v4003 = vpop.f32.mrf.mxu0
        %v4004 = vadd.f32 0.0, %v4003
        %4005 = vmatmul.bf16.gmra.mxu0 %v3897
        %v4006 = vpop.f32.mrf.mxu0
        %v4007 = vadd.f32 0.0, %v4006
        %v4008 = vpop.f32.mrf.mxu0
        %v4009 = vadd.f32 0.0, %v4008
        %4010 = vdwg.mxu0
        %v4011 = vrcp.pop %v3859
        %v4012 = vmul.f32 %v3859, %v4011
        %v4013 = vsub.f32 1.0, %v4012
        %v4014 = vmul.f32 %v4011, %v4013
        %v4015 = vadd.f32 %v4011, %v4014
        %vm4016 = vweird.f32 %v3859
        %vm4017 = vweird.f32 %v4011
        %vm4018 = vmor %vm4016, %vm4017
        %v4019 = vsel %vm4018, %v4011, %v4015
        %v4020 = vand.u32 2147483647, %v3859
        %vm4021 = vcmp.eq.f32.partialorder %v4020, 8.507059e+37
        %v4022 = vand.u32 %v3859, 2147483648
        %v4023 = vor.u32 1.1754944e-38, %v4022
        %v4024 = vsel %vm4021, %v4023, %v4019
        %v4025 = vrcp.pop %v3861
        %v4026 = vmul.f32 %v3861, %v4025
        %v4027 = vsub.f32 1.0, %v4026
        %v4028 = vmul.f32 %v4025, %v4027
        %v4029 = vadd.f32 %v4025, %v4028
        %vm4030 = vweird.f32 %v3861
        %vm4031 = vweird.f32 %v4025
        %vm4032 = vmor %vm4030, %vm4031
        %v4033 = vsel %vm4032, %v4025, %v4029
        %v4034 = vand.u32 2147483647, %v3861
        %vm4035 = vcmp.eq.f32.partialorder %v4034, 8.507059e+37
        %v4036 = vand.u32 %v3861, 2147483648
        %v4037 = vor.u32 1.1754944e-38, %v4036
        %v4038 = vsel %vm4035, %v4037, %v4033
        %v4039 = vrcp.pop %v3863
        %v4040 = vmul.f32 %v3863, %v4039
        %v4041 = vsub.f32 1.0, %v4040
        %v4042 = vmul.f32 %v4039, %v4041
        %v4043 = vadd.f32 %v4039, %v4042
        %vm4044 = vweird.f32 %v3863
        %vm4045 = vweird.f32 %v4039
        %vm4046 = vmor %vm4044, %vm4045
        %v4047 = vsel %vm4046, %v4039, %v4043
        %v4048 = vand.u32 2147483647, %v3863
        %vm4049 = vcmp.eq.f32.partialorder %v4048, 8.507059e+37
        %v4050 = vand.u32 %v3863, 2147483648
        %v4051 = vor.u32 1.1754944e-38, %v4050
        %v4052 = vsel %vm4049, %v4051, %v4047
        %v4053 = vrcp.pop %v3865
        %v4054 = vmul.f32 %v3865, %v4053
        %v4055 = vsub.f32 1.0, %v4054
        %v4056 = vmul.f32 %v4053, %v4055
        %v4057 = vadd.f32 %v4053, %v4056
        %vm4058 = vweird.f32 %v3865
        %vm4059 = vweird.f32 %v4053
        %vm4060 = vmor %vm4058, %vm4059
        %v4061 = vsel %vm4060, %v4053, %v4057
        %v4062 = vand.u32 2147483647, %v3865
        %vm4063 = vcmp.eq.f32.partialorder %v4062, 8.507059e+37
        %v4064 = vand.u32 %v3865, 2147483648
        %v4065 = vor.u32 1.1754944e-38, %v4064
        %v4066 = vsel %vm4063, %v4065, %v4061
        %v4067 = vrcp.pop %v3867
        %v4068 = vmul.f32 %v3867, %v4067
        %v4069 = vsub.f32 1.0, %v4068
        %v4070 = vmul.f32 %v4067, %v4069
        %v4071 = vadd.f32 %v4067, %v4070
        %vm4072 = vweird.f32 %v3867
        %vm4073 = vweird.f32 %v4067
        %vm4074 = vmor %vm4072, %vm4073
        %v4075 = vsel %vm4074, %v4067, %v4071
        %v4076 = vand.u32 2147483647, %v3867
        %vm4077 = vcmp.eq.f32.partialorder %v4076, 8.507059e+37
        %v4078 = vand.u32 %v3867, 2147483648
        %v4079 = vor.u32 1.1754944e-38, %v4078
        %v4080 = vsel %vm4077, %v4079, %v4075
        %v4081 = vrcp.pop %v3869
        %v4082 = vmul.f32 %v3869, %v4081
        %v4083 = vsub.f32 1.0, %v4082
        %v4084 = vmul.f32 %v4081, %v4083
        %v4085 = vadd.f32 %v4081, %v4084
        %vm4086 = vweird.f32 %v3869
        %vm4087 = vweird.f32 %v4081
        %vm4088 = vmor %vm4086, %vm4087
        %v4089 = vsel %vm4088, %v4081, %v4085
        %v4090 = vand.u32 2147483647, %v3869
        %vm4091 = vcmp.eq.f32.partialorder %v4090, 8.507059e+37
        %v4092 = vand.u32 %v3869, 2147483648
        %v4093 = vor.u32 1.1754944e-38, %v4092
        %v4094 = vsel %vm4091, %v4093, %v4089
        %v4095 = vrcp.pop %v3871
        %v4096 = vmul.f32 %v3871, %v4095
        %v4097 = vsub.f32 1.0, %v4096
        %v4098 = vmul.f32 %v4095, %v4097
        %v4099 = vadd.f32 %v4095, %v4098
        %vm4100 = vweird.f32 %v3871
        %vm4101 = vweird.f32 %v4095
        %vm4102 = vmor %vm4100, %vm4101
        %v4103 = vsel %vm4102, %v4095, %v4099
        %v4104 = vand.u32 2147483647, %v3871
        %vm4105 = vcmp.eq.f32.partialorder %v4104, 8.507059e+37
        %v4106 = vand.u32 %v3871, 2147483648
        %v4107 = vor.u32 1.1754944e-38, %v4106
        %v4108 = vsel %vm4105, %v4107, %v4103
        %v4109 = vrcp.pop %v3873
        %v4110 = vmul.f32 %v3873, %v4109
        %v4111 = vsub.f32 1.0, %v4110
        %v4112 = vmul.f32 %v4109, %v4111
        %v4113 = vadd.f32 %v4109, %v4112
        %vm4114 = vweird.f32 %v3873
        %vm4115 = vweird.f32 %v4109
        %vm4116 = vmor %vm4114, %vm4115
        %v4117 = vsel %vm4116, %v4109, %v4113
        %v4118 = vand.u32 2147483647, %v3873
        %vm4119 = vcmp.eq.f32.partialorder %v4118, 8.507059e+37
        %v4120 = vand.u32 %v3873, 2147483648
        %v4121 = vor.u32 1.1754944e-38, %v4120
        %v4122 = vsel %vm4119, %v4121, %v4117
        %v4123 = vrcp.pop %v3875
        %v4124 = vmul.f32 %v3875, %v4123
        %v4125 = vsub.f32 1.0, %v4124
        %v4126 = vmul.f32 %v4123, %v4125
        %v4127 = vadd.f32 %v4123, %v4126
        %vm4128 = vweird.f32 %v3875
        %vm4129 = vweird.f32 %v4123
        %vm4130 = vmor %vm4128, %vm4129
        %v4131 = vsel %vm4130, %v4123, %v4127
        %v4132 = vand.u32 2147483647, %v3875
        %vm4133 = vcmp.eq.f32.partialorder %v4132, 8.507059e+37
        %v4134 = vand.u32 %v3875, 2147483648
        %v4135 = vor.u32 1.1754944e-38, %v4134
        %v4136 = vsel %vm4133, %v4135, %v4131
        %v4137 = vrcp.pop %v3877
        %v4138 = vmul.f32 %v3877, %v4137
        %v4139 = vsub.f32 1.0, %v4138
        %v4140 = vmul.f32 %v4137, %v4139
        %v4141 = vadd.f32 %v4137, %v4140
        %vm4142 = vweird.f32 %v3877
        %vm4143 = vweird.f32 %v4137
        %vm4144 = vmor %vm4142, %vm4143
        %v4145 = vsel %vm4144, %v4137, %v4141
        %v4146 = vand.u32 2147483647, %v3877
        %vm4147 = vcmp.eq.f32.partialorder %v4146, 8.507059e+37
        %v4148 = vand.u32 %v3877, 2147483648
        %v4149 = vor.u32 1.1754944e-38, %v4148
        %v4150 = vsel %vm4147, %v4149, %v4145
        %v4151 = vrcp.pop %v3879
        %v4152 = vmul.f32 %v3879, %v4151
        %v4153 = vsub.f32 1.0, %v4152
        %v4154 = vmul.f32 %v4151, %v4153
        %v4155 = vadd.f32 %v4151, %v4154
        %vm4156 = vweird.f32 %v3879
        %vm4157 = vweird.f32 %v4151
        %vm4158 = vmor %vm4156, %vm4157
        %v4159 = vsel %vm4158, %v4151, %v4155
        %v4160 = vand.u32 2147483647, %v3879
        %vm4161 = vcmp.eq.f32.partialorder %v4160, 8.507059e+37
        %v4162 = vand.u32 %v3879, 2147483648
        %v4163 = vor.u32 1.1754944e-38, %v4162
        %v4164 = vsel %vm4161, %v4163, %v4159
        %v4165 = vrcp.pop %v3881
        %v4166 = vmul.f32 %v3881, %v4165
        %v4167 = vsub.f32 1.0, %v4166
        %v4168 = vmul.f32 %v4165, %v4167
        %v4169 = vadd.f32 %v4165, %v4168
        %vm4170 = vweird.f32 %v3881
        %vm4171 = vweird.f32 %v4165
        %vm4172 = vmor %vm4170, %vm4171
        %v4173 = vsel %vm4172, %v4165, %v4169
        %v4174 = vand.u32 2147483647, %v3881
        %vm4175 = vcmp.eq.f32.partialorder %v4174, 8.507059e+37
        %v4176 = vand.u32 %v3881, 2147483648
        %v4177 = vor.u32 1.1754944e-38, %v4176
        %v4178 = vsel %vm4175, %v4177, %v4173
        %v4179 = vrcp.pop %v3883
        %v4180 = vmul.f32 %v3883, %v4179
        %v4181 = vsub.f32 1.0, %v4180
        %v4182 = vmul.f32 %v4179, %v4181
        %v4183 = vadd.f32 %v4179, %v4182
        %vm4184 = vweird.f32 %v3883
        %vm4185 = vweird.f32 %v4179
        %vm4186 = vmor %vm4184, %vm4185
        %v4187 = vsel %vm4186, %v4179, %v4183
        %v4188 = vand.u32 2147483647, %v3883
        %vm4189 = vcmp.eq.f32.partialorder %v4188, 8.507059e+37
        %v4190 = vand.u32 %v3883, 2147483648
        %v4191 = vor.u32 1.1754944e-38, %v4190
        %v4192 = vsel %vm4189, %v4191, %v4187
        %v4193 = vrcp.pop %v3885
        %v4194 = vmul.f32 %v3885, %v4193
        %v4195 = vsub.f32 1.0, %v4194
        %v4196 = vmul.f32 %v4193, %v4195
        %v4197 = vadd.f32 %v4193, %v4196
        %vm4198 = vweird.f32 %v3885
        %vm4199 = vweird.f32 %v4193
        %vm4200 = vmor %vm4198, %vm4199
        %v4201 = vsel %vm4200, %v4193, %v4197
        %v4202 = vand.u32 2147483647, %v3885
        %vm4203 = vcmp.eq.f32.partialorder %v4202, 8.507059e+37
        %v4204 = vand.u32 %v3885, 2147483648
        %v4205 = vor.u32 1.1754944e-38, %v4204
        %v4206 = vsel %vm4203, %v4205, %v4201
        %v4207 = vrcp.pop %v3887
        %v4208 = vmul.f32 %v3887, %v4207
        %v4209 = vsub.f32 1.0, %v4208
        %v4210 = vmul.f32 %v4207, %v4209
        %v4211 = vadd.f32 %v4207, %v4210
        %vm4212 = vweird.f32 %v3887
        %vm4213 = vweird.f32 %v4207
        %vm4214 = vmor %vm4212, %vm4213
        %v4215 = vsel %vm4214, %v4207, %v4211
        %v4216 = vand.u32 2147483647, %v3887
        %vm4217 = vcmp.eq.f32.partialorder %v4216, 8.507059e+37
        %v4218 = vand.u32 %v3887, 2147483648
        %v4219 = vor.u32 1.1754944e-38, %v4218
        %v4220 = vsel %vm4217, %v4219, %v4215
        %v4221 = vrcp.pop %v3889
        %v4222 = vmul.f32 %v3889, %v4221
        %v4223 = vsub.f32 1.0, %v4222
        %v4224 = vmul.f32 %v4221, %v4223
        %v4225 = vadd.f32 %v4221, %v4224
        %vm4226 = vweird.f32 %v3889
        %vm4227 = vweird.f32 %v4221
        %vm4228 = vmor %vm4226, %vm4227
        %v4229 = vsel %vm4228, %v4221, %v4225
        %v4230 = vand.u32 2147483647, %v3889
        %vm4231 = vcmp.eq.f32.partialorder %v4230, 8.507059e+37
        %v4232 = vand.u32 %v3889, 2147483648
        %v4233 = vor.u32 1.1754944e-38, %v4232
        %v4234 = vsel %vm4231, %v4233, %v4229
        %v4235 = vmul.f32 %v3972, %v4024
        %v4236 = vmul.f32 %v3974, %v4038
        %v4237 = vmul.f32 %v3977, %v4052
        %v4238 = vmul.f32 %v3979, %v4066
        %v4239 = vmul.f32 %v3982, %v4080
        %v4240 = vmul.f32 %v3984, %v4094
        %v4241 = vmul.f32 %v3987, %v4108
        %v4242 = vmul.f32 %v3989, %v4122
        %v4243 = vmul.f32 %v3992, %v4136
        %v4244 = vmul.f32 %v3994, %v4150
        %v4245 = vmul.f32 %v3997, %v4164
        %v4246 = vmul.f32 %v3999, %v4178
        %v4247 = vmul.f32 %v4002, %v4192
        %v4248 = vmul.f32 %v4004, %v4206
        %v4249 = vmul.f32 %v4007, %v4220
        %v4250 = vmul.f32 %v4009, %v4234
        %v4251 = vpack.c.bf16 %v4235, %v4235
        %v4252 = vpack.c.bf16 %v4236, %v4236
        %v4253 = vpack.c.bf16 %v4237, %v4237
        %v4254 = vpack.c.bf16 %v4238, %v4238
        %v4255 = vpack.c.bf16 %v4239, %v4239
        %v4256 = vpack.c.bf16 %v4240, %v4240
        %v4257 = vpack.c.bf16 %v4241, %v4241
        %v4258 = vpack.c.bf16 %v4242, %v4242
        %v4259 = vpack.c.bf16 %v4243, %v4243
        %v4260 = vpack.c.bf16 %v4244, %v4244
        %v4261 = vpack.c.bf16 %v4245, %v4245
        %v4262 = vpack.c.bf16 %v4246, %v4246
        %v4263 = vpack.c.bf16 %v4247, %v4247
        %v4264 = vpack.c.bf16 %v4248, %v4248
        %v4265 = vpack.c.bf16 %v4249, %v4249
        %v4266 = vpack.c.bf16 %v4250, %v4250
        %4283 = vrot.lane.b32.xlu0 %v4251, 96
        %v4284 = vpop.permute.xlu0 %4283
        %4285 = vrot.lane.b32.xlu0 %v4252, 96
        %v4286 = vpop.permute.xlu0 %4285
        %4287 = vrot.lane.b32.xlu0 %v4253, 96
        %v4288 = vpop.permute.xlu0 %4287
        %4289 = vrot.lane.b32.xlu0 %v4254, 96
        %v4290 = vpop.permute.xlu0 %4289
        %4291 = vrot.lane.b32.xlu0 %v4255, 96
        %v4292 = vpop.permute.xlu0 %4291
        %4293 = vrot.lane.b32.xlu0 %v4256, 96
        %v4294 = vpop.permute.xlu0 %4293
        %4295 = vrot.lane.b32.xlu0 %v4257, 96
        %v4296 = vpop.permute.xlu0 %4295
        %4297 = vrot.lane.b32.xlu0 %v4258, 96
        %v4298 = vpop.permute.xlu0 %4297
        %4299 = vrot.lane.b32.xlu0 %v4259, 96
        %v4300 = vpop.permute.xlu0 %4299
        %4301 = vrot.lane.b32.xlu0 %v4260, 96
        %v4302 = vpop.permute.xlu0 %4301
        %4303 = vrot.lane.b32.xlu0 %v4261, 96
        %v4304 = vpop.permute.xlu0 %4303
        %4305 = vrot.lane.b32.xlu0 %v4262, 96
        %v4306 = vpop.permute.xlu0 %4305
        %4307 = vrot.lane.b32.xlu0 %v4263, 96
        %v4308 = vpop.permute.xlu0 %4307
        %4309 = vrot.lane.b32.xlu0 %v4264, 96
        %v4310 = vpop.permute.xlu0 %4309
        %4311 = vrot.lane.b32.xlu0 %v4265, 96
        %v4312 = vpop.permute.xlu0 %4311
        %4313 = vrot.lane.b32.xlu0 %v4266, 96
        %v4314 = vpop.permute.xlu0 %4313
        %vm4331 = vcmask 1044224
        %4332 = vst.msk [vmem:[#allocation5] sm:$0xf] %vm4331, %v4284
        %4333 = vst.msk [vmem:[#allocation5 + $0x4] sm:$0xf] %vm4331, %v4286
        %4334 = vst.msk [vmem:[#allocation5 + $0x8] sm:$0xf] %vm4331, %v4288
        %4335 = vst.msk [vmem:[#allocation5 + $0xc] sm:$0xf] %vm4331, %v4290
        %4336 = vst.msk [vmem:[#allocation5 + $0x10] sm:$0xf] %vm4331, %v4292
        %4337 = vst.msk [vmem:[#allocation5 + $0x14] sm:$0xf] %vm4331, %v4294
        %4338 = vst.msk [vmem:[#allocation5 + $0x18] sm:$0xf] %vm4331, %v4296
        %4339 = vst.msk [vmem:[#allocation5 + $0x1c] sm:$0xf] %vm4331, %v4298
        %4340 = vst.msk [vmem:[#allocation5 + $0x20] sm:$0xf] %vm4331, %v4300
        %4341 = vst.msk [vmem:[#allocation5 + $0x24] sm:$0xf] %vm4331, %v4302
        %4342 = vst.msk [vmem:[#allocation5 + $0x28] sm:$0xf] %vm4331, %v4304
        %4343 = vst.msk [vmem:[#allocation5 + $0x2c] sm:$0xf] %vm4331, %v4306
        %4344 = vst.msk [vmem:[#allocation5 + $0x30] sm:$0xf] %vm4331, %v4308
        %4345 = vst.msk [vmem:[#allocation5 + $0x34] sm:$0xf] %vm4331, %v4310
        %4346 = vst.msk [vmem:[#allocation5 + $0x38] sm:$0xf] %vm4331, %v4312
        %4347 = vst.msk [vmem:[#allocation5 + $0x3c] sm:$0xf] %vm4331, %v4314
        %v4348 = vld [vmem:[#allocation5] sm:$0xf]
        %v4349 = vld [vmem:[#allocation5 + $0x4] sm:$0xf]
        %v4350 = vld [vmem:[#allocation5 + $0x8] sm:$0xf]
        %v4351 = vld [vmem:[#allocation5 + $0xc] sm:$0xf]
        %v4352 = vld [vmem:[#allocation5 + $0x10] sm:$0xf]
        %v4353 = vld [vmem:[#allocation5 + $0x14] sm:$0xf]
        %v4354 = vld [vmem:[#allocation5 + $0x18] sm:$0xf]
        %v4355 = vld [vmem:[#allocation5 + $0x1c] sm:$0xf]
        %v4356 = vld [vmem:[#allocation5 + $0x20] sm:$0xf]
        %v4357 = vld [vmem:[#allocation5 + $0x24] sm:$0xf]
        %v4358 = vld [vmem:[#allocation5 + $0x28] sm:$0xf]
        %v4359 = vld [vmem:[#allocation5 + $0x2c] sm:$0xf]
        %v4360 = vld [vmem:[#allocation5 + $0x30] sm:$0xf]
        %v4361 = vld [vmem:[#allocation5 + $0x34] sm:$0xf]
        %v4362 = vld [vmem:[#allocation5 + $0x38] sm:$0xf]
        %v4363 = vld [vmem:[#allocation5 + $0x3c] sm:$0xf]
        %v4364 = vld [vmem:[#allocation17] sm:$0xf]
        %v4365 = vld [vmem:[#allocation17 + $0x4] sm:$0xf]
        %v4366 = vld [vmem:[#allocation17 + $0x8] sm:$0xf]
        %v4367 = vld [vmem:[#allocation17 + $0xc] sm:$0xf]
        %v4368 = vld [vmem:[#allocation17 + $0x10] sm:$0xf]
        %v4369 = vld [vmem:[#allocation17 + $0x14] sm:$0xf]
        %v4370 = vld [vmem:[#allocation17 + $0x18] sm:$0xf]
        %v4371 = vld [vmem:[#allocation17 + $0x1c] sm:$0xf]
        %v4372 = vld [vmem:[#allocation17 + $0x20] sm:$0xf]
        %v4373 = vld [vmem:[#allocation17 + $0x24] sm:$0xf]
        %v4374 = vld [vmem:[#allocation17 + $0x28] sm:$0xf]
        %v4375 = vld [vmem:[#allocation17 + $0x2c] sm:$0xf]
        %v4376 = vld [vmem:[#allocation17 + $0x30] sm:$0xf]
        %v4377 = vld [vmem:[#allocation17 + $0x34] sm:$0xf]
        %v4378 = vld [vmem:[#allocation17 + $0x38] sm:$0xf]
        %v4379 = vld [vmem:[#allocation17 + $0x3c] sm:$0xf]
        %v4380 = vld [vmem:[%s10] sm:$0x1]
        %v4382 = vperm.slane %v4380, 0
        %v4400 = vunpack.c.l.b16 %v4348
        %v4401 = vunpack.c.l.b16 %v4349
        %v4402 = vunpack.c.l.b16 %v4350
        %v4403 = vunpack.c.l.b16 %v4351
        %v4404 = vunpack.c.l.b16 %v4352
        %v4405 = vunpack.c.l.b16 %v4353
        %v4406 = vunpack.c.l.b16 %v4354
        %v4407 = vunpack.c.l.b16 %v4355
        %v4408 = vunpack.c.l.b16 %v4356
        %v4409 = vunpack.c.l.b16 %v4357
        %v4410 = vunpack.c.l.b16 %v4358
        %v4411 = vunpack.c.l.b16 %v4359
        %v4412 = vunpack.c.l.b16 %v4360
        %v4413 = vunpack.c.l.b16 %v4361
        %v4414 = vunpack.c.l.b16 %v4362
        %v4415 = vunpack.c.l.b16 %v4363
        %v4416 = vpack.c.b16 %v4401, %v4400
        %v4417 = vpack.c.b16 %v4403, %v4402
        %v4418 = vpack.c.b16 %v4405, %v4404
        %v4419 = vpack.c.b16 %v4407, %v4406
        %v4420 = vpack.c.b16 %v4409, %v4408
        %v4421 = vpack.c.b16 %v4411, %v4410
        %v4422 = vpack.c.b16 %v4413, %v4412
        %v4423 = vpack.c.b16 %v4415, %v4414
        %v4448 = vunpack.c.l.b16 %v4364
        %v4449 = vunpack.c.l.b16 %v4365
        %v4450 = vunpack.c.l.b16 %v4366
        %v4451 = vunpack.c.l.b16 %v4367
        %v4452 = vunpack.c.l.b16 %v4368
        %v4453 = vunpack.c.l.b16 %v4369
        %v4454 = vunpack.c.l.b16 %v4370
        %v4455 = vunpack.c.l.b16 %v4371
        %v4456 = vunpack.c.l.b16 %v4372
        %v4457 = vunpack.c.l.b16 %v4373
        %v4458 = vunpack.c.l.b16 %v4374
        %v4459 = vunpack.c.l.b16 %v4375
        %v4460 = vunpack.c.l.b16 %v4376
        %v4461 = vunpack.c.l.b16 %v4377
        %v4462 = vunpack.c.l.b16 %v4378
        %v4463 = vunpack.c.l.b16 %v4379
        %v4464 = vpack.c.b16 %v4449, %v4448
        %v4465 = vpack.c.b16 %v4451, %v4450
        %v4466 = vpack.c.b16 %v4453, %v4452
        %v4467 = vpack.c.b16 %v4455, %v4454
        %v4468 = vpack.c.b16 %v4457, %v4456
        %v4469 = vpack.c.b16 %v4459, %v4458
        %v4470 = vpack.c.b16 %v4461, %v4460
        %v4471 = vpack.c.b16 %v4463, %v4462
        %4480 = vmatpush.bf16.msra.mxu0 %v4471
        %4481 = vmatpush.bf16.msra.mxu0 %v4470
        %4482 = vmatpush.bf16.msra.mxu0 %v4469
        %4483 = vmatpush.bf16.msra.mxu0 %v4468
        %4484 = vmatpush.bf16.msra.mxu0 %v4467
        %4485 = vmatpush.bf16.msra.mxu0 %v4466
        %4486 = vmatpush.bf16.msra.mxu0 %v4465
        %4487 = vmatpush.bf16.msra.mxu0 %v4464
        %4488 = vmatmul.bf16.gmra.mxu0 %v4416
        %v4489 = vpop.f32.mrf.mxu0
        %v4490 = vadd.f32 %v4382, %v4489
        %v4491 = vpop.f32.mrf.mxu0
        %v4492 = vadd.f32 %v4382, %v4491
        %4493 = vmatmul.bf16.gmra.mxu0 %v4417
        %v4494 = vpop.f32.mrf.mxu0
        %v4495 = vadd.f32 %v4382, %v4494
        %v4496 = vpop.f32.mrf.mxu0
        %v4497 = vadd.f32 %v4382, %v4496
        %4498 = vmatmul.bf16.gmra.mxu0 %v4418
        %v4499 = vpop.f32.mrf.mxu0
        %v4500 = vadd.f32 %v4382, %v4499
        %v4501 = vpop.f32.mrf.mxu0
        %v4502 = vadd.f32 %v4382, %v4501
        %4503 = vmatmul.bf16.gmra.mxu0 %v4419
        %v4504 = vpop.f32.mrf.mxu0
        %v4505 = vadd.f32 %v4382, %v4504
        %v4506 = vpop.f32.mrf.mxu0
        %v4507 = vadd.f32 %v4382, %v4506
        %4508 = vmatmul.bf16.gmra.mxu0 %v4420
        %v4509 = vpop.f32.mrf.mxu0
        %v4510 = vadd.f32 %v4382, %v4509
        %v4511 = vpop.f32.mrf.mxu0
        %v4512 = vadd.f32 %v4382, %v4511
        %4513 = vmatmul.bf16.gmra.mxu0 %v4421
        %v4514 = vpop.f32.mrf.mxu0
        %v4515 = vadd.f32 %v4382, %v4514
        %v4516 = vpop.f32.mrf.mxu0
        %v4517 = vadd.f32 %v4382, %v4516
        %4518 = vmatmul.bf16.gmra.mxu0 %v4422
        %v4519 = vpop.f32.mrf.mxu0
        %v4520 = vadd.f32 %v4382, %v4519
        %v4521 = vpop.f32.mrf.mxu0
        %v4522 = vadd.f32 %v4382, %v4521
        %4523 = vmatmul.bf16.gmra.mxu0 %v4423
        %v4524 = vpop.f32.mrf.mxu0
        %v4525 = vadd.f32 %v4382, %v4524
        %v4526 = vpop.f32.mrf.mxu0
        %v4527 = vadd.f32 %v4382, %v4526
        %4528 = vdwg.mxu0
        %v4529 = vld [vmem:[%s532] sm:$0xff]
        %v4530 = vld [vmem:[%s532 + $0x8] sm:$0xff]
        %v4531 = vld [vmem:[%s532 + $0x10] sm:$0xff]
        %v4532 = vld [vmem:[%s532 + $0x18] sm:$0xff]
        %v4533 = vld [vmem:[%s532 + $0x20] sm:$0xff]
        %v4534 = vld [vmem:[%s532 + $0x28] sm:$0xff]
        %v4535 = vld [vmem:[%s532 + $0x30] sm:$0xff]
        %v4536 = vld [vmem:[%s532 + $0x38] sm:$0xff]
        %v4537 = vld [vmem:[%s532 + $0x40] sm:$0xff]
        %v4538 = vld [vmem:[%s532 + $0x48] sm:$0xff]
        %v4539 = vld [vmem:[%s532 + $0x50] sm:$0xff]
        %v4540 = vld [vmem:[%s532 + $0x58] sm:$0xff]
        %v4541 = vld [vmem:[%s532 + $0x60] sm:$0xff]
        %v4542 = vld [vmem:[%s532 + $0x68] sm:$0xff]
        %v4543 = vld [vmem:[%s532 + $0x70] sm:$0xff]
        %v4544 = vld [vmem:[%s532 + $0x78] sm:$0xff]
        %v4545 = vadd.f32 %v4529, %v4490
        %v4546 = vadd.f32 %v4530, %v4492
        %v4547 = vadd.f32 %v4531, %v4495
        %v4548 = vadd.f32 %v4532, %v4497
        %v4549 = vadd.f32 %v4533, %v4500
        %v4550 = vadd.f32 %v4534, %v4502
        %v4551 = vadd.f32 %v4535, %v4505
        %v4552 = vadd.f32 %v4536, %v4507
        %v4553 = vadd.f32 %v4537, %v4510
        %v4554 = vadd.f32 %v4538, %v4512
        %v4555 = vadd.f32 %v4539, %v4515
        %v4556 = vadd.f32 %v4540, %v4517
        %v4557 = vadd.f32 %v4541, %v4520
        %v4558 = vadd.f32 %v4542, %v4522
        %v4559 = vadd.f32 %v4543, %v4525
        %v4560 = vadd.f32 %v4544, %v4527
        %4561 = vadd.xlane.f32.xlu0 %v4545
        %v4562 = vpop.xlane.xlu0 %4561
        %4563 = vadd.xlane.f32.xlu0 %v4546
        %v4564 = vpop.xlane.xlu0 %4563
        %4565 = vadd.xlane.f32.xlu0 %v4547
        %v4566 = vpop.xlane.xlu0 %4565
        %4567 = vadd.xlane.f32.xlu0 %v4548
        %v4568 = vpop.xlane.xlu0 %4567
        %4569 = vadd.xlane.f32.xlu0 %v4549
        %v4570 = vpop.xlane.xlu0 %4569
        %4571 = vadd.xlane.f32.xlu0 %v4550
        %v4572 = vpop.xlane.xlu0 %4571
        %4573 = vadd.xlane.f32.xlu0 %v4551
        %v4574 = vpop.xlane.xlu0 %4573
        %4575 = vadd.xlane.f32.xlu0 %v4552
        %v4576 = vpop.xlane.xlu0 %4575
        %4577 = vadd.xlane.f32.xlu0 %v4553
        %v4578 = vpop.xlane.xlu0 %4577
        %4579 = vadd.xlane.f32.xlu0 %v4554
        %v4580 = vpop.xlane.xlu0 %4579
        %4581 = vadd.xlane.f32.xlu0 %v4555
        %v4582 = vpop.xlane.xlu0 %4581
        %4583 = vadd.xlane.f32.xlu0 %v4556
        %v4584 = vpop.xlane.xlu0 %4583
        %4585 = vadd.xlane.f32.xlu0 %v4557
        %v4586 = vpop.xlane.xlu0 %4585
        %4587 = vadd.xlane.f32.xlu0 %v4558
        %v4588 = vpop.xlane.xlu0 %4587
        %4589 = vadd.xlane.f32.xlu0 %v4559
        %v4590 = vpop.xlane.xlu0 %4589
        %4591 = vadd.xlane.f32.xlu0 %v4560
        %v4592 = vpop.xlane.xlu0 %4591
        %v4593 = vrcp.pop 128.0
        %v4594 = vmul.f32 128.0, %v4593
        %v4595 = vsub.f32 1.0, %v4594
        %v4596 = vmul.f32 %v4593, %v4595
        %v4597 = vadd.f32 %v4593, %v4596
        %vm4598 = vweird.f32 %v4593
        %v4599 = vsel %vm4598, %v4593, %v4597
        %v4600 = vmul.f32 %v4562, %v4599
        %v4601 = vmul.f32 %v4564, %v4599
        %v4602 = vmul.f32 %v4566, %v4599
        %v4603 = vmul.f32 %v4568, %v4599
        %v4604 = vmul.f32 %v4570, %v4599
        %v4605 = vmul.f32 %v4572, %v4599
        %v4606 = vmul.f32 %v4574, %v4599
        %v4607 = vmul.f32 %v4576, %v4599
        %v4608 = vmul.f32 %v4578, %v4599
        %v4609 = vmul.f32 %v4580, %v4599
        %v4610 = vmul.f32 %v4582, %v4599
        %v4611 = vmul.f32 %v4584, %v4599
        %v4612 = vmul.f32 %v4586, %v4599
        %v4613 = vmul.f32 %v4588, %v4599
        %v4614 = vmul.f32 %v4590, %v4599
        %v4615 = vmul.f32 %v4592, %v4599
        %v4616 = vsub.f32 %v4545, %v4600
        %v4617 = vsub.f32 %v4546, %v4601
        %v4618 = vsub.f32 %v4547, %v4602
        %v4619 = vsub.f32 %v4548, %v4603
        %v4620 = vsub.f32 %v4549, %v4604
        %v4621 = vsub.f32 %v4550, %v4605
        %v4622 = vsub.f32 %v4551, %v4606
        %v4623 = vsub.f32 %v4552, %v4607
        %v4624 = vsub.f32 %v4553, %v4608
        %v4625 = vsub.f32 %v4554, %v4609
        %v4626 = vsub.f32 %v4555, %v4610
        %v4627 = vsub.f32 %v4556, %v4611
        %v4628 = vsub.f32 %v4557, %v4612
        %v4629 = vsub.f32 %v4558, %v4613
        %v4630 = vsub.f32 %v4559, %v4614
        %v4631 = vsub.f32 %v4560, %v4615
        %v4632 = vmul.f32 %v4616, %v4616
        %v4633 = vmul.f32 %v4617, %v4617
        %v4634 = vmul.f32 %v4618, %v4618
        %v4635 = vmul.f32 %v4619, %v4619
        %v4636 = vmul.f32 %v4620, %v4620
        %v4637 = vmul.f32 %v4621, %v4621
        %v4638 = vmul.f32 %v4622, %v4622
        %v4639 = vmul.f32 %v4623, %v4623
        %v4640 = vmul.f32 %v4624, %v4624
        %v4641 = vmul.f32 %v4625, %v4625
        %v4642 = vmul.f32 %v4626, %v4626
        %v4643 = vmul.f32 %v4627, %v4627
        %v4644 = vmul.f32 %v4628, %v4628
        %v4645 = vmul.f32 %v4629, %v4629
        %v4646 = vmul.f32 %v4630, %v4630
        %v4647 = vmul.f32 %v4631, %v4631
        %4648 = vadd.xlane.f32.xlu0 %v4632
        %v4649 = vpop.xlane.xlu0 %4648
        %4650 = vadd.xlane.f32.xlu0 %v4633
        %v4651 = vpop.xlane.xlu0 %4650
        %4652 = vadd.xlane.f32.xlu0 %v4634
        %v4653 = vpop.xlane.xlu0 %4652
        %4654 = vadd.xlane.f32.xlu0 %v4635
        %v4655 = vpop.xlane.xlu0 %4654
        %4656 = vadd.xlane.f32.xlu0 %v4636
        %v4657 = vpop.xlane.xlu0 %4656
        %4658 = vadd.xlane.f32.xlu0 %v4637
        %v4659 = vpop.xlane.xlu0 %4658
        %4660 = vadd.xlane.f32.xlu0 %v4638
        %v4661 = vpop.xlane.xlu0 %4660
        %4662 = vadd.xlane.f32.xlu0 %v4639
        %v4663 = vpop.xlane.xlu0 %4662
        %4664 = vadd.xlane.f32.xlu0 %v4640
        %v4665 = vpop.xlane.xlu0 %4664
        %4666 = vadd.xlane.f32.xlu0 %v4641
        %v4667 = vpop.xlane.xlu0 %4666
        %4668 = vadd.xlane.f32.xlu0 %v4642
        %v4669 = vpop.xlane.xlu0 %4668
        %4670 = vadd.xlane.f32.xlu0 %v4643
        %v4671 = vpop.xlane.xlu0 %4670
        %4672 = vadd.xlane.f32.xlu0 %v4644
        %v4673 = vpop.xlane.xlu0 %4672
        %4674 = vadd.xlane.f32.xlu0 %v4645
        %v4675 = vpop.xlane.xlu0 %4674
        %4676 = vadd.xlane.f32.xlu0 %v4646
        %v4677 = vpop.xlane.xlu0 %4676
        %4678 = vadd.xlane.f32.xlu0 %v4647
        %v4679 = vpop.xlane.xlu0 %4678
        %v4680 = vmul.f32 %v4649, %v4599
        %v4681 = vmul.f32 %v4651, %v4599
        %v4682 = vmul.f32 %v4653, %v4599
        %v4683 = vmul.f32 %v4655, %v4599
        %v4684 = vmul.f32 %v4657, %v4599
        %v4685 = vmul.f32 %v4659, %v4599
        %v4686 = vmul.f32 %v4661, %v4599
        %v4687 = vmul.f32 %v4663, %v4599
        %v4688 = vmul.f32 %v4665, %v4599
        %v4689 = vmul.f32 %v4667, %v4599
        %v4690 = vmul.f32 %v4669, %v4599
        %v4691 = vmul.f32 %v4671, %v4599
        %v4692 = vmul.f32 %v4673, %v4599
        %v4693 = vmul.f32 %v4675, %v4599
        %v4694 = vmul.f32 %v4677, %v4599
        %v4695 = vmul.f32 %v4679, %v4599
        %v4696 = vadd.f32 %v4680, 1e-05
        %v4697 = vadd.f32 %v4681, 1e-05
        %v4698 = vadd.f32 %v4682, 1e-05
        %v4699 = vadd.f32 %v4683, 1e-05
        %v4700 = vadd.f32 %v4684, 1e-05
        %v4701 = vadd.f32 %v4685, 1e-05
        %v4702 = vadd.f32 %v4686, 1e-05
        %v4703 = vadd.f32 %v4687, 1e-05
        %v4704 = vadd.f32 %v4688, 1e-05
        %v4705 = vadd.f32 %v4689, 1e-05
        %v4706 = vadd.f32 %v4690, 1e-05
        %v4707 = vadd.f32 %v4691, 1e-05
        %v4708 = vadd.f32 %v4692, 1e-05
        %v4709 = vadd.f32 %v4693, 1e-05
        %v4710 = vadd.f32 %v4694, 1e-05
        %v4711 = vadd.f32 %v4695, 1e-05
        %v4712 = vrsqrt.pop %v4696
        %v4713 = vmul.f32 %v4712, %v4696
        %v4714 = vmul.f32 %v4713, %v4712
        %v4715 = vmul.f32 0.5, %v4714
        %v4716 = vsub.f32 1.5, %v4715
        %v4717 = vmul.f32 %v4712, %v4716
        %vm4718 = vweird.f32 %v4696
        %vm4719 = vweird.f32 %v4712
        %vm4720 = vmor %vm4718, %vm4719
        %v4721 = vsel %vm4720, %v4712, %v4717
        %v4722 = vrsqrt.pop %v4697
        %v4723 = vmul.f32 %v4722, %v4697
        %v4724 = vmul.f32 %v4723, %v4722
        %v4725 = vmul.f32 0.5, %v4724
        %v4726 = vsub.f32 1.5, %v4725
        %v4727 = vmul.f32 %v4722, %v4726
        %vm4728 = vweird.f32 %v4697
        %vm4729 = vweird.f32 %v4722
        %vm4730 = vmor %vm4728, %vm4729
        %v4731 = vsel %vm4730, %v4722, %v4727
        %v4732 = vrsqrt.pop %v4698
        %v4733 = vmul.f32 %v4732, %v4698
        %v4734 = vmul.f32 %v4733, %v4732
        %v4735 = vmul.f32 0.5, %v4734
        %v4736 = vsub.f32 1.5, %v4735
        %v4737 = vmul.f32 %v4732, %v4736
        %vm4738 = vweird.f32 %v4698
        %vm4739 = vweird.f32 %v4732
        %vm4740 = vmor %vm4738, %vm4739
        %v4741 = vsel %vm4740, %v4732, %v4737
        %v4742 = vrsqrt.pop %v4699
        %v4743 = vmul.f32 %v4742, %v4699
        %v4744 = vmul.f32 %v4743, %v4742
        %v4745 = vmul.f32 0.5, %v4744
        %v4746 = vsub.f32 1.5, %v4745
        %v4747 = vmul.f32 %v4742, %v4746
        %vm4748 = vweird.f32 %v4699
        %vm4749 = vweird.f32 %v4742
        %vm4750 = vmor %vm4748, %vm4749
        %v4751 = vsel %vm4750, %v4742, %v4747
        %v4752 = vrsqrt.pop %v4700
        %v4753 = vmul.f32 %v4752, %v4700
        %v4754 = vmul.f32 %v4753, %v4752
        %v4755 = vmul.f32 0.5, %v4754
        %v4756 = vsub.f32 1.5, %v4755
        %v4757 = vmul.f32 %v4752, %v4756
        %vm4758 = vweird.f32 %v4700
        %vm4759 = vweird.f32 %v4752
        %vm4760 = vmor %vm4758, %vm4759
        %v4761 = vsel %vm4760, %v4752, %v4757
        %v4762 = vrsqrt.pop %v4701
        %v4763 = vmul.f32 %v4762, %v4701
        %v4764 = vmul.f32 %v4763, %v4762
        %v4765 = vmul.f32 0.5, %v4764
        %v4766 = vsub.f32 1.5, %v4765
        %v4767 = vmul.f32 %v4762, %v4766
        %vm4768 = vweird.f32 %v4701
        %vm4769 = vweird.f32 %v4762
        %vm4770 = vmor %vm4768, %vm4769
        %v4771 = vsel %vm4770, %v4762, %v4767
        %v4772 = vrsqrt.pop %v4702
        %v4773 = vmul.f32 %v4772, %v4702
        %v4774 = vmul.f32 %v4773, %v4772
        %v4775 = vmul.f32 0.5, %v4774
        %v4776 = vsub.f32 1.5, %v4775
        %v4777 = vmul.f32 %v4772, %v4776
        %vm4778 = vweird.f32 %v4702
        %vm4779 = vweird.f32 %v4772
        %vm4780 = vmor %vm4778, %vm4779
        %v4781 = vsel %vm4780, %v4772, %v4777
        %v4782 = vrsqrt.pop %v4703
        %v4783 = vmul.f32 %v4782, %v4703
        %v4784 = vmul.f32 %v4783, %v4782
        %v4785 = vmul.f32 0.5, %v4784
        %v4786 = vsub.f32 1.5, %v4785
        %v4787 = vmul.f32 %v4782, %v4786
        %vm4788 = vweird.f32 %v4703
        %vm4789 = vweird.f32 %v4782
        %vm4790 = vmor %vm4788, %vm4789
        %v4791 = vsel %vm4790, %v4782, %v4787
        %v4792 = vrsqrt.pop %v4704
        %v4793 = vmul.f32 %v4792, %v4704
        %v4794 = vmul.f32 %v4793, %v4792
        %v4795 = vmul.f32 0.5, %v4794
        %v4796 = vsub.f32 1.5, %v4795
        %v4797 = vmul.f32 %v4792, %v4796
        %vm4798 = vweird.f32 %v4704
        %vm4799 = vweird.f32 %v4792
        %vm4800 = vmor %vm4798, %vm4799
        %v4801 = vsel %vm4800, %v4792, %v4797
        %v4802 = vrsqrt.pop %v4705
        %v4803 = vmul.f32 %v4802, %v4705
        %v4804 = vmul.f32 %v4803, %v4802
        %v4805 = vmul.f32 0.5, %v4804
        %v4806 = vsub.f32 1.5, %v4805
        %v4807 = vmul.f32 %v4802, %v4806
        %vm4808 = vweird.f32 %v4705
        %vm4809 = vweird.f32 %v4802
        %vm4810 = vmor %vm4808, %vm4809
        %v4811 = vsel %vm4810, %v4802, %v4807
        %v4812 = vrsqrt.pop %v4706
        %v4813 = vmul.f32 %v4812, %v4706
        %v4814 = vmul.f32 %v4813, %v4812
        %v4815 = vmul.f32 0.5, %v4814
        %v4816 = vsub.f32 1.5, %v4815
        %v4817 = vmul.f32 %v4812, %v4816
        %vm4818 = vweird.f32 %v4706
        %vm4819 = vweird.f32 %v4812
        %vm4820 = vmor %vm4818, %vm4819
        %v4821 = vsel %vm4820, %v4812, %v4817
        %v4822 = vrsqrt.pop %v4707
        %v4823 = vmul.f32 %v4822, %v4707
        %v4824 = vmul.f32 %v4823, %v4822
        %v4825 = vmul.f32 0.5, %v4824
        %v4826 = vsub.f32 1.5, %v4825
        %v4827 = vmul.f32 %v4822, %v4826
        %vm4828 = vweird.f32 %v4707
        %vm4829 = vweird.f32 %v4822
        %vm4830 = vmor %vm4828, %vm4829
        %v4831 = vsel %vm4830, %v4822, %v4827
        %v4832 = vrsqrt.pop %v4708
        %v4833 = vmul.f32 %v4832, %v4708
        %v4834 = vmul.f32 %v4833, %v4832
        %v4835 = vmul.f32 0.5, %v4834
        %v4836 = vsub.f32 1.5, %v4835
        %v4837 = vmul.f32 %v4832, %v4836
        %vm4838 = vweird.f32 %v4708
        %vm4839 = vweird.f32 %v4832
        %vm4840 = vmor %vm4838, %vm4839
        %v4841 = vsel %vm4840, %v4832, %v4837
        %v4842 = vrsqrt.pop %v4709
        %v4843 = vmul.f32 %v4842, %v4709
        %v4844 = vmul.f32 %v4843, %v4842
        %v4845 = vmul.f32 0.5, %v4844
        %v4846 = vsub.f32 1.5, %v4845
        %v4847 = vmul.f32 %v4842, %v4846
        %vm4848 = vweird.f32 %v4709
        %vm4849 = vweird.f32 %v4842
        %vm4850 = vmor %vm4848, %vm4849
        %v4851 = vsel %vm4850, %v4842, %v4847
        %v4852 = vrsqrt.pop %v4710
        %v4853 = vmul.f32 %v4852, %v4710
        %v4854 = vmul.f32 %v4853, %v4852
        %v4855 = vmul.f32 0.5, %v4854
        %v4856 = vsub.f32 1.5, %v4855
        %v4857 = vmul.f32 %v4852, %v4856
        %vm4858 = vweird.f32 %v4710
        %vm4859 = vweird.f32 %v4852
        %vm4860 = vmor %vm4858, %vm4859
        %v4861 = vsel %vm4860, %v4852, %v4857
        %v4862 = vrsqrt.pop %v4711
        %v4863 = vmul.f32 %v4862, %v4711
        %v4864 = vmul.f32 %v4863, %v4862
        %v4865 = vmul.f32 0.5, %v4864
        %v4866 = vsub.f32 1.5, %v4865
        %v4867 = vmul.f32 %v4862, %v4866
        %vm4868 = vweird.f32 %v4711
        %vm4869 = vweird.f32 %v4862
        %vm4870 = vmor %vm4868, %vm4869
        %v4871 = vsel %vm4870, %v4862, %v4867
        %v4872 = vmul.f32 %v4616, %v4721
        %v4873 = vmul.f32 %v4617, %v4731
        %v4874 = vmul.f32 %v4618, %v4741
        %v4875 = vmul.f32 %v4619, %v4751
        %v4876 = vmul.f32 %v4620, %v4761
        %v4877 = vmul.f32 %v4621, %v4771
        %v4878 = vmul.f32 %v4622, %v4781
        %v4879 = vmul.f32 %v4623, %v4791
        %v4880 = vmul.f32 %v4624, %v4801
        %v4881 = vmul.f32 %v4625, %v4811
        %v4882 = vmul.f32 %v4626, %v4821
        %v4883 = vmul.f32 %v4627, %v4831
        %v4884 = vmul.f32 %v4628, %v4841
        %v4885 = vmul.f32 %v4629, %v4851
        %v4886 = vmul.f32 %v4630, %v4861
        %v4887 = vmul.f32 %v4631, %v4871
        %v4888 = vld [vmem:[%s11] sm:$0x1]
        %v4890 = vperm.slane %v4888, 0
        %v4892 = vmul.f32 %v4872, %v4890
        %v4893 = vmul.f32 %v4873, %v4890
        %v4894 = vmul.f32 %v4874, %v4890
        %v4895 = vmul.f32 %v4875, %v4890
        %v4896 = vmul.f32 %v4876, %v4890
        %v4897 = vmul.f32 %v4877, %v4890
        %v4898 = vmul.f32 %v4878, %v4890
        %v4899 = vmul.f32 %v4879, %v4890
        %v4900 = vmul.f32 %v4880, %v4890
        %v4901 = vmul.f32 %v4881, %v4890
        %v4902 = vmul.f32 %v4882, %v4890
        %v4903 = vmul.f32 %v4883, %v4890
        %v4904 = vmul.f32 %v4884, %v4890
        %v4905 = vmul.f32 %v4885, %v4890
        %v4906 = vmul.f32 %v4886, %v4890
        %v4907 = vmul.f32 %v4887, %v4890
        %v4908 = vld [vmem:[%s12] sm:$0x1]
        %v4910 = vperm.slane %v4908, 0
        %v4912 = vadd.f32 %v4892, %v4910
        %v4913 = vadd.f32 %v4893, %v4910
        %v4914 = vadd.f32 %v4894, %v4910
        %v4915 = vadd.f32 %v4895, %v4910
        %v4916 = vadd.f32 %v4896, %v4910
        %v4917 = vadd.f32 %v4897, %v4910
        %v4918 = vadd.f32 %v4898, %v4910
        %v4919 = vadd.f32 %v4899, %v4910
        %v4920 = vadd.f32 %v4900, %v4910
        %v4921 = vadd.f32 %v4901, %v4910
        %v4922 = vadd.f32 %v4902, %v4910
        %v4923 = vadd.f32 %v4903, %v4910
        %v4924 = vadd.f32 %v4904, %v4910
        %v4925 = vadd.f32 %v4905, %v4910
        %v4926 = vadd.f32 %v4906, %v4910
        %v4927 = vadd.f32 %v4907, %v4910
        %4928 = vst [vmem:[%s625] sm:$0xff] %v4912
        %4929 = vst [vmem:[%s625 + $0x8] sm:$0xff] %v4913
        %4930 = vst [vmem:[%s625 + $0x10] sm:$0xff] %v4914
        %4931 = vst [vmem:[%s625 + $0x18] sm:$0xff] %v4915
        %4932 = vst [vmem:[%s625 + $0x20] sm:$0xff] %v4916
        %4933 = vst [vmem:[%s625 + $0x28] sm:$0xff] %v4917
        %4934 = vst [vmem:[%s625 + $0x30] sm:$0xff] %v4918
        %4935 = vst [vmem:[%s625 + $0x38] sm:$0xff] %v4919
        %4936 = vst [vmem:[%s625 + $0x40] sm:$0xff] %v4920
        %4937 = vst [vmem:[%s625 + $0x48] sm:$0xff] %v4921
        %4938 = vst [vmem:[%s625 + $0x50] sm:$0xff] %v4922
        %4939 = vst [vmem:[%s625 + $0x58] sm:$0xff] %v4923
        %4940 = vst [vmem:[%s625 + $0x60] sm:$0xff] %v4924
        %4941 = vst [vmem:[%s625 + $0x68] sm:$0xff] %v4925
        %4942 = vst [vmem:[%s625 + $0x70] sm:$0xff] %v4926
        %4943 = vst [vmem:[%s625 + $0x78] sm:$0xff] %v4927
        %s4944 = sand.u32 %s347, 1
        %s4945 = scalar_lea.sflag [#allocation8], %s4944
        %s4946 = sand.u32 %s347, 1
        %s4947 = smul.addr %s4946, 128
        %s4948 = scalar_lea.vmem [#allocation18], %s4947
        // Predicated region
        $region105: #{tpu_custom_call.1} parent=71 // pred_check
          %p4949 = pneg %p357
        $region106: #{tpu_custom_call.1} parent=71 // pred_check_branch
          %4951 = sbr.rel (%p4949) target = $region108
        $region107: #{tpu_custom_call.1} parent=71 // pred_region
          %s4952 = smul.u32 16, %s40
          %4954 = vsyncadd %s4945, 0
          %s4955 = smul.addr %s39, 32
          %s4956 = sadd.s32 %s4952, %s4955
          %s4957 = smul.addr %s4956, 8
          %s4958 = scalar_lea.hbm %s13, %s4957
          %s4959 = sshll.u32 %s4948, 4
          %s4960 = int_to_ptr.vmem [resolvable:$true] %s4959
          %s4961 = sshll.u32 %s4958, 4
          %s4962 = int_to_ptr.hbm [resolvable:$true] %s4961
          %4967 = dma.vmem_to_hbm [thread:$0]  %s4960, 2048, %s4962, %s4945, 128, 128, 8
        $region108: #{tpu_custom_call.1} parent=71 // pred_fallthru
          _
      $region72: #{tpu_custom_call.1} parent=5 // pred_fallthru
        _
      %p4968 = scmp.le.s32.totalorder 2, %s30
      // Predicated region
      $region109: #{tpu_custom_call.1} parent=5 // pred_check
        %p4969 = pneg %p4968
      $region110: #{tpu_custom_call.1} parent=5 // pred_check_branch
        %4971 = sbr.rel (%p4969) target = $region112
      $region111: #{tpu_custom_call.1} parent=5 // pred_region
        %s4972 = ssub.s32 %s30, 2
        // Predicated region
        $region113: #{tpu_custom_call.1} parent=111 // pred_check
          %p4973 = pneg %p363
        $region114: #{tpu_custom_call.1} parent=111 // pred_check_branch
          %4975 = sbr.rel (%p4973) target = $region116
        $region115: #{tpu_custom_call.1} parent=111 // pred_region
          %s4976 = sand.u32 %s348, 1
          %s4977 = scalar_lea.sflag [#allocation8], %s4976
          %s4978 = sand.u32 %s348, 1
          %s4979 = smul.addr %s4978, 128
          %s4980 = scalar_lea.vmem [#allocation18], %s4979
          %4982 = dma.done %s4977, 2048
        $region116: #{tpu_custom_call.1} parent=111 // pred_fallthru
          _
      $region112: #{tpu_custom_call.1} parent=5 // pred_fallthru
        _
    $region6: #{tpu_custom_call.1} parent=1 // loop_footer
      %s34 = sadd.s32 1, %s30
    $region7: #{tpu_custom_call.1} parent=1 // loop_footer_branch
      %29 = sbr.rel target = $region3
    $region8: #{tpu_custom_call.1} parent=1 // loop_exit
      _
    %4983 = vsyncpa [#allocation7], 1
    %s4984 = scalar_lea.sflag [#allocation7], 1
    %4985 = vsyncpa %s4984, 1
    %4986 = vsyncpa [#allocation10], 1
    %s4987 = scalar_lea.sflag [#allocation10], 1
    %4988 = vsyncpa %s4987, 1
    %4989 = vsyncpa [#allocation13], 1
    %4990 = vsyncpa [#allocation16], 1
    %4991 = vsyncpa [#allocation8], 1
    %s4992 = scalar_lea.sflag [#allocation8], 1
    %4993 = vsyncpa %s4992, 1

</llo_original>
